<compile_context>
chip_gen: v7x
topology: tpu7x:2x2x1
jax: 0.10.0
libtpu: 0.0.40
codegen_flags: <defaults>
</compile_context>

<pallas_src>
import math

import jax
import jax.numpy as jnp
from jax import lax
from jax.experimental import pallas as pl
from jax.experimental.pallas import tpu as pltpu


# --------------------------------------------------------------------------- #
# kernel body
# --------------------------------------------------------------------------- #
def _layer_norm(x, gamma, beta, eps=1e-5):
    mu = jnp.mean(x, axis=-1, keepdims=True)
    xc = x - mu
    var = jnp.mean(xc * xc, axis=-1, keepdims=True)
    return xc * lax.rsqrt(var + eps) * gamma + beta


def _block_body(x_ref, xwin_ref, wqk_ref, bqk_ref, wv_ref, bv_ref, wp_ref, bp_ref,
                g1_ref, be1_ref, w1_ref, b1_ref, w2_ref, b2_ref, g2_ref, be2_ref,
                out_ref, attw_ref, *, n_head, lane_dense_attw):
    Bb, T, C = x_ref.shape
    H = n_head
    HC = H * C
    M = Bb * T

    x_flat = x_ref[...].reshape(M, C)                                    # (M, C) f32
    x_win = xwin_ref[...].reshape(M, xwin_ref.shape[-1]).astype(jnp.bfloat16)

    # --- causal Conv1d "query_key": ONE fused im2col dot (K = q_len*C);
    #     the 1/sqrt(C) attention scale is folded into the Q columns on host.
    qk = jnp.dot(x_win, wqk_ref[...], preferred_element_type=jnp.float32) + bqk_ref[...]
    # --- "value" Conv1D(rf=1) == dense projection, batch folded into M.
    v = jnp.dot(x_flat.astype(jnp.bfloat16), wv_ref[...],
                preferred_element_type=jnp.float32) + bv_ref[...]

    qk3 = qk.reshape(Bb, T, 2 * HC)
    v3 = v.reshape(Bb, T, HC)

    def split_heads(src, off):
        # (Bb, T, .) -> (Bb*H, T, C), batch-major then head.
        parts = [src[:, :, off + h * C: off + (h + 1) * C] for h in range(H)]
        return jnp.stack(parts, axis=1).reshape(Bb * H, T, C).astype(jnp.bfloat16)

    qh = split_heads(qk3, 0)
    kh = split_heads(qk3, HC)
    vh = split_heads(v3, 0)

    # --- additive causal mask built in-kernel, added ONCE for all heads.
    row = lax.broadcasted_iota(jnp.int32, (T, T), 0)
    col = lax.broadcasted_iota(jnp.int32, (T, T), 1)
    amask = jnp.where(col <= row, 0.0, -1e9).astype(jnp.float32)

    # --- attention for ALL heads of the batch block in one einsum pair.
    s = jnp.einsum('bqd,bkd->bqk', qh, kh, preferred_element_type=jnp.float32)
    s = s + amask[None, :, :]
    s = s - jnp.max(s, axis=-1, keepdims=True)
    p = jnp.exp(s)
    # exact normalization: these probabilities are returned, so rows must sum to 1
    p = p / jnp.sum(p, axis=-1, keepdims=True)                            # (Bb*H, T, T)

    if attw_ref is not None:
        if lane_dense_attw:
            # single lane-dense (unmasked) store of width H*T*T per batch row
            attw_ref[...] = p.reshape(Bb, 1, H * T * T).astype(attw_ref.dtype)
        else:
            attw_ref[...] = p.astype(attw_ref.dtype)

    ctx = jnp.einsum('bqk,bkd->bqd', p.astype(jnp.bfloat16), vh,
                     preferred_element_type=jnp.float32)                 # (Bb*H, T, C)

    # --- merge_heads + c_proj as one K = H*C dot (no per-head scratch stores).
    ctx4 = ctx.reshape(Bb, H, T, C)
    merged = jnp.concatenate([ctx4[:, h] for h in range(H)], axis=-1).reshape(M, HC)
    attn_out = jnp.dot(merged.astype(jnp.bfloat16), wp_ref[...],
                       preferred_element_type=jnp.float32) + bp_ref[...]  # (M, C)

    # --- residual + LayerNorm1
    n1 = _layer_norm(x_flat + attn_out, g1_ref[...], be1_ref[...])

    # --- feed-forward (linear1 -> relu -> linear2)
    a1 = jnp.dot(n1.astype(jnp.bfloat16), w1_ref[...],
                 preferred_element_type=jnp.float32) + b1_ref[...]
    a1 = jnp.maximum(a1, 0.0)
    a2 = jnp.dot(a1.astype(jnp.bfloat16), w2_ref[...],
                 preferred_element_type=jnp.float32) + b2_ref[...]

    # --- residual + LayerNorm2
    n2 = _layer_norm(n1 + a2, g2_ref[...], be2_ref[...])
    out_ref[...] = n2.reshape(Bb, T, C).astype(out_ref.dtype)


def _make_kernel(*, n_head, emit_attw, lane_dense_attw):
    def kernel(*refs):
        if emit_attw:
            *in_refs, out_ref, attw_ref = refs
        else:
            *in_refs, out_ref = refs
            attw_ref = None
        _block_body(*in_refs, out_ref, attw_ref,
                    n_head=n_head, lane_dense_attw=lane_dense_attw)
    return kernel


# --------------------------------------------------------------------------- #
# wrapper: per-generation blocking / VMEM budgeting
# --------------------------------------------------------------------------- #
def _tpu_info():
    """(vmem capacity bytes, tensorcores per chip) with conservative fallbacks."""
    vmem_cap = 128 * 1024 * 1024
    try:
        info = pltpu.get_tpu_info()
        vmem_cap = int(getattr(info, "vmem_capacity_bytes", vmem_cap))
    except Exception:
        pass
    n_cores = 1
    try:
        kind = jax.devices()[0].device_kind.lower()
        if any(t in kind for t in ("v7", "v4", "v5p")):
            n_cores = 2            # dual-TensorCore generations
    except Exception:
        pass
    return vmem_cap, n_cores


def _vmem_footprint_bytes(bb, T, C, H, Dh, q_len, attw_bytes, weight_bytes,
                          single_buffer_weights=True):
    f32 = 4
    M = bb * T
    HC = H * C
    # double-buffered pipelined blocks: x, x_win, out (+ attw if emitted)
    io = 2 * f32 * (bb * T * C + bb * T * q_len * C + bb * T * C)
    io += 2 * bb * H * T * T * attw_bytes
    w = weight_bytes * (1 if single_buffer_weights else 2)
    # rough live intermediates inside the body (counted f32 for slack)
    live = f32 * (2 * M * HC            # qk
                  + 3 * M * HC          # q/k/v head stacks
                  + 3 * bb * H * T * T  # scores, probs, attw staging
                  + 2 * M * HC          # ctx + merged
                  + M * Dh              # ffn hidden
                  + 6 * M * C)          # residual / LN temporaries
    return io + w + live


def _pick_block_b(batch, T, C, H, Dh, q_len, attw_bytes, weight_bytes,
                  vmem_cap, n_cores):
    budget = int(0.6 * vmem_cap)
    divisors = [d for d in range(1, batch + 1) if batch % d == 0]
    fits = [d for d in divisors
            if _vmem_footprint_bytes(d, T, C, H, Dh, q_len, attw_bytes,
                                     weight_bytes) <= budget]
    if not fits:
        return 1
    if n_cores > 1:
        # prefer the largest block whose step count splits evenly across cores
        even = [d for d in fits if (batch // d) % n_cores == 0]
        if even:
            return max(even)
    # single TensorCore: fewest grid steps / largest MXU M dimension
    return max(fits)


def _im2col(x, q_len):
    """Hoisted causal-conv window: (B, T, C) -> (B, T, q_len*C).
    Column block j multiplies conv tap j (left zero padding), so no padded copy
    of x and no in-kernel lane-axis concatenation are needed."""
    B, T, C = x.shape
    cols = []
    for j in range(q_len):
        shift = q_len - 1 - j
        if shift == 0:
            cols.append(x)
        else:
            cols.append(jnp.pad(x, ((0, 0), (shift, 0), (0, 0)))[:, :T, :])
    return jnp.concatenate(cols, axis=-1)


def block_forward(x, params, *, n_head, q_len, block_b=None,
                  with_attn_weights=True, attw_dtype=jnp.float32):
    B, T, C = x.shape
    H = n_head
    HC = H * C
    Dh = params["w1"].shape[1]

    x_win = _im2col(x, q_len)                           # (B, T, q_len*C)

    vmem_cap, n_cores = _tpu_info()
    weight_bytes = sum(int(v.size) * v.dtype.itemsize for v in params.values())
    attw_bytes = jnp.dtype(attw_dtype).itemsize if with_attn_weights else 0

    if block_b is None:
        block_b = _pick_block_b(B, T, C, H, Dh, q_len, attw_bytes, weight_bytes,
                                vmem_cap, n_cores)
    assert B % block_b == 0
    grid = (B // block_b,)
    vmem_limit = int(max(32 * 2**20, min(0.85 * vmem_cap, 100 * 2**20)))

    const2 = lambda i: (0, 0)

    def run(fast):
        lane_dense = fast and with_attn_weights
        single_buf = fast

        def wspec(shape):
            if single_buf:
                # constant across the grid -> single-buffer to save VMEM
                return pl.BlockSpec(shape, const2, pipeline_mode=pl.Buffered(1))
            return pl.BlockSpec(shape, const2)

        in_specs = [
            pl.BlockSpec((block_b, T, C), lambda i: (i, 0, 0)),           # x
            pl.BlockSpec((block_b, T, q_len * C), lambda i: (i, 0, 0)),   # x_win (im2col)
            wspec((q_len * C, 2 * HC)),                                   # conv w (bf16)
            wspec((1, 2 * HC)),                                           # conv b
            wspec((C, HC)),                                               # value w (bf16)
            wspec((1, HC)),                                               # value b
            wspec((HC, C)),                                               # c_proj w (bf16)
            wspec((1, C)),                                                # c_proj b
            wspec((1, C)),                                                # norm1 gamma
            wspec((1, C)),                                                # norm1 beta
            wspec((C, Dh)),                                               # linear1 w (bf16)
            wspec((1, Dh)),                                               # linear1 b
            wspec((Dh, C)),                                               # linear2 w (bf16)
            wspec((1, C)),                                                # linear2 b
            wspec((1, C)),                                                # norm2 gamma
            wspec((1, C)),                                                # norm2 beta
        ]
        out_shapes = [jax.ShapeDtypeStruct((B, T, C), x.dtype)]
        out_specs = [pl.BlockSpec((block_b, T, C), lambda i: (i, 0, 0))]
        if with_attn_weights:
            if lane_dense:
                out_shapes.append(jax.ShapeDtypeStruct((B, 1, H * T * T), attw_dtype))
                out_specs.append(pl.BlockSpec((block_b, 1, H * T * T),
                                              lambda i: (i, 0, 0)))
            else:
                out_shapes.append(jax.ShapeDtypeStruct((B * H, T, T), attw_dtype))
                out_specs.append(pl.BlockSpec((block_b * H, T, T),
                                              lambda i: (i, 0, 0)))

        kernel = _make_kernel(n_head=H, emit_attw=with_attn_weights,
                              lane_dense_attw=lane_dense)

        res = pl.pallas_call(
            kernel,
            out_shape=tuple(out_shapes),
            grid_spec=pltpu.PrefetchScalarGridSpec(
                num_scalar_prefetch=0, grid=grid,
                in_specs=in_specs, out_specs=out_specs),
            compiler_params=pltpu.CompilerParams(
                dimension_semantics=("parallel",),
                vmem_limit_bytes=vmem_limit),
        )(x, x_win, params["wqk"], params["bqk"], params["wv"], params["bv"],
          params["wp"], params["bp"], params["g1"], params["be1"],
          params["w1"], params["b1"], params["w2"], params["b2"],
          params["g2"], params["be2"])
        jax.block_until_ready(res)

        if with_attn_weights:
            out, attw = res
            return out, attw.reshape(B, H, T, T)
        out = res[0] if isinstance(res, (tuple, list)) else res
        return out, None

    try:
        return run(True)            # optimized layout (lane-dense attw, Buffered(1))
    except Exception:
        return run(False)           # conservative fallback (identical semantics)


# --------------------------------------------------------------------------- #
# parameters, host-side packing, pure-JAX reference
# --------------------------------------------------------------------------- #
def init_params(key, n_head, n_embd, d_hidden, q_len):
    """Raw (f32, PyTorch-layout) parameters for the Block."""
    C, H, Dh = n_embd, n_head, d_hidden
    HC = H * C
    ks = jax.random.split(key, 8)
    w_conv = jax.random.normal(ks[0], (2 * HC, C, q_len), jnp.float32) * 0.02
    b_conv = jax.random.normal(ks[1], (2 * HC,), jnp.float32) * 0.02
    wv = jax.random.normal(ks[2], (C, HC), jnp.float32) * 0.02
    bv = jnp.zeros((HC,), jnp.float32)
    wp = jax.random.normal(ks[3], (HC, C), jnp.float32) * 0.02
    bp = jnp.zeros((C,), jnp.float32)
    w1 = jax.random.normal(ks[4], (C, Dh), jnp.float32) * 0.02
    b1 = jax.random.normal(ks[5], (Dh,), jnp.float32) * 0.02
    w2 = jax.random.normal(ks[6], (Dh, C), jnp.float32) * 0.02
    b2 = jax.random.normal(ks[7], (C,), jnp.float32) * 0.02
    g1 = jnp.ones((C,), jnp.float32)
    be1 = jnp.zeros((C,), jnp.float32)
    g2 = jnp.ones((C,), jnp.float32)
    be2 = jnp.zeros((C,), jnp.float32)
    return dict(w_conv=w_conv, b_conv=b_conv, wv=wv, bv=bv, wp=wp, bp=bp,
                w1=w1, b1=b1, w2=w2, b2=b2, g1=g1, be1=be1, g2=g2, be2=be2)


def pack_kernel_params(p, *, n_head, n_embd, q_len, scale=True):
    """Host-side layout prep: im2col conv weight, fold 1/sqrt(C) into Q, bf16 weights."""
    C, H = n_embd, n_head
    HC = H * C
    # nn.Conv1d weight (2HC, C, q_len) -> (q_len*C, 2HC): row j*C+c multiplies tap j
    wqk = jnp.transpose(p["w_conv"], (2, 1, 0)).reshape(q_len * C, 2 * HC)
    bqk = p["b_conv"].reshape(1, 2 * HC)
    if scale:
        sc = 1.0 / math.sqrt(C)
        col_scale = jnp.concatenate(
            [jnp.full((HC,), sc, jnp.float32), jnp.ones((HC,), jnp.float32)])
        wqk = wqk * col_scale[None, :]
        bqk = bqk * col_scale[None, :]
    return dict(
        wqk=wqk.astype(jnp.bfloat16), bqk=bqk.astype(jnp.float32),
        wv=p["wv"].astype(jnp.bfloat16), bv=p["bv"].reshape(1, HC),
        wp=p["wp"].astype(jnp.bfloat16), bp=p["bp"].reshape(1, C),
        g1=p["g1"].reshape(1, C), be1=p["be1"].reshape(1, C),
        w1=p["w1"].astype(jnp.bfloat16), b1=p["b1"].reshape(1, -1),
        w2=p["w2"].astype(jnp.bfloat16), b2=p["b2"].reshape(1, C),
        g2=p["g2"].reshape(1, C), be2=p["be2"].reshape(1, C),
    )


def reference_block(x, p, *, n_head, q_len, scale=True, eps=1e-5):
    """Pure-JAX f32 reference of the PyTorch Block.forward (for correctness)."""
    B, T, C = x.shape
    H = n_head
    HC = H * C
    xp = jnp.pad(x, ((0, 0), (q_len - 1, 0), (0, 0)))
    wqk = jnp.transpose(p["w_conv"], (2, 1, 0))          # (q_len, C, 2HC)
    qk = sum(jnp.einsum('btc,co->bto', xp[:, j:j + T, :], wqk[j])
             for j in range(q_len)) + p["b_conv"][None, None, :]
    v = x @ p["wv"] + p["bv"]
    q, k = qk[..., :HC], qk[..., HC:]

    def split(y):
        return y.reshape(B, T, H, C).transpose(0, 2, 1, 3)

    qh, kh, vh = split(q), split(k), split(v)
    s = jnp.einsum('bhtc,bhsc->bhts', qh, kh)
    if scale:
        s = s / math.sqrt(C)
    mask = jnp.tril(jnp.ones((T, T), jnp.float32))
    s = s * mask + (-1e9) * (1.0 - mask)
    pw = jax.nn.softmax(s, axis=-1)
    ctx = jnp.einsum('bhts,bhsc->bhtc', pw, vh)
    merged = ctx.transpose(0, 2, 1, 3).reshape(B, T, HC)
    attn = merged @ p["wp"] + p["bp"]

    def ln(z, g, b):
        mu = z.mean(-1, keepdims=True)
        var = ((z - mu) ** 2).mean(-1, keepdims=True)
        return (z - mu) / jnp.sqrt(var + eps) * g + b

    x1 = ln(x + attn, p["g1"], p["be1"])
    x2 = jax.nn.relu(x1 @ p["w1"] + p["b1"]) @ p["w2"] + p["b2"]
    out = ln(x1 + x2, p["g2"], p["be2"])
    return out, pw


if __name__ == "__main__":
    # small, module-consistent shapes: batch=4, heads=4, d_model=32, win_len=8,
    # conv kernel q_len=2, d_hidden=64
    B, n_head, d_model, win_len, q_len, d_hidden = 4, 4, 32, 8, 2, 64
    key = jax.random.PRNGKey(0)
    kx, kp = jax.random.split(key)
    x = jax.random.normal(kx, (B, win_len, d_model), jnp.float32)

    raw = init_params(kp, n_head, d_model, d_hidden, q_len)
    kparams = pack_kernel_params(raw, n_head=n_head, n_embd=d_model,
                                 q_len=q_len, scale=True)

    out, attn_weights = block_forward(x, kparams, n_head=n_head, q_len=q_len)
    jax.block_until_ready((out, attn_weights))

    ref_out, ref_w = reference_block(x, raw, n_head=n_head, q_len=q_len, scale=True)
    assert out.shape == (B, win_len, d_model)
    assert attn_weights.shape == (B, n_head, win_len, win_len)
    assert jnp.allclose(out, ref_out, atol=3e-2, rtol=3e-2), \
        float(jnp.max(jnp.abs(out - ref_out)))
    # exact softmax normalization -> tight tolerance on returned attention weights
    assert jnp.allclose(attn_weights, ref_w, atol=1e-2, rtol=0.0), \
        float(jnp.max(jnp.abs(attn_weights - ref_w)))

    # also exercise the attn-weights-free path (skips the (B,H,T,T) HBM stream)
    out2, _ = block_forward(x, kparams, n_head=n_head, q_len=q_len,
                            with_attn_weights=False)
    jax.block_until_ready(out2)
    assert jnp.allclose(out2, out, atol=1e-6, rtol=0.0)

    print("KERNEL_OK")
</pallas_src>

<mosaic_0001>
module attributes {stable_mosaic.version = 11 : i64} {
  func.func @kernel(%arg0: i32, %arg1: memref<4x8x32xf32, #tpu.memory_space<vmem>>, %arg2: memref<4x8x64xf32, #tpu.memory_space<vmem>>, %arg3: memref<64x256xbf16, #tpu.memory_space<vmem>>, %arg4: memref<1x256xf32, #tpu.memory_space<vmem>>, %arg5: memref<32x128xbf16, #tpu.memory_space<vmem>>, %arg6: memref<1x128xf32, #tpu.memory_space<vmem>>, %arg7: memref<128x32xbf16, #tpu.memory_space<vmem>>, %arg8: memref<1x32xf32, #tpu.memory_space<vmem>>, %arg9: memref<1x32xf32, #tpu.memory_space<vmem>>, %arg10: memref<1x32xf32, #tpu.memory_space<vmem>>, %arg11: memref<32x64xbf16, #tpu.memory_space<vmem>>, %arg12: memref<1x64xf32, #tpu.memory_space<vmem>>, %arg13: memref<64x32xbf16, #tpu.memory_space<vmem>>, %arg14: memref<1x32xf32, #tpu.memory_space<vmem>>, %arg15: memref<1x32xf32, #tpu.memory_space<vmem>>, %arg16: memref<1x32xf32, #tpu.memory_space<vmem>>, %arg17: memref<4x8x32xf32, #tpu.memory_space<vmem>>, %arg18: memref<4x1x256xf32, #tpu.memory_space<vmem>>) attributes {dimension_semantics = [#tpu.dimension_semantics<parallel>], iteration_bounds = array<i64: 1>, scalar_prefetch = 0 : i64, scratch_operands = 0 : i64, tpu.core_type = #tpu.core_type<tc>, window_params = [{transform_indices = @transform_0, window_bounds = array<i64: 4, 8, 32>}, {transform_indices = @transform_1, window_bounds = array<i64: 4, 8, 64>}, {pipeline_mode = #tpu.pipeline_mode<synchronous>, transform_indices = @transform_2, window_bounds = array<i64: 64, 256>}, {pipeline_mode = #tpu.pipeline_mode<synchronous>, transform_indices = @transform_3, window_bounds = array<i64: 1, 256>}, {pipeline_mode = #tpu.pipeline_mode<synchronous>, transform_indices = @transform_4, window_bounds = array<i64: 32, 128>}, {pipeline_mode = #tpu.pipeline_mode<synchronous>, transform_indices = @transform_5, window_bounds = array<i64: 1, 128>}, {pipeline_mode = #tpu.pipeline_mode<synchronous>, transform_indices = @transform_6, window_bounds = array<i64: 128, 32>}, {pipeline_mode = #tpu.pipeline_mode<synchronous>, transform_indices = @transform_7, window_bounds = array<i64: 1, 32>}, {pipeline_mode = #tpu.pipeline_mode<synchronous>, transform_indices = @transform_8, window_bounds = array<i64: 1, 32>}, {pipeline_mode = #tpu.pipeline_mode<synchronous>, transform_indices = @transform_9, window_bounds = array<i64: 1, 32>}, {pipeline_mode = #tpu.pipeline_mode<synchronous>, transform_indices = @transform_10, window_bounds = array<i64: 32, 64>}, {pipeline_mode = #tpu.pipeline_mode<synchronous>, transform_indices = @transform_11, window_bounds = array<i64: 1, 64>}, {pipeline_mode = #tpu.pipeline_mode<synchronous>, transform_indices = @transform_12, window_bounds = array<i64: 64, 32>}, {pipeline_mode = #tpu.pipeline_mode<synchronous>, transform_indices = @transform_13, window_bounds = array<i64: 1, 32>}, {pipeline_mode = #tpu.pipeline_mode<synchronous>, transform_indices = @transform_14, window_bounds = array<i64: 1, 32>}, {pipeline_mode = #tpu.pipeline_mode<synchronous>, transform_indices = @transform_15, window_bounds = array<i64: 1, 32>}, {transform_indices = @transform_16, window_bounds = array<i64: 4, 8, 32>}, {transform_indices = @transform_17, window_bounds = array<i64: 4, 1, 256>}]} {
    %c0 = arith.constant 0 : index
    %c0_0 = arith.constant 0 : index
    %c0_1 = arith.constant 0 : index
    %0 = vector.load %arg1[%c0, %c0_0, %c0_1] : memref<4x8x32xf32, #tpu.memory_space<vmem>>, vector<4x8x32xf32>
    %1 = vector.shape_cast %0 : vector<4x8x32xf32> to vector<32x32xf32>
    %c0_2 = arith.constant 0 : index
    %c0_3 = arith.constant 0 : index
    %c0_4 = arith.constant 0 : index
    %2 = vector.load %arg2[%c0_2, %c0_3, %c0_4] : memref<4x8x64xf32, #tpu.memory_space<vmem>>, vector<4x8x64xf32>
    %3 = vector.shape_cast %2 : vector<4x8x64xf32> to vector<32x64xf32>
    %4 = arith.truncf %3 : vector<32x64xf32> to vector<32x64xbf16>
    %c0_5 = arith.constant 0 : index
    %c0_6 = arith.constant 0 : index
    %5 = vector.load %arg3[%c0_5, %c0_6] : memref<64x256xbf16, #tpu.memory_space<vmem>>, vector<64x256xbf16>
    %cst = arith.constant dense<0.000000e+00> : vector<32x256xf32>
    %6 = tpu.matmul %4, %5, %cst {dimension_numbers = #tpu.dot_dimension_numbers<[1], [0], [0], [1], [0, 0, 1, 1], [], []>} : vector<32x64xbf16>, vector<64x256xbf16>, vector<32x256xf32> -> vector<32x256xf32>
    %c0_7 = arith.constant 0 : index
    %c0_8 = arith.constant 0 : index
    %7 = vector.load %arg4[%c0_7, %c0_8] : memref<1x256xf32, #tpu.memory_space<vmem>>, vector<1x256xf32>
    %8 = vector.broadcast %7 : vector<1x256xf32> to vector<32x256xf32>
    %9 = arith.addf %6, %8 : vector<32x256xf32>
    %10 = arith.truncf %1 : vector<32x32xf32> to vector<32x32xbf16>
    %c0_9 = arith.constant 0 : index
    %c0_10 = arith.constant 0 : index
    %11 = vector.load %arg5[%c0_9, %c0_10] : memref<32x128xbf16, #tpu.memory_space<vmem>>, vector<32x128xbf16>
    %cst_11 = arith.constant dense<0.000000e+00> : vector<32x128xf32>
    %12 = tpu.matmul %10, %11, %cst_11 {dimension_numbers = #tpu.dot_dimension_numbers<[1], [0], [0], [1], [0, 0, 1, 1], [], []>} : vector<32x32xbf16>, vector<32x128xbf16>, vector<32x128xf32> -> vector<32x128xf32>
    %c0_12 = arith.constant 0 : index
    %c0_13 = arith.constant 0 : index
    %13 = vector.load %arg6[%c0_12, %c0_13] : memref<1x128xf32, #tpu.memory_space<vmem>>, vector<1x128xf32>
    %14 = vector.broadcast %13 : vector<1x128xf32> to vector<32x128xf32>
    %15 = arith.addf %12, %14 : vector<32x128xf32>
    %16 = vector.shape_cast %9 : vector<32x256xf32> to vector<4x8x256xf32>
    %17 = vector.shape_cast %15 : vector<32x128xf32> to vector<4x8x128xf32>
    %18 = vector.extract_strided_slice %16 {offsets = [0, 0, 0], sizes = [4, 8, 32], strides = [1, 1, 1]} : vector<4x8x256xf32> to vector<4x8x32xf32>
    %19 = vector.extract_strided_slice %16 {offsets = [0, 0, 32], sizes = [4, 8, 32], strides = [1, 1, 1]} : vector<4x8x256xf32> to vector<4x8x32xf32>
    %20 = vector.extract_strided_slice %16 {offsets = [0, 0, 64], sizes = [4, 8, 32], strides = [1, 1, 1]} : vector<4x8x256xf32> to vector<4x8x32xf32>
    %21 = vector.extract_strided_slice %16 {offsets = [0, 0, 96], sizes = [4, 8, 32], strides = [1, 1, 1]} : vector<4x8x256xf32> to vector<4x8x32xf32>
    %22 = vector.shape_cast %18 : vector<4x8x32xf32> to vector<4x1x8x32xf32>
    %23 = vector.shape_cast %19 : vector<4x8x32xf32> to vector<4x1x8x32xf32>
    %24 = vector.shape_cast %20 : vector<4x8x32xf32> to vector<4x1x8x32xf32>
    %25 = vector.shape_cast %21 : vector<4x8x32xf32> to vector<4x1x8x32xf32>
    %26 = tpu.concatenate %22, %23, %24, %25 in 1 : vector<4x1x8x32xf32>, vector<4x1x8x32xf32>, vector<4x1x8x32xf32>, vector<4x1x8x32xf32> -> vector<4x4x8x32xf32>
    %27 = vector.shape_cast %26 : vector<4x4x8x32xf32> to vector<16x8x32xf32>
    %28 = arith.truncf %27 : vector<16x8x32xf32> to vector<16x8x32xbf16>
    %29 = vector.extract_strided_slice %16 {offsets = [0, 0, 128], sizes = [4, 8, 32], strides = [1, 1, 1]} : vector<4x8x256xf32> to vector<4x8x32xf32>
    %30 = vector.extract_strided_slice %16 {offsets = [0, 0, 160], sizes = [4, 8, 32], strides = [1, 1, 1]} : vector<4x8x256xf32> to vector<4x8x32xf32>
    %31 = vector.extract_strided_slice %16 {offsets = [0, 0, 192], sizes = [4, 8, 32], strides = [1, 1, 1]} : vector<4x8x256xf32> to vector<4x8x32xf32>
    %32 = vector.extract_strided_slice %16 {offsets = [0, 0, 224], sizes = [4, 8, 32], strides = [1, 1, 1]} : vector<4x8x256xf32> to vector<4x8x32xf32>
    %33 = vector.shape_cast %29 : vector<4x8x32xf32> to vector<4x1x8x32xf32>
    %34 = vector.shape_cast %30 : vector<4x8x32xf32> to vector<4x1x8x32xf32>
    %35 = vector.shape_cast %31 : vector<4x8x32xf32> to vector<4x1x8x32xf32>
    %36 = vector.shape_cast %32 : vector<4x8x32xf32> to vector<4x1x8x32xf32>
    %37 = tpu.concatenate %33, %34, %35, %36 in 1 : vector<4x1x8x32xf32>, vector<4x1x8x32xf32>, vector<4x1x8x32xf32>, vector<4x1x8x32xf32> -> vector<4x4x8x32xf32>
    %38 = vector.shape_cast %37 : vector<4x4x8x32xf32> to vector<16x8x32xf32>
    %39 = arith.truncf %38 : vector<16x8x32xf32> to vector<16x8x32xbf16>
    %40 = vector.extract_strided_slice %17 {offsets = [0, 0, 0], sizes = [4, 8, 32], strides = [1, 1, 1]} : vector<4x8x128xf32> to vector<4x8x32xf32>
    %41 = vector.extract_strided_slice %17 {offsets = [0, 0, 32], sizes = [4, 8, 32], strides = [1, 1, 1]} : vector<4x8x128xf32> to vector<4x8x32xf32>
    %42 = vector.extract_strided_slice %17 {offsets = [0, 0, 64], sizes = [4, 8, 32], strides = [1, 1, 1]} : vector<4x8x128xf32> to vector<4x8x32xf32>
    %43 = vector.extract_strided_slice %17 {offsets = [0, 0, 96], sizes = [4, 8, 32], strides = [1, 1, 1]} : vector<4x8x128xf32> to vector<4x8x32xf32>
    %44 = vector.shape_cast %40 : vector<4x8x32xf32> to vector<4x1x8x32xf32>
    %45 = vector.shape_cast %41 : vector<4x8x32xf32> to vector<4x1x8x32xf32>
    %46 = vector.shape_cast %42 : vector<4x8x32xf32> to vector<4x1x8x32xf32>
    %47 = vector.shape_cast %43 : vector<4x8x32xf32> to vector<4x1x8x32xf32>
    %48 = tpu.concatenate %44, %45, %46, %47 in 1 : vector<4x1x8x32xf32>, vector<4x1x8x32xf32>, vector<4x1x8x32xf32>, vector<4x1x8x32xf32> -> vector<4x4x8x32xf32>
    %49 = vector.shape_cast %48 : vector<4x4x8x32xf32> to vector<16x8x32xf32>
    %50 = arith.truncf %49 : vector<16x8x32xf32> to vector<16x8x32xbf16>
    %51 = tpu.iota {dimensions = array<i32: 0>} : vector<8x8xi32>
    %52 = tpu.iota {dimensions = array<i32: 1>} : vector<8x8xi32>
    %53 = arith.cmpi sle, %52, %51 : vector<8x8xi32>
    %cst_14 = arith.constant 0.000000e+00 : f32
    %cst_15 = arith.constant -1.000000e+09 : f32
    %54 = vector.broadcast %cst_14 : f32 to vector<8x8xf32>
    %55 = vector.broadcast %cst_15 : f32 to vector<8x8xf32>
    %56 = arith.select %53, %54, %55 : vector<8x8xi1>, vector<8x8xf32>
    "tpu.trace_start"() <{level = 10 : i32, message = "bqd,bkd->bqk"}> : () -> ()
    %cst_16 = arith.constant dense<0.000000e+00> : vector<16x8x8xf32>
    %57 = tpu.matmul %28, %39, %cst_16 {dimension_numbers = #tpu.dot_dimension_numbers<[2], [2], [1], [1], [0, 0, 0, 1, 1, 1], [0], [0]>} : vector<16x8x32xbf16>, vector<16x8x32xbf16>, vector<16x8x8xf32> -> vector<16x8x8xf32>
    "tpu.trace_stop"() : () -> ()
    %58 = vector.shape_cast %56 : vector<8x8xf32> to vector<1x8x8xf32>
    %59 = vector.broadcast %58 : vector<1x8x8xf32> to vector<16x8x8xf32>
    %60 = arith.addf %57, %59 : vector<16x8x8xf32>
    %cst_17 = arith.constant dense<0xFF800000> : vector<16x8xf32>
    %61 = vector.multi_reduction <maximumf>, %60, %cst_17 [2] : vector<16x8x8xf32> to vector<16x8xf32>
    %62 = vector.shape_cast %61 : vector<16x8xf32> to vector<16x8x1xf32>
    %63 = vector.broadcast %62 : vector<16x8x1xf32> to vector<16x8x8xf32>
    %64 = arith.subf %60, %63 : vector<16x8x8xf32>
    %65 = math.exp %64 : vector<16x8x8xf32>
    %cst_18 = arith.constant dense<0.000000e+00> : vector<16x8xf32>
    %66 = vector.multi_reduction <add>, %65, %cst_18 [2] : vector<16x8x8xf32> to vector<16x8xf32>
    %67 = vector.shape_cast %66 : vector<16x8xf32> to vector<16x8x1xf32>
    %68 = vector.broadcast %67 : vector<16x8x1xf32> to vector<16x8x8xf32>
    %69 = arith.divf %65, %68 : vector<16x8x8xf32>
    %70 = vector.shape_cast %69 : vector<16x8x8xf32> to vector<4x1x256xf32>
    %c0_19 = arith.constant 0 : index
    %c0_20 = arith.constant 0 : index
    %c0_21 = arith.constant 0 : index
    %71 = vector.load %arg18[%c0_19, %c0_20, %c0_21] : memref<4x1x256xf32, #tpu.memory_space<vmem>>, vector<4x1x256xf32>
    tpu.vector_store %arg18[%c0_19, %c0_20, %c0_21], %70 {strides = array<i32>} : memref<4x1x256xf32, #tpu.memory_space<vmem>>, vector<4x1x256xf32>,
    %72 = arith.truncf %69 : vector<16x8x8xf32> to vector<16x8x8xbf16>
    "tpu.trace_start"() <{level = 10 : i32, message = "bqk,bkd->bqd"}> : () -> ()
    %cst_22 = arith.constant dense<0.000000e+00> : vector<16x8x32xf32>
    %73 = tpu.matmul %72, %50, %cst_22 {dimension_numbers = #tpu.dot_dimension_numbers<[2], [1], [1], [2], [0, 0, 0, 1, 1, 2], [0], [0]>} : vector<16x8x8xbf16>, vector<16x8x32xbf16>, vector<16x8x32xf32> -> vector<16x8x32xf32>
    "tpu.trace_stop"() : () -> ()
    %74 = vector.shape_cast %73 : vector<16x8x32xf32> to vector<4x4x8x32xf32>
    %75 = vector.extract_strided_slice %74 {offsets = [0, 0, 0, 0], sizes = [4, 1, 8, 32], strides = [1, 1, 1, 1]} : vector<4x4x8x32xf32> to vector<4x1x8x32xf32>
    %76 = vector.shape_cast %75 : vector<4x1x8x32xf32> to vector<4x8x32xf32>
    %77 = vector.extract_strided_slice %74 {offsets = [0, 1, 0, 0], sizes = [4, 1, 8, 32], strides = [1, 1, 1, 1]} : vector<4x4x8x32xf32> to vector<4x1x8x32xf32>
    %78 = vector.shape_cast %77 : vector<4x1x8x32xf32> to vector<4x8x32xf32>
    %79 = vector.extract_strided_slice %74 {offsets = [0, 2, 0, 0], sizes = [4, 1, 8, 32], strides = [1, 1, 1, 1]} : vector<4x4x8x32xf32> to vector<4x1x8x32xf32>
    %80 = vector.shape_cast %79 : vector<4x1x8x32xf32> to vector<4x8x32xf32>
    %81 = vector.extract_strided_slice %74 {offsets = [0, 3, 0, 0], sizes = [4, 1, 8, 32], strides = [1, 1, 1, 1]} : vector<4x4x8x32xf32> to vector<4x1x8x32xf32>
    %82 = vector.shape_cast %81 : vector<4x1x8x32xf32> to vector<4x8x32xf32>
    %83 = tpu.concatenate %76, %78, %80, %82 in 2 : vector<4x8x32xf32>, vector<4x8x32xf32>, vector<4x8x32xf32>, vector<4x8x32xf32> -> vector<4x8x128xf32>
    %84 = vector.shape_cast %83 : vector<4x8x128xf32> to vector<32x128xf32>
    %85 = arith.truncf %84 : vector<32x128xf32> to vector<32x128xbf16>
    %c0_23 = arith.constant 0 : index
    %c0_24 = arith.constant 0 : index
    %86 = vector.load %arg7[%c0_23, %c0_24] : memref<128x32xbf16, #tpu.memory_space<vmem>>, vector<128x32xbf16>
    %cst_25 = arith.constant dense<0.000000e+00> : vector<32x32xf32>
    %87 = tpu.matmul %85, %86, %cst_25 {dimension_numbers = #tpu.dot_dimension_numbers<[1], [0], [0], [1], [0, 0, 1, 1], [], []>} : vector<32x128xbf16>, vector<128x32xbf16>, vector<32x32xf32> -> vector<32x32xf32>
    %c0_26 = arith.constant 0 : index
    %c0_27 = arith.constant 0 : index
    %88 = vector.load %arg8[%c0_26, %c0_27] : memref<1x32xf32, #tpu.memory_space<vmem>>, vector<1x32xf32>
    %89 = vector.broadcast %88 : vector<1x32xf32> to vector<32x32xf32>
    %90 = arith.addf %87, %89 : vector<32x32xf32>
    %91 = arith.addf %1, %90 : vector<32x32xf32>
    %c0_28 = arith.constant 0 : index
    %c0_29 = arith.constant 0 : index
    %92 = vector.load %arg9[%c0_28, %c0_29] : memref<1x32xf32, #tpu.memory_space<vmem>>, vector<1x32xf32>
    %c0_30 = arith.constant 0 : index
    %c0_31 = arith.constant 0 : index
    %93 = vector.load %arg10[%c0_30, %c0_31] : memref<1x32xf32, #tpu.memory_space<vmem>>, vector<1x32xf32>
    %cst_32 = arith.constant dense<0.000000e+00> : vector<32xf32>
    %94 = vector.multi_reduction <add>, %91, %cst_32 [1] : vector<32x32xf32> to vector<32xf32>
    %95 = vector.shape_cast %94 : vector<32xf32> to vector<32x1xf32>
    %cst_33 = arith.constant 3.200000e+01 : f32
    %96 = vector.broadcast %cst_33 : f32 to vector<32x1xf32>
    %97 = arith.divf %95, %96 : vector<32x1xf32>
    %98 = vector.broadcast %97 : vector<32x1xf32> to vector<32x32xf32>
    %99 = arith.subf %91, %98 : vector<32x32xf32>
    %100 = arith.mulf %99, %99 : vector<32x32xf32>
    %cst_34 = arith.constant dense<0.000000e+00> : vector<32xf32>
    %101 = vector.multi_reduction <add>, %100, %cst_34 [1] : vector<32x32xf32> to vector<32xf32>
    %102 = vector.shape_cast %101 : vector<32xf32> to vector<32x1xf32>
    %cst_35 = arith.constant 3.200000e+01 : f32
    %103 = vector.broadcast %cst_35 : f32 to vector<32x1xf32>
    %104 = arith.divf %102, %103 : vector<32x1xf32>
    %cst_36 = arith.constant 9.99999974E-6 : f32
    %105 = vector.broadcast %cst_36 : f32 to vector<32x1xf32>
    %106 = arith.addf %104, %105 : vector<32x1xf32>
    %107 = math.rsqrt %106 : vector<32x1xf32>
    %108 = vector.broadcast %107 : vector<32x1xf32> to vector<32x32xf32>
    %109 = arith.mulf %99, %108 : vector<32x32xf32>
    %110 = vector.broadcast %92 : vector<1x32xf32> to vector<32x32xf32>
    %111 = arith.mulf %109, %110 : vector<32x32xf32>
    %112 = vector.broadcast %93 : vector<1x32xf32> to vector<32x32xf32>
    %113 = arith.addf %111, %112 : vector<32x32xf32>
    %114 = arith.truncf %113 : vector<32x32xf32> to vector<32x32xbf16>
    %c0_37 = arith.constant 0 : index
    %c0_38 = arith.constant 0 : index
    %115 = vector.load %arg11[%c0_37, %c0_38] : memref<32x64xbf16, #tpu.memory_space<vmem>>, vector<32x64xbf16>
    %cst_39 = arith.constant dense<0.000000e+00> : vector<32x64xf32>
    %116 = tpu.matmul %114, %115, %cst_39 {dimension_numbers = #tpu.dot_dimension_numbers<[1], [0], [0], [1], [0, 0, 1, 1], [], []>} : vector<32x32xbf16>, vector<32x64xbf16>, vector<32x64xf32> -> vector<32x64xf32>
    %c0_40 = arith.constant 0 : index
    %c0_41 = arith.constant 0 : index
    %117 = vector.load %arg12[%c0_40, %c0_41] : memref<1x64xf32, #tpu.memory_space<vmem>>, vector<1x64xf32>
    %118 = vector.broadcast %117 : vector<1x64xf32> to vector<32x64xf32>
    %119 = arith.addf %116, %118 : vector<32x64xf32>
    %cst_42 = arith.constant 0.000000e+00 : f32
    %120 = vector.broadcast %cst_42 : f32 to vector<32x64xf32>
    %121 = arith.maximumf %119, %120 : vector<32x64xf32>
    %122 = arith.truncf %121 : vector<32x64xf32> to vector<32x64xbf16>
    %c0_43 = arith.constant 0 : index
    %c0_44 = arith.constant 0 : index
    %123 = vector.load %arg13[%c0_43, %c0_44] : memref<64x32xbf16, #tpu.memory_space<vmem>>, vector<64x32xbf16>
    %cst_45 = arith.constant dense<0.000000e+00> : vector<32x32xf32>
    %124 = tpu.matmul %122, %123, %cst_45 {dimension_numbers = #tpu.dot_dimension_numbers<[1], [0], [0], [1], [0, 0, 1, 1], [], []>} : vector<32x64xbf16>, vector<64x32xbf16>, vector<32x32xf32> -> vector<32x32xf32>
    %c0_46 = arith.constant 0 : index
    %c0_47 = arith.constant 0 : index
    %125 = vector.load %arg14[%c0_46, %c0_47] : memref<1x32xf32, #tpu.memory_space<vmem>>, vector<1x32xf32>
    %126 = vector.broadcast %125 : vector<1x32xf32> to vector<32x32xf32>
    %127 = arith.addf %124, %126 : vector<32x32xf32>
    %128 = arith.addf %113, %127 : vector<32x32xf32>
    %c0_48 = arith.constant 0 : index
    %c0_49 = arith.constant 0 : index
    %129 = vector.load %arg15[%c0_48, %c0_49] : memref<1x32xf32, #tpu.memory_space<vmem>>, vector<1x32xf32>
    %c0_50 = arith.constant 0 : index
    %c0_51 = arith.constant 0 : index
    %130 = vector.load %arg16[%c0_50, %c0_51] : memref<1x32xf32, #tpu.memory_space<vmem>>, vector<1x32xf32>
    %cst_52 = arith.constant dense<0.000000e+00> : vector<32xf32>
    %131 = vector.multi_reduction <add>, %128, %cst_52 [1] : vector<32x32xf32> to vector<32xf32>
    %132 = vector.shape_cast %131 : vector<32xf32> to vector<32x1xf32>
    %cst_53 = arith.constant 3.200000e+01 : f32
    %133 = vector.broadcast %cst_53 : f32 to vector<32x1xf32>
    %134 = arith.divf %132, %133 : vector<32x1xf32>
    %135 = vector.broadcast %134 : vector<32x1xf32> to vector<32x32xf32>
    %136 = arith.subf %128, %135 : vector<32x32xf32>
    %137 = arith.mulf %136, %136 : vector<32x32xf32>
    %cst_54 = arith.constant dense<0.000000e+00> : vector<32xf32>
    %138 = vector.multi_reduction <add>, %137, %cst_54 [1] : vector<32x32xf32> to vector<32xf32>
    %139 = vector.shape_cast %138 : vector<32xf32> to vector<32x1xf32>
    %cst_55 = arith.constant 3.200000e+01 : f32
    %140 = vector.broadcast %cst_55 : f32 to vector<32x1xf32>
    %141 = arith.divf %139, %140 : vector<32x1xf32>
    %cst_56 = arith.constant 9.99999974E-6 : f32
    %142 = vector.broadcast %cst_56 : f32 to vector<32x1xf32>
    %143 = arith.addf %141, %142 : vector<32x1xf32>
    %144 = math.rsqrt %143 : vector<32x1xf32>
    %145 = vector.broadcast %144 : vector<32x1xf32> to vector<32x32xf32>
    %146 = arith.mulf %136, %145 : vector<32x32xf32>
    %147 = vector.broadcast %129 : vector<1x32xf32> to vector<32x32xf32>
    %148 = arith.mulf %146, %147 : vector<32x32xf32>
    %149 = vector.broadcast %130 : vector<1x32xf32> to vector<32x32xf32>
    %150 = arith.addf %148, %149 : vector<32x32xf32>
    %151 = vector.shape_cast %150 : vector<32x32xf32> to vector<4x8x32xf32>
    %c0_57 = arith.constant 0 : index
    %c0_58 = arith.constant 0 : index
    %c0_59 = arith.constant 0 : index
    %152 = vector.load %arg17[%c0_57, %c0_58, %c0_59] : memref<4x8x32xf32, #tpu.memory_space<vmem>>, vector<4x8x32xf32>
    tpu.vector_store %arg17[%c0_57, %c0_58, %c0_59], %151 {strides = array<i32>} : memref<4x8x32xf32, #tpu.memory_space<vmem>>, vector<4x8x32xf32>,
    return
  }
  func.func @transform_0(%arg0: i32) -> (i32, i32, i32) {
    %c0_i32 = arith.constant 0 : i32
    %c0_i32_0 = arith.constant 0 : i32
    %c0_i32_1 = arith.constant 0 : i32
    return %arg0, %c0_i32, %c0_i32_0 : i32, i32, i32
  }
  func.func @transform_1(%arg0: i32) -> (i32, i32, i32) {
    %c0_i32 = arith.constant 0 : i32
    %c0_i32_0 = arith.constant 0 : i32
    %c0_i32_1 = arith.constant 0 : i32
    return %arg0, %c0_i32, %c0_i32_0 : i32, i32, i32
  }
  func.func @transform_2(%arg0: i32) -> (i32, i32) {
    %c0_i32 = arith.constant 0 : i32
    %c0_i32_0 = arith.constant 0 : i32
    %c0_i32_1 = arith.constant 0 : i32
    return %c0_i32, %c0_i32_0 : i32, i32
  }
  func.func @transform_3(%arg0: i32) -> (i32, i32) {
    %c0_i32 = arith.constant 0 : i32
    %c0_i32_0 = arith.constant 0 : i32
    %c0_i32_1 = arith.constant 0 : i32
    return %c0_i32, %c0_i32_0 : i32, i32
  }
  func.func @transform_4(%arg0: i32) -> (i32, i32) {
    %c0_i32 = arith.constant 0 : i32
    %c0_i32_0 = arith.constant 0 : i32
    %c0_i32_1 = arith.constant 0 : i32
    return %c0_i32, %c0_i32_0 : i32, i32
  }
  func.func @transform_5(%arg0: i32) -> (i32, i32) {
    %c0_i32 = arith.constant 0 : i32
    %c0_i32_0 = arith.constant 0 : i32
    %c0_i32_1 = arith.constant 0 : i32
    return %c0_i32, %c0_i32_0 : i32, i32
  }
  func.func @transform_6(%arg0: i32) -> (i32, i32) {
    %c0_i32 = arith.constant 0 : i32
    %c0_i32_0 = arith.constant 0 : i32
    %c0_i32_1 = arith.constant 0 : i32
    return %c0_i32, %c0_i32_0 : i32, i32
  }
  func.func @transform_7(%arg0: i32) -> (i32, i32) {
    %c0_i32 = arith.constant 0 : i32
    %c0_i32_0 = arith.constant 0 : i32
    %c0_i32_1 = arith.constant 0 : i32
    return %c0_i32, %c0_i32_0 : i32, i32
  }
  func.func @transform_8(%arg0: i32) -> (i32, i32) {
    %c0_i32 = arith.constant 0 : i32
    %c0_i32_0 = arith.constant 0 : i32
    %c0_i32_1 = arith.constant 0 : i32
    return %c0_i32, %c0_i32_0 : i32, i32
  }
  func.func @transform_9(%arg0: i32) -> (i32, i32) {
    %c0_i32 = arith.constant 0 : i32
    %c0_i32_0 = arith.constant 0 : i32
    %c0_i32_1 = arith.constant 0 : i32
    return %c0_i32, %c0_i32_0 : i32, i32
  }
  func.func @transform_10(%arg0: i32) -> (i32, i32) {
    %c0_i32 = arith.constant 0 : i32
    %c0_i32_0 = arith.constant 0 : i32
    %c0_i32_1 = arith.constant 0 : i32
    return %c0_i32, %c0_i32_0 : i32, i32
  }
  func.func @transform_11(%arg0: i32) -> (i32, i32) {
    %c0_i32 = arith.constant 0 : i32
    %c0_i32_0 = arith.constant 0 : i32
    %c0_i32_1 = arith.constant 0 : i32
    return %c0_i32, %c0_i32_0 : i32, i32
  }
  func.func @transform_12(%arg0: i32) -> (i32, i32) {
    %c0_i32 = arith.constant 0 : i32
    %c0_i32_0 = arith.constant 0 : i32
    %c0_i32_1 = arith.constant 0 : i32
    return %c0_i32, %c0_i32_0 : i32, i32
  }
  func.func @transform_13(%arg0: i32) -> (i32, i32) {
    %c0_i32 = arith.constant 0 : i32
    %c0_i32_0 = arith.constant 0 : i32
    %c0_i32_1 = arith.constant 0 : i32
    return %c0_i32, %c0_i32_0 : i32, i32
  }
  func.func @transform_14(%arg0: i32) -> (i32, i32) {
    %c0_i32 = arith.constant 0 : i32
    %c0_i32_0 = arith.constant 0 : i32
    %c0_i32_1 = arith.constant 0 : i32
    return %c0_i32, %c0_i32_0 : i32, i32
  }
  func.func @transform_15(%arg0: i32) -> (i32, i32) {
    %c0_i32 = arith.constant 0 : i32
    %c0_i32_0 = arith.constant 0 : i32
    %c0_i32_1 = arith.constant 0 : i32
    return %c0_i32, %c0_i32_0 : i32, i32
  }
  func.func @transform_16(%arg0: i32) -> (i32, i32, i32) {
    %c0_i32 = arith.constant 0 : i32
    %c0_i32_0 = arith.constant 0 : i32
    %c0_i32_1 = arith.constant 0 : i32
    return %arg0, %c0_i32, %c0_i32_0 : i32, i32, i32
  }
  func.func @transform_17(%arg0: i32) -> (i32, i32, i32) {
    %c0_i32 = arith.constant 0 : i32
    %c0_i32_0 = arith.constant 0 : i32
    %c0_i32_1 = arith.constant 0 : i32
    return %arg0, %c0_i32, %c0_i32_0 : i32, i32, i32
  }
}

module attributes {stable_mosaic.version = 11 : i64} {
  func.func @kernel(%arg0: i32, %arg1: memref<4x8x32xf32, #tpu.memory_space<vmem>>, %arg2: memref<4x8x64xf32, #tpu.memory_space<vmem>>, %arg3: memref<64x256xbf16, #tpu.memory_space<vmem>>, %arg4: memref<1x256xf32, #tpu.memory_space<vmem>>, %arg5: memref<32x128xbf16, #tpu.memory_space<vmem>>, %arg6: memref<1x128xf32, #tpu.memory_space<vmem>>, %arg7: memref<128x32xbf16, #tpu.memory_space<vmem>>, %arg8: memref<1x32xf32, #tpu.memory_space<vmem>>, %arg9: memref<1x32xf32, #tpu.memory_space<vmem>>, %arg10: memref<1x32xf32, #tpu.memory_space<vmem>>, %arg11: memref<32x64xbf16, #tpu.memory_space<vmem>>, %arg12: memref<1x64xf32, #tpu.memory_space<vmem>>, %arg13: memref<64x32xbf16, #tpu.memory_space<vmem>>, %arg14: memref<1x32xf32, #tpu.memory_space<vmem>>, %arg15: memref<1x32xf32, #tpu.memory_space<vmem>>, %arg16: memref<1x32xf32, #tpu.memory_space<vmem>>, %arg17: memref<4x8x32xf32, #tpu.memory_space<vmem>>, %arg18: memref<16x8x8xf32, #tpu.memory_space<vmem>>) attributes {dimension_semantics = [#tpu.dimension_semantics<parallel>], iteration_bounds = array<i64: 1>, scalar_prefetch = 0 : i64, scratch_operands = 0 : i64, tpu.core_type = #tpu.core_type<tc>, window_params = [{transform_indices = @transform_0, window_bounds = array<i64: 4, 8, 32>}, {transform_indices = @transform_1, window_bounds = array<i64: 4, 8, 64>}, {pipeline_mode = #tpu.pipeline_mode<synchronous>, transform_indices = @transform_2, window_bounds = array<i64: 64, 256>}, {pipeline_mode = #tpu.pipeline_mode<synchronous>, transform_indices = @transform_3, window_bounds = array<i64: 1, 256>}, {pipeline_mode = #tpu.pipeline_mode<synchronous>, transform_indices = @transform_4, window_bounds = array<i64: 32, 128>}, {pipeline_mode = #tpu.pipeline_mode<synchronous>, transform_indices = @transform_5, window_bounds = array<i64: 1, 128>}, {pipeline_mode = #tpu.pipeline_mode<synchronous>, transform_indices = @transform_6, window_bounds = array<i64: 128, 32>}, {pipeline_mode = #tpu.pipeline_mode<synchronous>, transform_indices = @transform_7, window_bounds = array<i64: 1, 32>}, {pipeline_mode = #tpu.pipeline_mode<synchronous>, transform_indices = @transform_8, window_bounds = array<i64: 1, 32>}, {pipeline_mode = #tpu.pipeline_mode<synchronous>, transform_indices = @transform_9, window_bounds = array<i64: 1, 32>}, {pipeline_mode = #tpu.pipeline_mode<synchronous>, transform_indices = @transform_10, window_bounds = array<i64: 32, 64>}, {pipeline_mode = #tpu.pipeline_mode<synchronous>, transform_indices = @transform_11, window_bounds = array<i64: 1, 64>}, {pipeline_mode = #tpu.pipeline_mode<synchronous>, transform_indices = @transform_12, window_bounds = array<i64: 64, 32>}, {pipeline_mode = #tpu.pipeline_mode<synchronous>, transform_indices = @transform_13, window_bounds = array<i64: 1, 32>}, {pipeline_mode = #tpu.pipeline_mode<synchronous>, transform_indices = @transform_14, window_bounds = array<i64: 1, 32>}, {pipeline_mode = #tpu.pipeline_mode<synchronous>, transform_indices = @transform_15, window_bounds = array<i64: 1, 32>}, {transform_indices = @transform_16, window_bounds = array<i64: 4, 8, 32>}, {transform_indices = @transform_17, window_bounds = array<i64: 16, 8, 8>}]} {
    %c0 = arith.constant 0 : index
    %c0_0 = arith.constant 0 : index
    %c0_1 = arith.constant 0 : index
    %0 = vector.load %arg1[%c0, %c0_0, %c0_1] : memref<4x8x32xf32, #tpu.memory_space<vmem>>, vector<4x8x32xf32>
    %1 = vector.shape_cast %0 : vector<4x8x32xf32> to vector<32x32xf32>
    %c0_2 = arith.constant 0 : index
    %c0_3 = arith.constant 0 : index
    %c0_4 = arith.constant 0 : index
    %2 = vector.load %arg2[%c0_2, %c0_3, %c0_4] : memref<4x8x64xf32, #tpu.memory_space<vmem>>, vector<4x8x64xf32>
    %3 = vector.shape_cast %2 : vector<4x8x64xf32> to vector<32x64xf32>
    %4 = arith.truncf %3 : vector<32x64xf32> to vector<32x64xbf16>
    %c0_5 = arith.constant 0 : index
    %c0_6 = arith.constant 0 : index
    %5 = vector.load %arg3[%c0_5, %c0_6] : memref<64x256xbf16, #tpu.memory_space<vmem>>, vector<64x256xbf16>
    %cst = arith.constant dense<0.000000e+00> : vector<32x256xf32>
    %6 = tpu.matmul %4, %5, %cst {dimension_numbers = #tpu.dot_dimension_numbers<[1], [0], [0], [1], [0, 0, 1, 1], [], []>} : vector<32x64xbf16>, vector<64x256xbf16>, vector<32x256xf32> -> vector<32x256xf32>
    %c0_7 = arith.constant 0 : index
    %c0_8 = arith.constant 0 : index
    %7 = vector.load %arg4[%c0_7, %c0_8] : memref<1x256xf32, #tpu.memory_space<vmem>>, vector<1x256xf32>
    %8 = vector.broadcast %7 : vector<1x256xf32> to vector<32x256xf32>
    %9 = arith.addf %6, %8 : vector<32x256xf32>
    %10 = arith.truncf %1 : vector<32x32xf32> to vector<32x32xbf16>
    %c0_9 = arith.constant 0 : index
    %c0_10 = arith.constant 0 : index
    %11 = vector.load %arg5[%c0_9, %c0_10] : memref<32x128xbf16, #tpu.memory_space<vmem>>, vector<32x128xbf16>
    %cst_11 = arith.constant dense<0.000000e+00> : vector<32x128xf32>
    %12 = tpu.matmul %10, %11, %cst_11 {dimension_numbers = #tpu.dot_dimension_numbers<[1], [0], [0], [1], [0, 0, 1, 1], [], []>} : vector<32x32xbf16>, vector<32x128xbf16>, vector<32x128xf32> -> vector<32x128xf32>
    %c0_12 = arith.constant 0 : index
    %c0_13 = arith.constant 0 : index
    %13 = vector.load %arg6[%c0_12, %c0_13] : memref<1x128xf32, #tpu.memory_space<vmem>>, vector<1x128xf32>
    %14 = vector.broadcast %13 : vector<1x128xf32> to vector<32x128xf32>
    %15 = arith.addf %12, %14 : vector<32x128xf32>
    %16 = vector.shape_cast %9 : vector<32x256xf32> to vector<4x8x256xf32>
    %17 = vector.shape_cast %15 : vector<32x128xf32> to vector<4x8x128xf32>
    %18 = vector.extract_strided_slice %16 {offsets = [0, 0, 0], sizes = [4, 8, 32], strides = [1, 1, 1]} : vector<4x8x256xf32> to vector<4x8x32xf32>
    %19 = vector.extract_strided_slice %16 {offsets = [0, 0, 32], sizes = [4, 8, 32], strides = [1, 1, 1]} : vector<4x8x256xf32> to vector<4x8x32xf32>
    %20 = vector.extract_strided_slice %16 {offsets = [0, 0, 64], sizes = [4, 8, 32], strides = [1, 1, 1]} : vector<4x8x256xf32> to vector<4x8x32xf32>
    %21 = vector.extract_strided_slice %16 {offsets = [0, 0, 96], sizes = [4, 8, 32], strides = [1, 1, 1]} : vector<4x8x256xf32> to vector<4x8x32xf32>
    %22 = vector.shape_cast %18 : vector<4x8x32xf32> to vector<4x1x8x32xf32>
    %23 = vector.shape_cast %19 : vector<4x8x32xf32> to vector<4x1x8x32xf32>
    %24 = vector.shape_cast %20 : vector<4x8x32xf32> to vector<4x1x8x32xf32>
    %25 = vector.shape_cast %21 : vector<4x8x32xf32> to vector<4x1x8x32xf32>
    %26 = tpu.concatenate %22, %23, %24, %25 in 1 : vector<4x1x8x32xf32>, vector<4x1x8x32xf32>, vector<4x1x8x32xf32>, vector<4x1x8x32xf32> -> vector<4x4x8x32xf32>
    %27 = vector.shape_cast %26 : vector<4x4x8x32xf32> to vector<16x8x32xf32>
    %28 = arith.truncf %27 : vector<16x8x32xf32> to vector<16x8x32xbf16>
    %29 = vector.extract_strided_slice %16 {offsets = [0, 0, 128], sizes = [4, 8, 32], strides = [1, 1, 1]} : vector<4x8x256xf32> to vector<4x8x32xf32>
    %30 = vector.extract_strided_slice %16 {offsets = [0, 0, 160], sizes = [4, 8, 32], strides = [1, 1, 1]} : vector<4x8x256xf32> to vector<4x8x32xf32>
    %31 = vector.extract_strided_slice %16 {offsets = [0, 0, 192], sizes = [4, 8, 32], strides = [1, 1, 1]} : vector<4x8x256xf32> to vector<4x8x32xf32>
    %32 = vector.extract_strided_slice %16 {offsets = [0, 0, 224], sizes = [4, 8, 32], strides = [1, 1, 1]} : vector<4x8x256xf32> to vector<4x8x32xf32>
    %33 = vector.shape_cast %29 : vector<4x8x32xf32> to vector<4x1x8x32xf32>
    %34 = vector.shape_cast %30 : vector<4x8x32xf32> to vector<4x1x8x32xf32>
    %35 = vector.shape_cast %31 : vector<4x8x32xf32> to vector<4x1x8x32xf32>
    %36 = vector.shape_cast %32 : vector<4x8x32xf32> to vector<4x1x8x32xf32>
    %37 = tpu.concatenate %33, %34, %35, %36 in 1 : vector<4x1x8x32xf32>, vector<4x1x8x32xf32>, vector<4x1x8x32xf32>, vector<4x1x8x32xf32> -> vector<4x4x8x32xf32>
    %38 = vector.shape_cast %37 : vector<4x4x8x32xf32> to vector<16x8x32xf32>
    %39 = arith.truncf %38 : vector<16x8x32xf32> to vector<16x8x32xbf16>
    %40 = vector.extract_strided_slice %17 {offsets = [0, 0, 0], sizes = [4, 8, 32], strides = [1, 1, 1]} : vector<4x8x128xf32> to vector<4x8x32xf32>
    %41 = vector.extract_strided_slice %17 {offsets = [0, 0, 32], sizes = [4, 8, 32], strides = [1, 1, 1]} : vector<4x8x128xf32> to vector<4x8x32xf32>
    %42 = vector.extract_strided_slice %17 {offsets = [0, 0, 64], sizes = [4, 8, 32], strides = [1, 1, 1]} : vector<4x8x128xf32> to vector<4x8x32xf32>
    %43 = vector.extract_strided_slice %17 {offsets = [0, 0, 96], sizes = [4, 8, 32], strides = [1, 1, 1]} : vector<4x8x128xf32> to vector<4x8x32xf32>
    %44 = vector.shape_cast %40 : vector<4x8x32xf32> to vector<4x1x8x32xf32>
    %45 = vector.shape_cast %41 : vector<4x8x32xf32> to vector<4x1x8x32xf32>
    %46 = vector.shape_cast %42 : vector<4x8x32xf32> to vector<4x1x8x32xf32>
    %47 = vector.shape_cast %43 : vector<4x8x32xf32> to vector<4x1x8x32xf32>
    %48 = tpu.concatenate %44, %45, %46, %47 in 1 : vector<4x1x8x32xf32>, vector<4x1x8x32xf32>, vector<4x1x8x32xf32>, vector<4x1x8x32xf32> -> vector<4x4x8x32xf32>
    %49 = vector.shape_cast %48 : vector<4x4x8x32xf32> to vector<16x8x32xf32>
    %50 = arith.truncf %49 : vector<16x8x32xf32> to vector<16x8x32xbf16>
    %51 = tpu.iota {dimensions = array<i32: 0>} : vector<8x8xi32>
    %52 = tpu.iota {dimensions = array<i32: 1>} : vector<8x8xi32>
    %53 = arith.cmpi sle, %52, %51 : vector<8x8xi32>
    %cst_14 = arith.constant 0.000000e+00 : f32
    %cst_15 = arith.constant -1.000000e+09 : f32
    %54 = vector.broadcast %cst_14 : f32 to vector<8x8xf32>
    %55 = vector.broadcast %cst_15 : f32 to vector<8x8xf32>
    %56 = arith.select %53, %54, %55 : vector<8x8xi1>, vector<8x8xf32>
    "tpu.trace_start"() <{level = 10 : i32, message = "bqd,bkd->bqk"}> : () -> ()
    %cst_16 = arith.constant dense<0.000000e+00> : vector<16x8x8xf32>
    %57 = tpu.matmul %28, %39, %cst_16 {dimension_numbers = #tpu.dot_dimension_numbers<[2], [2], [1], [1], [0, 0, 0, 1, 1, 1], [0], [0]>} : vector<16x8x32xbf16>, vector<16x8x32xbf16>, vector<16x8x8xf32> -> vector<16x8x8xf32>
    "tpu.trace_stop"() : () -> ()
    %58 = vector.shape_cast %56 : vector<8x8xf32> to vector<1x8x8xf32>
    %59 = vector.broadcast %58 : vector<1x8x8xf32> to vector<16x8x8xf32>
    %60 = arith.addf %57, %59 : vector<16x8x8xf32>
    %cst_17 = arith.constant dense<0xFF800000> : vector<16x8xf32>
    %61 = vector.multi_reduction <maximumf>, %60, %cst_17 [2] : vector<16x8x8xf32> to vector<16x8xf32>
    %62 = vector.shape_cast %61 : vector<16x8xf32> to vector<16x8x1xf32>
    %63 = vector.broadcast %62 : vector<16x8x1xf32> to vector<16x8x8xf32>
    %64 = arith.subf %60, %63 : vector<16x8x8xf32>
    %65 = math.exp %64 : vector<16x8x8xf32>
    %cst_18 = arith.constant dense<0.000000e+00> : vector<16x8xf32>
    %66 = vector.multi_reduction <add>, %65, %cst_18 [2] : vector<16x8x8xf32> to vector<16x8xf32>
    %67 = vector.shape_cast %66 : vector<16x8xf32> to vector<16x8x1xf32>
    %68 = vector.broadcast %67 : vector<16x8x1xf32> to vector<16x8x8xf32>
    %69 = arith.divf %65, %68 : vector<16x8x8xf32>
    %c0_19 = arith.constant 0 : index
    %c0_20 = arith.constant 0 : index
    %c0_21 = arith.constant 0 : index
    %70 = vector.load %arg18[%c0_19, %c0_20, %c0_21] : memref<16x8x8xf32, #tpu.memory_space<vmem>>, vector<16x8x8xf32>
    tpu.vector_store %arg18[%c0_19, %c0_20, %c0_21], %69 {strides = array<i32>} : memref<16x8x8xf32, #tpu.memory_space<vmem>>, vector<16x8x8xf32>,
    %71 = arith.truncf %69 : vector<16x8x8xf32> to vector<16x8x8xbf16>
    "tpu.trace_start"() <{level = 10 : i32, message = "bqk,bkd->bqd"}> : () -> ()
    %cst_22 = arith.constant dense<0.000000e+00> : vector<16x8x32xf32>
    %72 = tpu.matmul %71, %50, %cst_22 {dimension_numbers = #tpu.dot_dimension_numbers<[2], [1], [1], [2], [0, 0, 0, 1, 1, 2], [0], [0]>} : vector<16x8x8xbf16>, vector<16x8x32xbf16>, vector<16x8x32xf32> -> vector<16x8x32xf32>
    "tpu.trace_stop"() : () -> ()
    %73 = vector.shape_cast %72 : vector<16x8x32xf32> to vector<4x4x8x32xf32>
    %74 = vector.extract_strided_slice %73 {offsets = [0, 0, 0, 0], sizes = [4, 1, 8, 32], strides = [1, 1, 1, 1]} : vector<4x4x8x32xf32> to vector<4x1x8x32xf32>
    %75 = vector.shape_cast %74 : vector<4x1x8x32xf32> to vector<4x8x32xf32>
    %76 = vector.extract_strided_slice %73 {offsets = [0, 1, 0, 0], sizes = [4, 1, 8, 32], strides = [1, 1, 1, 1]} : vector<4x4x8x32xf32> to vector<4x1x8x32xf32>
    %77 = vector.shape_cast %76 : vector<4x1x8x32xf32> to vector<4x8x32xf32>
    %78 = vector.extract_strided_slice %73 {offsets = [0, 2, 0, 0], sizes = [4, 1, 8, 32], strides = [1, 1, 1, 1]} : vector<4x4x8x32xf32> to vector<4x1x8x32xf32>
    %79 = vector.shape_cast %78 : vector<4x1x8x32xf32> to vector<4x8x32xf32>
    %80 = vector.extract_strided_slice %73 {offsets = [0, 3, 0, 0], sizes = [4, 1, 8, 32], strides = [1, 1, 1, 1]} : vector<4x4x8x32xf32> to vector<4x1x8x32xf32>
    %81 = vector.shape_cast %80 : vector<4x1x8x32xf32> to vector<4x8x32xf32>
    %82 = tpu.concatenate %75, %77, %79, %81 in 2 : vector<4x8x32xf32>, vector<4x8x32xf32>, vector<4x8x32xf32>, vector<4x8x32xf32> -> vector<4x8x128xf32>
    %83 = vector.shape_cast %82 : vector<4x8x128xf32> to vector<32x128xf32>
    %84 = arith.truncf %83 : vector<32x128xf32> to vector<32x128xbf16>
    %c0_23 = arith.constant 0 : index
    %c0_24 = arith.constant 0 : index
    %85 = vector.load %arg7[%c0_23, %c0_24] : memref<128x32xbf16, #tpu.memory_space<vmem>>, vector<128x32xbf16>
    %cst_25 = arith.constant dense<0.000000e+00> : vector<32x32xf32>
    %86 = tpu.matmul %84, %85, %cst_25 {dimension_numbers = #tpu.dot_dimension_numbers<[1], [0], [0], [1], [0, 0, 1, 1], [], []>} : vector<32x128xbf16>, vector<128x32xbf16>, vector<32x32xf32> -> vector<32x32xf32>
    %c0_26 = arith.constant 0 : index
    %c0_27 = arith.constant 0 : index
    %87 = vector.load %arg8[%c0_26, %c0_27] : memref<1x32xf32, #tpu.memory_space<vmem>>, vector<1x32xf32>
    %88 = vector.broadcast %87 : vector<1x32xf32> to vector<32x32xf32>
    %89 = arith.addf %86, %88 : vector<32x32xf32>
    %90 = arith.addf %1, %89 : vector<32x32xf32>
    %c0_28 = arith.constant 0 : index
    %c0_29 = arith.constant 0 : index
    %91 = vector.load %arg9[%c0_28, %c0_29] : memref<1x32xf32, #tpu.memory_space<vmem>>, vector<1x32xf32>
    %c0_30 = arith.constant 0 : index
    %c0_31 = arith.constant 0 : index
    %92 = vector.load %arg10[%c0_30, %c0_31] : memref<1x32xf32, #tpu.memory_space<vmem>>, vector<1x32xf32>
    %cst_32 = arith.constant dense<0.000000e+00> : vector<32xf32>
    %93 = vector.multi_reduction <add>, %90, %cst_32 [1] : vector<32x32xf32> to vector<32xf32>
    %94 = vector.shape_cast %93 : vector<32xf32> to vector<32x1xf32>
    %cst_33 = arith.constant 3.200000e+01 : f32
    %95 = vector.broadcast %cst_33 : f32 to vector<32x1xf32>
    %96 = arith.divf %94, %95 : vector<32x1xf32>
    %97 = vector.broadcast %96 : vector<32x1xf32> to vector<32x32xf32>
    %98 = arith.subf %90, %97 : vector<32x32xf32>
    %99 = arith.mulf %98, %98 : vector<32x32xf32>
    %cst_34 = arith.constant dense<0.000000e+00> : vector<32xf32>
    %100 = vector.multi_reduction <add>, %99, %cst_34 [1] : vector<32x32xf32> to vector<32xf32>
    %101 = vector.shape_cast %100 : vector<32xf32> to vector<32x1xf32>
    %cst_35 = arith.constant 3.200000e+01 : f32
    %102 = vector.broadcast %cst_35 : f32 to vector<32x1xf32>
    %103 = arith.divf %101, %102 : vector<32x1xf32>
    %cst_36 = arith.constant 9.99999974E-6 : f32
    %104 = vector.broadcast %cst_36 : f32 to vector<32x1xf32>
    %105 = arith.addf %103, %104 : vector<32x1xf32>
    %106 = math.rsqrt %105 : vector<32x1xf32>
    %107 = vector.broadcast %106 : vector<32x1xf32> to vector<32x32xf32>
    %108 = arith.mulf %98, %107 : vector<32x32xf32>
    %109 = vector.broadcast %91 : vector<1x32xf32> to vector<32x32xf32>
    %110 = arith.mulf %108, %109 : vector<32x32xf32>
    %111 = vector.broadcast %92 : vector<1x32xf32> to vector<32x32xf32>
    %112 = arith.addf %110, %111 : vector<32x32xf32>
    %113 = arith.truncf %112 : vector<32x32xf32> to vector<32x32xbf16>
    %c0_37 = arith.constant 0 : index
    %c0_38 = arith.constant 0 : index
    %114 = vector.load %arg11[%c0_37, %c0_38] : memref<32x64xbf16, #tpu.memory_space<vmem>>, vector<32x64xbf16>
    %cst_39 = arith.constant dense<0.000000e+00> : vector<32x64xf32>
    %115 = tpu.matmul %113, %114, %cst_39 {dimension_numbers = #tpu.dot_dimension_numbers<[1], [0], [0], [1], [0, 0, 1, 1], [], []>} : vector<32x32xbf16>, vector<32x64xbf16>, vector<32x64xf32> -> vector<32x64xf32>
    %c0_40 = arith.constant 0 : index
    %c0_41 = arith.constant 0 : index
    %116 = vector.load %arg12[%c0_40, %c0_41] : memref<1x64xf32, #tpu.memory_space<vmem>>, vector<1x64xf32>
    %117 = vector.broadcast %116 : vector<1x64xf32> to vector<32x64xf32>
    %118 = arith.addf %115, %117 : vector<32x64xf32>
    %cst_42 = arith.constant 0.000000e+00 : f32
    %119 = vector.broadcast %cst_42 : f32 to vector<32x64xf32>
    %120 = arith.maximumf %118, %119 : vector<32x64xf32>
    %121 = arith.truncf %120 : vector<32x64xf32> to vector<32x64xbf16>
    %c0_43 = arith.constant 0 : index
    %c0_44 = arith.constant 0 : index
    %122 = vector.load %arg13[%c0_43, %c0_44] : memref<64x32xbf16, #tpu.memory_space<vmem>>, vector<64x32xbf16>
    %cst_45 = arith.constant dense<0.000000e+00> : vector<32x32xf32>
    %123 = tpu.matmul %121, %122, %cst_45 {dimension_numbers = #tpu.dot_dimension_numbers<[1], [0], [0], [1], [0, 0, 1, 1], [], []>} : vector<32x64xbf16>, vector<64x32xbf16>, vector<32x32xf32> -> vector<32x32xf32>
    %c0_46 = arith.constant 0 : index
    %c0_47 = arith.constant 0 : index
    %124 = vector.load %arg14[%c0_46, %c0_47] : memref<1x32xf32, #tpu.memory_space<vmem>>, vector<1x32xf32>
    %125 = vector.broadcast %124 : vector<1x32xf32> to vector<32x32xf32>
    %126 = arith.addf %123, %125 : vector<32x32xf32>
    %127 = arith.addf %112, %126 : vector<32x32xf32>
    %c0_48 = arith.constant 0 : index
    %c0_49 = arith.constant 0 : index
    %128 = vector.load %arg15[%c0_48, %c0_49] : memref<1x32xf32, #tpu.memory_space<vmem>>, vector<1x32xf32>
    %c0_50 = arith.constant 0 : index
    %c0_51 = arith.constant 0 : index
    %129 = vector.load %arg16[%c0_50, %c0_51] : memref<1x32xf32, #tpu.memory_space<vmem>>, vector<1x32xf32>
    %cst_52 = arith.constant dense<0.000000e+00> : vector<32xf32>
    %130 = vector.multi_reduction <add>, %127, %cst_52 [1] : vector<32x32xf32> to vector<32xf32>
    %131 = vector.shape_cast %130 : vector<32xf32> to vector<32x1xf32>
    %cst_53 = arith.constant 3.200000e+01 : f32
    %132 = vector.broadcast %cst_53 : f32 to vector<32x1xf32>
    %133 = arith.divf %131, %132 : vector<32x1xf32>
    %134 = vector.broadcast %133 : vector<32x1xf32> to vector<32x32xf32>
    %135 = arith.subf %127, %134 : vector<32x32xf32>
    %136 = arith.mulf %135, %135 : vector<32x32xf32>
    %cst_54 = arith.constant dense<0.000000e+00> : vector<32xf32>
    %137 = vector.multi_reduction <add>, %136, %cst_54 [1] : vector<32x32xf32> to vector<32xf32>
    %138 = vector.shape_cast %137 : vector<32xf32> to vector<32x1xf32>
    %cst_55 = arith.constant 3.200000e+01 : f32
    %139 = vector.broadcast %cst_55 : f32 to vector<32x1xf32>
    %140 = arith.divf %138, %139 : vector<32x1xf32>
    %cst_56 = arith.constant 9.99999974E-6 : f32
    %141 = vector.broadcast %cst_56 : f32 to vector<32x1xf32>
    %142 = arith.addf %140, %141 : vector<32x1xf32>
    %143 = math.rsqrt %142 : vector<32x1xf32>
    %144 = vector.broadcast %143 : vector<32x1xf32> to vector<32x32xf32>
    %145 = arith.mulf %135, %144 : vector<32x32xf32>
    %146 = vector.broadcast %128 : vector<1x32xf32> to vector<32x32xf32>
    %147 = arith.mulf %145, %146 : vector<32x32xf32>
    %148 = vector.broadcast %129 : vector<1x32xf32> to vector<32x32xf32>
    %149 = arith.addf %147, %148 : vector<32x32xf32>
    %150 = vector.shape_cast %149 : vector<32x32xf32> to vector<4x8x32xf32>
    %c0_57 = arith.constant 0 : index
    %c0_58 = arith.constant 0 : index
    %c0_59 = arith.constant 0 : index
    %151 = vector.load %arg17[%c0_57, %c0_58, %c0_59] : memref<4x8x32xf32, #tpu.memory_space<vmem>>, vector<4x8x32xf32>
    tpu.vector_store %arg17[%c0_57, %c0_58, %c0_59], %150 {strides = array<i32>} : memref<4x8x32xf32, #tpu.memory_space<vmem>>, vector<4x8x32xf32>,
    return
  }
  func.func @transform_0(%arg0: i32) -> (i32, i32, i32) {
    %c0_i32 = arith.constant 0 : i32
    %c0_i32_0 = arith.constant 0 : i32
    %c0_i32_1 = arith.constant 0 : i32
    return %arg0, %c0_i32, %c0_i32_0 : i32, i32, i32
  }
  func.func @transform_1(%arg0: i32) -> (i32, i32, i32) {
    %c0_i32 = arith.constant 0 : i32
    %c0_i32_0 = arith.constant 0 : i32
    %c0_i32_1 = arith.constant 0 : i32
    return %arg0, %c0_i32, %c0_i32_0 : i32, i32, i32
  }
  func.func @transform_2(%arg0: i32) -> (i32, i32) {
    %c0_i32 = arith.constant 0 : i32
    %c0_i32_0 = arith.constant 0 : i32
    %c0_i32_1 = arith.constant 0 : i32
    return %c0_i32, %c0_i32_0 : i32, i32
  }
  func.func @transform_3(%arg0: i32) -> (i32, i32) {
    %c0_i32 = arith.constant 0 : i32
    %c0_i32_0 = arith.constant 0 : i32
    %c0_i32_1 = arith.constant 0 : i32
    return %c0_i32, %c0_i32_0 : i32, i32
  }
  func.func @transform_4(%arg0: i32) -> (i32, i32) {
    %c0_i32 = arith.constant 0 : i32
    %c0_i32_0 = arith.constant 0 : i32
    %c0_i32_1 = arith.constant 0 : i32
    return %c0_i32, %c0_i32_0 : i32, i32
  }
  func.func @transform_5(%arg0: i32) -> (i32, i32) {
    %c0_i32 = arith.constant 0 : i32
    %c0_i32_0 = arith.constant 0 : i32
    %c0_i32_1 = arith.constant 0 : i32
    return %c0_i32, %c0_i32_0 : i32, i32
  }
  func.func @transform_6(%arg0: i32) -> (i32, i32) {
    %c0_i32 = arith.constant 0 : i32
    %c0_i32_0 = arith.constant 0 : i32
    %c0_i32_1 = arith.constant 0 : i32
    return %c0_i32, %c0_i32_0 : i32, i32
  }
  func.func @transform_7(%arg0: i32) -> (i32, i32) {
    %c0_i32 = arith.constant 0 : i32
    %c0_i32_0 = arith.constant 0 : i32
    %c0_i32_1 = arith.constant 0 : i32
    return %c0_i32, %c0_i32_0 : i32, i32
  }
  func.func @transform_8(%arg0: i32) -> (i32, i32) {
    %c0_i32 = arith.constant 0 : i32
    %c0_i32_0 = arith.constant 0 : i32
    %c0_i32_1 = arith.constant 0 : i32
    return %c0_i32, %c0_i32_0 : i32, i32
  }
  func.func @transform_9(%arg0: i32) -> (i32, i32) {
    %c0_i32 = arith.constant 0 : i32
    %c0_i32_0 = arith.constant 0 : i32
    %c0_i32_1 = arith.constant 0 : i32
    return %c0_i32, %c0_i32_0 : i32, i32
  }
  func.func @transform_10(%arg0: i32) -> (i32, i32) {
    %c0_i32 = arith.constant 0 : i32
    %c0_i32_0 = arith.constant 0 : i32
    %c0_i32_1 = arith.constant 0 : i32
    return %c0_i32, %c0_i32_0 : i32, i32
  }
  func.func @transform_11(%arg0: i32) -> (i32, i32) {
    %c0_i32 = arith.constant 0 : i32
    %c0_i32_0 = arith.constant 0 : i32
    %c0_i32_1 = arith.constant 0 : i32
    return %c0_i32, %c0_i32_0 : i32, i32
  }
  func.func @transform_12(%arg0: i32) -> (i32, i32) {
    %c0_i32 = arith.constant 0 : i32
    %c0_i32_0 = arith.constant 0 : i32
    %c0_i32_1 = arith.constant 0 : i32
    return %c0_i32, %c0_i32_0 : i32, i32
  }
  func.func @transform_13(%arg0: i32) -> (i32, i32) {
    %c0_i32 = arith.constant 0 : i32
    %c0_i32_0 = arith.constant 0 : i32
    %c0_i32_1 = arith.constant 0 : i32
    return %c0_i32, %c0_i32_0 : i32, i32
  }
  func.func @transform_14(%arg0: i32) -> (i32, i32) {
    %c0_i32 = arith.constant 0 : i32
    %c0_i32_0 = arith.constant 0 : i32
    %c0_i32_1 = arith.constant 0 : i32
    return %c0_i32, %c0_i32_0 : i32, i32
  }
  func.func @transform_15(%arg0: i32) -> (i32, i32) {
    %c0_i32 = arith.constant 0 : i32
    %c0_i32_0 = arith.constant 0 : i32
    %c0_i32_1 = arith.constant 0 : i32
    return %c0_i32, %c0_i32_0 : i32, i32
  }
  func.func @transform_16(%arg0: i32) -> (i32, i32, i32) {
    %c0_i32 = arith.constant 0 : i32
    %c0_i32_0 = arith.constant 0 : i32
    %c0_i32_1 = arith.constant 0 : i32
    return %arg0, %c0_i32, %c0_i32_0 : i32, i32, i32
  }
  func.func @transform_17(%arg0: i32) -> (i32, i32, i32) {
    %c0_i32 = arith.constant 0 : i32
    %c0_i32_0 = arith.constant 0 : i32
    %c0_i32_1 = arith.constant 0 : i32
    return %arg0, %c0_i32, %c0_i32_0 : i32, i32, i32
  }
}

</mosaic_0001>

<llo_original>
// kernel: tpu_custom_call.1
$region0: #{tpu_custom_call.1}
  #allocation0 [shape = 'u32[]', space=smem, size = 0x4, offset = 0x4, fixed_abs, tag = 'smem constant byte address 0x4 - core index']
  #allocation1 [shape = 'u32[144,128]{1,0:T(1,128)}', space=vmem, size = 0x12000, scoped, tag = 'internal scratch']
  %s0 = inlined_call_operand.hbm [shape: f32[4,8,32], index: 0, kind: input, shape index: {}]
  %s1 = inlined_call_operand.hbm [shape: f32[4,8,64], index: 1, kind: input, shape index: {}]
  %s2 = inlined_call_operand.hbm [shape: bf16[64,256], index: 2, kind: input, shape index: {}]
  %s3 = inlined_call_operand.hbm [shape: f32[1,256], index: 3, kind: input, shape index: {}]
  %s4 = inlined_call_operand.hbm [shape: bf16[32,128], index: 4, kind: input, shape index: {}]
  %s5 = inlined_call_operand.hbm [shape: f32[1,128], index: 5, kind: input, shape index: {}]
  %s6 = inlined_call_operand.hbm [shape: bf16[128,32], index: 6, kind: input, shape index: {}]
  %s7 = inlined_call_operand.hbm [shape: f32[1,32], index: 7, kind: input, shape index: {}]
  %s8 = inlined_call_operand.hbm [shape: f32[1,32], index: 8, kind: input, shape index: {}]
  %s9 = inlined_call_operand.hbm [shape: f32[1,32], index: 9, kind: input, shape index: {}]
  %s10 = inlined_call_operand.hbm [shape: bf16[32,64], index: 10, kind: input, shape index: {}]
  %s11 = inlined_call_operand.hbm [shape: f32[1,64], index: 11, kind: input, shape index: {}]
  %s12 = inlined_call_operand.hbm [shape: bf16[64,32], index: 12, kind: input, shape index: {}]
  %s13 = inlined_call_operand.hbm [shape: f32[1,32], index: 13, kind: input, shape index: {}]
  %s14 = inlined_call_operand.hbm [shape: f32[1,32], index: 14, kind: input, shape index: {}]
  %s15 = inlined_call_operand.hbm [shape: f32[1,32], index: 15, kind: input, shape index: {}]
  %s16 = inlined_call_operand.hbm [shape: f32[4,8,32], index: 16, kind: output, shape index: {0}]
  %s17 = inlined_call_operand.hbm [shape: f32[16,8,8], index: 17, kind: output, shape index: {1}]
  %18 = xla_tuple %s16, %s17
  %s19 = sld [smem:[#allocation0]]
  $region146: #{tpu_custom_call.1} parent=0
    _
  %s21 = ssub.s32 1, %s19
  %s22 = scalar_select 0, %s21, %s19
  $region1: #{tpu_custom_call.1} parent=0
    #allocation2 [shape = 'u8[16384]{0}', space=vmem, size = 0x4000, scoped, tag = 'input window, operand 0, single buffered']
    #allocation3 [shape = 's32[1]{0}', space=sflag, size = 0x4, scoped, tag = 'scoped memory for tpu_custom_call.1']
    #allocation4 [shape = 's32[1]{0}', space=sflag, size = 0x4, scoped, tag = 'scoped memory for tpu_custom_call.1']
    #allocation5 [shape = 'u8[16384]{0}', space=vmem, size = 0x4000, scoped, tag = 'input window, operand 1, single buffered']
    #allocation6 [shape = 's32[1]{0}', space=sflag, size = 0x4, scoped, tag = 'scoped memory for tpu_custom_call.1']
    #allocation7 [shape = 'u8[32768]{0}', space=vmem, size = 0x8000, scoped, tag = 'input window, operand 2, single buffered']
    #allocation8 [shape = 'u8[1024]{0}', space=vmem, size = 0x400, scoped, tag = 'input window, operand 3, single buffered']
    #allocation9 [shape = 's32[1]{0}', space=sflag, size = 0x4, scoped, tag = 'scoped memory for tpu_custom_call.1']
    #allocation10 [shape = 'u8[8192]{0}', space=vmem, size = 0x2000, scoped, tag = 'input window, operand 4, single buffered']
    #allocation11 [shape = 'u8[512]{0}', space=vmem, size = 0x400, scoped, tag = 'input window, operand 5, single buffered']
    #allocation12 [shape = 's32[1]{0}', space=sflag, size = 0x4, scoped, tag = 'scoped memory for tpu_custom_call.1']
    #allocation13 [shape = 'u8[32768]{0}', space=vmem, size = 0x8000, scoped, tag = 'input window, operand 6, single buffered']
    #allocation14 [shape = 'u8[512]{0}', space=vmem, size = 0x400, scoped, tag = 'input window, operand 7, single buffered']
    #allocation15 [shape = 's32[1]{0}', space=sflag, size = 0x4, scoped, tag = 'scoped memory for tpu_custom_call.1']
    #allocation16 [shape = 'u8[512]{0}', space=vmem, size = 0x400, scoped, tag = 'input window, operand 8, single buffered']
    #allocation17 [shape = 'u8[512]{0}', space=vmem, size = 0x400, scoped, tag = 'input window, operand 9, single buffered']
    #allocation18 [shape = 's32[1]{0}', space=sflag, size = 0x4, scoped, tag = 'scoped memory for tpu_custom_call.1']
    #allocation19 [shape = 'u8[8192]{0}', space=vmem, size = 0x2000, scoped, tag = 'input window, operand 10, single buffered']
    #allocation20 [shape = 'u8[512]{0}', space=vmem, size = 0x400, scoped, tag = 'input window, operand 11, single buffered']
    #allocation21 [shape = 's32[1]{0}', space=sflag, size = 0x4, scoped, tag = 'scoped memory for tpu_custom_call.1']
    #allocation22 [shape = 'u8[16384]{0}', space=vmem, size = 0x4000, scoped, tag = 'input window, operand 12, single buffered']
    #allocation23 [shape = 'u8[512]{0}', space=vmem, size = 0x400, scoped, tag = 'input window, operand 13, single buffered']
    #allocation24 [shape = 's32[1]{0}', space=sflag, size = 0x4, scoped, tag = 'scoped memory for tpu_custom_call.1']
    #allocation25 [shape = 'u8[512]{0}', space=vmem, size = 0x400, scoped, tag = 'input window, operand 14, single buffered']
    #allocation26 [shape = 'u8[512]{0}', space=vmem, size = 0x400, scoped, tag = 'input window, operand 15, single buffered']
    #allocation27 [shape = 's32[1]{0}', space=sflag, size = 0x4, scoped, tag = 'scoped memory for tpu_custom_call.1']
    #allocation28 [shape = 'u8[16384]{0}', space=vmem, size = 0x4000, scoped, tag = 'output window, operand 0, single buffered']
    #allocation29 [shape = 'u8[65536]{0}', space=vmem, size = 0x10000, scoped, tag = 'output window, operand 1, single buffered']
    #allocation30 [shape = 's32[1]{0}', space=sflag, size = 0x4, scoped, tag = 'scoped memory for tpu_custom_call.1']
    %23 = vsyncpa [#allocation3], 0
    %24 = vsyncpa [#allocation6], 0
    %25 = vsyncpa [#allocation9], 0
    %26 = vsyncpa [#allocation12], 0
    %27 = vsyncpa [#allocation15], 0
    %28 = vsyncpa [#allocation18], 0
    %29 = vsyncpa [#allocation21], 0
    %30 = vsyncpa [#allocation24], 0
    %31 = vsyncpa [#allocation27], 0
    %32 = vsyncpa [#allocation4], 0
    %33 = vsyncpa [#allocation30], 0
    // Predicated region
    $region2: #{tpu_custom_call.1} parent=1 // pred_check
      _
    $region3: #{tpu_custom_call.1} parent=1 // pred_check_branch
      %35 = sbr.rel (0) target = $region5
    $region4: #{tpu_custom_call.1} parent=1 // pred_region
      %s37 = ssub.s32 512, 512
      %38 = vsyncadd [#allocation3], %s37
      %s39 = sshll.u32 [#allocation2], 4
      %s40 = int_to_ptr.vmem [resolvable:$true] %s39
      %45 = dma.hbm_to_vmem [thread:$0]  %s0, 512, %s40, [#allocation3], 128, 128, 8
    $region5: #{tpu_custom_call.1} parent=1 // pred_fallthru
      _
    // Predicated region
    $region6: #{tpu_custom_call.1} parent=1 // pred_check
      _
    $region7: #{tpu_custom_call.1} parent=1 // pred_check_branch
      %47 = sbr.rel (0) target = $region9
    $region8: #{tpu_custom_call.1} parent=1 // pred_region
      %s49 = ssub.s32 512, 512
      %50 = vsyncadd [#allocation6], %s49
      %s51 = sshll.u32 [#allocation5], 4
      %s52 = int_to_ptr.vmem [resolvable:$true] %s51
      %57 = dma.hbm_to_vmem [thread:$0]  %s1, 512, %s52, [#allocation6], 128, 128, 8
    $region9: #{tpu_custom_call.1} parent=1 // pred_fallthru
      _
    // Predicated region
    $region10: #{tpu_custom_call.1} parent=1 // pred_check
      _
    $region11: #{tpu_custom_call.1} parent=1 // pred_check_branch
      %59 = sbr.rel (0) target = $region13
    $region12: #{tpu_custom_call.1} parent=1 // pred_region
      %s61 = ssub.s32 1024, 1024
      %62 = vsyncadd [#allocation6], %s61
      %s63 = sshll.u32 [#allocation7], 4
      %s64 = int_to_ptr.vmem [resolvable:$true] %s63
      %69 = dma.hbm_to_vmem [thread:$0]  %s2, 1024, %s64, [#allocation6], 128, 128, 8
    $region13: #{tpu_custom_call.1} parent=1 // pred_fallthru
      _
    // Predicated region
    $region14: #{tpu_custom_call.1} parent=1 // pred_check
      _
    $region15: #{tpu_custom_call.1} parent=1 // pred_check_branch
      %71 = sbr.rel (0) target = $region17
    $region16: #{tpu_custom_call.1} parent=1 // pred_region
      %s73 = ssub.s32 32, 32
      %74 = vsyncadd [#allocation9], %s73
      %s76 = sshll.u32 [#allocation8], 4
      %s77 = int_to_ptr.vmem [resolvable:$true] %s76
      %79 = dma.hbm_to_vmem [thread:$0]  %s3, 32, %s77, [#allocation9]
    $region17: #{tpu_custom_call.1} parent=1 // pred_fallthru
      _
    // Predicated region
    $region18: #{tpu_custom_call.1} parent=1 // pred_check
      _
    $region19: #{tpu_custom_call.1} parent=1 // pred_check_branch
      %81 = sbr.rel (0) target = $region21
    $region20: #{tpu_custom_call.1} parent=1 // pred_region
      %s83 = ssub.s32 256, 256
      %84 = vsyncadd [#allocation9], %s83
      %s85 = sshll.u32 [#allocation10], 4
      %s86 = int_to_ptr.vmem [resolvable:$true] %s85
      %91 = dma.hbm_to_vmem [thread:$0]  %s4, 256, %s86, [#allocation9], 64, 64, 4
    $region21: #{tpu_custom_call.1} parent=1 // pred_fallthru
      _
    // Predicated region
    $region22: #{tpu_custom_call.1} parent=1 // pred_check
      _
    $region23: #{tpu_custom_call.1} parent=1 // pred_check_branch
      %93 = sbr.rel (0) target = $region25
    $region24: #{tpu_custom_call.1} parent=1 // pred_region
      %s95 = ssub.s32 16, 16
      %96 = vsyncadd [#allocation12], %s95
      %s98 = sshll.u32 [#allocation11], 4
      %s99 = int_to_ptr.vmem [resolvable:$true] %s98
      %101 = dma.hbm_to_vmem [thread:$0]  %s5, 16, %s99, [#allocation12]
    $region25: #{tpu_custom_call.1} parent=1 // pred_fallthru
      _
    // Predicated region
    $region26: #{tpu_custom_call.1} parent=1 // pred_check
      _
    $region27: #{tpu_custom_call.1} parent=1 // pred_check_branch
      %103 = sbr.rel (0) target = $region29
    $region28: #{tpu_custom_call.1} parent=1 // pred_region
      %s105 = ssub.s32 1024, 1024
      %106 = vsyncadd [#allocation12], %s105
      %s107 = sshll.u32 [#allocation13], 4
      %s108 = int_to_ptr.vmem [resolvable:$true] %s107
      %113 = dma.hbm_to_vmem [thread:$0]  %s6, 1024, %s108, [#allocation12], 64, 64, 4
    $region29: #{tpu_custom_call.1} parent=1 // pred_fallthru
      _
    // Predicated region
    $region30: #{tpu_custom_call.1} parent=1 // pred_check
      _
    $region31: #{tpu_custom_call.1} parent=1 // pred_check_branch
      %115 = sbr.rel (0) target = $region33
    $region32: #{tpu_custom_call.1} parent=1 // pred_region
      %s117 = ssub.s32 16, 16
      %118 = vsyncadd [#allocation15], %s117
      %s120 = sshll.u32 [#allocation14], 4
      %s121 = int_to_ptr.vmem [resolvable:$true] %s120
      %123 = dma.hbm_to_vmem [thread:$0]  %s7, 16, %s121, [#allocation15]
    $region33: #{tpu_custom_call.1} parent=1 // pred_fallthru
      _
    // Predicated region
    $region34: #{tpu_custom_call.1} parent=1 // pred_check
      _
    $region35: #{tpu_custom_call.1} parent=1 // pred_check_branch
      %125 = sbr.rel (0) target = $region37
    $region36: #{tpu_custom_call.1} parent=1 // pred_region
      %s127 = ssub.s32 16, 16
      %128 = vsyncadd [#allocation15], %s127
      %s130 = sshll.u32 [#allocation16], 4
      %s131 = int_to_ptr.vmem [resolvable:$true] %s130
      %133 = dma.hbm_to_vmem [thread:$0]  %s8, 16, %s131, [#allocation15]
    $region37: #{tpu_custom_call.1} parent=1 // pred_fallthru
      _
    // Predicated region
    $region38: #{tpu_custom_call.1} parent=1 // pred_check
      _
    $region39: #{tpu_custom_call.1} parent=1 // pred_check_branch
      %135 = sbr.rel (0) target = $region41
    $region40: #{tpu_custom_call.1} parent=1 // pred_region
      %s137 = ssub.s32 16, 16
      %138 = vsyncadd [#allocation18], %s137
      %s140 = sshll.u32 [#allocation17], 4
      %s141 = int_to_ptr.vmem [resolvable:$true] %s140
      %143 = dma.hbm_to_vmem [thread:$0]  %s9, 16, %s141, [#allocation18]
    $region41: #{tpu_custom_call.1} parent=1 // pred_fallthru
      _
    // Predicated region
    $region42: #{tpu_custom_call.1} parent=1 // pred_check
      _
    $region43: #{tpu_custom_call.1} parent=1 // pred_check_branch
      %145 = sbr.rel (0) target = $region45
    $region44: #{tpu_custom_call.1} parent=1 // pred_region
      %s147 = ssub.s32 256, 256
      %148 = vsyncadd [#allocation18], %s147
      %s149 = sshll.u32 [#allocation19], 4
      %s150 = int_to_ptr.vmem [resolvable:$true] %s149
      %155 = dma.hbm_to_vmem [thread:$0]  %s10, 256, %s150, [#allocation18], 64, 64, 4
    $region45: #{tpu_custom_call.1} parent=1 // pred_fallthru
      _
    // Predicated region
    $region46: #{tpu_custom_call.1} parent=1 // pred_check
      _
    $region47: #{tpu_custom_call.1} parent=1 // pred_check_branch
      %157 = sbr.rel (0) target = $region49
    $region48: #{tpu_custom_call.1} parent=1 // pred_region
      %s159 = ssub.s32 16, 16
      %160 = vsyncadd [#allocation21], %s159
      %s162 = sshll.u32 [#allocation20], 4
      %s163 = int_to_ptr.vmem [resolvable:$true] %s162
      %165 = dma.hbm_to_vmem [thread:$0]  %s11, 16, %s163, [#allocation21]
    $region49: #{tpu_custom_call.1} parent=1 // pred_fallthru
      _
    // Predicated region
    $region50: #{tpu_custom_call.1} parent=1 // pred_check
      _
    $region51: #{tpu_custom_call.1} parent=1 // pred_check_branch
      %167 = sbr.rel (0) target = $region53
    $region52: #{tpu_custom_call.1} parent=1 // pred_region
      %s169 = ssub.s32 512, 512
      %170 = vsyncadd [#allocation21], %s169
      %s171 = sshll.u32 [#allocation22], 4
      %s172 = int_to_ptr.vmem [resolvable:$true] %s171
      %177 = dma.hbm_to_vmem [thread:$0]  %s12, 512, %s172, [#allocation21], 64, 64, 4
    $region53: #{tpu_custom_call.1} parent=1 // pred_fallthru
      _
    // Predicated region
    $region54: #{tpu_custom_call.1} parent=1 // pred_check
      _
    $region55: #{tpu_custom_call.1} parent=1 // pred_check_branch
      %179 = sbr.rel (0) target = $region57
    $region56: #{tpu_custom_call.1} parent=1 // pred_region
      %s181 = ssub.s32 16, 16
      %182 = vsyncadd [#allocation24], %s181
      %s184 = sshll.u32 [#allocation23], 4
      %s185 = int_to_ptr.vmem [resolvable:$true] %s184
      %187 = dma.hbm_to_vmem [thread:$0]  %s13, 16, %s185, [#allocation24]
    $region57: #{tpu_custom_call.1} parent=1 // pred_fallthru
      _
    // Predicated region
    $region58: #{tpu_custom_call.1} parent=1 // pred_check
      _
    $region59: #{tpu_custom_call.1} parent=1 // pred_check_branch
      %189 = sbr.rel (0) target = $region61
    $region60: #{tpu_custom_call.1} parent=1 // pred_region
      %s191 = ssub.s32 16, 16
      %192 = vsyncadd [#allocation24], %s191
      %s194 = sshll.u32 [#allocation25], 4
      %s195 = int_to_ptr.vmem [resolvable:$true] %s194
      %197 = dma.hbm_to_vmem [thread:$0]  %s14, 16, %s195, [#allocation24]
    $region61: #{tpu_custom_call.1} parent=1 // pred_fallthru
      _
    // Predicated region
    $region62: #{tpu_custom_call.1} parent=1 // pred_check
      _
    $region63: #{tpu_custom_call.1} parent=1 // pred_check_branch
      %199 = sbr.rel (0) target = $region65
    $region64: #{tpu_custom_call.1} parent=1 // pred_region
      %s201 = ssub.s32 16, 16
      %202 = vsyncadd [#allocation27], %s201
      %s204 = sshll.u32 [#allocation26], 4
      %s205 = int_to_ptr.vmem [resolvable:$true] %s204
      %207 = dma.hbm_to_vmem [thread:$0]  %s15, 16, %s205, [#allocation27]
    $region65: #{tpu_custom_call.1} parent=1 // pred_fallthru
      _
    // Predicated region
    $region66: #{tpu_custom_call.1} parent=1 // pred_check
      _
    $region67: #{tpu_custom_call.1} parent=1 // pred_check_branch
      %209 = sbr.rel (0) target = $region69
    $region68: #{tpu_custom_call.1} parent=1 // pred_region
      %210 = dma.done [#allocation3], 512
    $region69: #{tpu_custom_call.1} parent=1 // pred_fallthru
      _
    // Predicated region
    $region70: #{tpu_custom_call.1} parent=1 // pred_check
      _
    $region71: #{tpu_custom_call.1} parent=1 // pred_check_branch
      %212 = sbr.rel (0) target = $region73
    $region72: #{tpu_custom_call.1} parent=1 // pred_region
      %213 = dma.done [#allocation6], 512
    $region73: #{tpu_custom_call.1} parent=1 // pred_fallthru
      _
    // Predicated region
    $region74: #{tpu_custom_call.1} parent=1 // pred_check
      _
    $region75: #{tpu_custom_call.1} parent=1 // pred_check_branch
      %215 = sbr.rel (0) target = $region77
    $region76: #{tpu_custom_call.1} parent=1 // pred_region
      %216 = dma.done [#allocation6], 1024
    $region77: #{tpu_custom_call.1} parent=1 // pred_fallthru
      _
    // Predicated region
    $region78: #{tpu_custom_call.1} parent=1 // pred_check
      _
    $region79: #{tpu_custom_call.1} parent=1 // pred_check_branch
      %218 = sbr.rel (0) target = $region81
    $region80: #{tpu_custom_call.1} parent=1 // pred_region
      %219 = dma.done [#allocation9], 32
    $region81: #{tpu_custom_call.1} parent=1 // pred_fallthru
      _
    // Predicated region
    $region82: #{tpu_custom_call.1} parent=1 // pred_check
      _
    $region83: #{tpu_custom_call.1} parent=1 // pred_check_branch
      %221 = sbr.rel (0) target = $region85
    $region84: #{tpu_custom_call.1} parent=1 // pred_region
      %222 = dma.done [#allocation9], 256
    $region85: #{tpu_custom_call.1} parent=1 // pred_fallthru
      _
    // Predicated region
    $region86: #{tpu_custom_call.1} parent=1 // pred_check
      _
    $region87: #{tpu_custom_call.1} parent=1 // pred_check_branch
      %224 = sbr.rel (0) target = $region89
    $region88: #{tpu_custom_call.1} parent=1 // pred_region
      %225 = dma.done [#allocation12], 16
    $region89: #{tpu_custom_call.1} parent=1 // pred_fallthru
      _
    // Predicated region
    $region90: #{tpu_custom_call.1} parent=1 // pred_check
      _
    $region91: #{tpu_custom_call.1} parent=1 // pred_check_branch
      %227 = sbr.rel (0) target = $region93
    $region92: #{tpu_custom_call.1} parent=1 // pred_region
      %228 = dma.done [#allocation12], 1024
    $region93: #{tpu_custom_call.1} parent=1 // pred_fallthru
      _
    // Predicated region
    $region94: #{tpu_custom_call.1} parent=1 // pred_check
      _
    $region95: #{tpu_custom_call.1} parent=1 // pred_check_branch
      %230 = sbr.rel (0) target = $region97
    $region96: #{tpu_custom_call.1} parent=1 // pred_region
      %231 = dma.done [#allocation15], 16
    $region97: #{tpu_custom_call.1} parent=1 // pred_fallthru
      _
    // Predicated region
    $region98: #{tpu_custom_call.1} parent=1 // pred_check
      _
    $region99: #{tpu_custom_call.1} parent=1 // pred_check_branch
      %233 = sbr.rel (0) target = $region101
    $region100: #{tpu_custom_call.1} parent=1 // pred_region
      %234 = dma.done [#allocation15], 16
    $region101: #{tpu_custom_call.1} parent=1 // pred_fallthru
      _
    // Predicated region
    $region102: #{tpu_custom_call.1} parent=1 // pred_check
      _
    $region103: #{tpu_custom_call.1} parent=1 // pred_check_branch
      %236 = sbr.rel (0) target = $region105
    $region104: #{tpu_custom_call.1} parent=1 // pred_region
      %237 = dma.done [#allocation18], 16
    $region105: #{tpu_custom_call.1} parent=1 // pred_fallthru
      _
    // Predicated region
    $region106: #{tpu_custom_call.1} parent=1 // pred_check
      _
    $region107: #{tpu_custom_call.1} parent=1 // pred_check_branch
      %239 = sbr.rel (0) target = $region109
    $region108: #{tpu_custom_call.1} parent=1 // pred_region
      %240 = dma.done [#allocation18], 256
    $region109: #{tpu_custom_call.1} parent=1 // pred_fallthru
      _
    // Predicated region
    $region110: #{tpu_custom_call.1} parent=1 // pred_check
      _
    $region111: #{tpu_custom_call.1} parent=1 // pred_check_branch
      %242 = sbr.rel (0) target = $region113
    $region112: #{tpu_custom_call.1} parent=1 // pred_region
      %243 = dma.done [#allocation21], 16
    $region113: #{tpu_custom_call.1} parent=1 // pred_fallthru
      _
    // Predicated region
    $region114: #{tpu_custom_call.1} parent=1 // pred_check
      _
    $region115: #{tpu_custom_call.1} parent=1 // pred_check_branch
      %245 = sbr.rel (0) target = $region117
    $region116: #{tpu_custom_call.1} parent=1 // pred_region
      %246 = dma.done [#allocation21], 512
    $region117: #{tpu_custom_call.1} parent=1 // pred_fallthru
      _
    // Predicated region
    $region118: #{tpu_custom_call.1} parent=1 // pred_check
      _
    $region119: #{tpu_custom_call.1} parent=1 // pred_check_branch
      %248 = sbr.rel (0) target = $region121
    $region120: #{tpu_custom_call.1} parent=1 // pred_region
      %249 = dma.done [#allocation24], 16
    $region121: #{tpu_custom_call.1} parent=1 // pred_fallthru
      _
    // Predicated region
    $region122: #{tpu_custom_call.1} parent=1 // pred_check
      _
    $region123: #{tpu_custom_call.1} parent=1 // pred_check_branch
      %251 = sbr.rel (0) target = $region125
    $region124: #{tpu_custom_call.1} parent=1 // pred_region
      %252 = dma.done [#allocation24], 16
    $region125: #{tpu_custom_call.1} parent=1 // pred_fallthru
      _
    // Predicated region
    $region126: #{tpu_custom_call.1} parent=1 // pred_check
      _
    $region127: #{tpu_custom_call.1} parent=1 // pred_check_branch
      %254 = sbr.rel (0) target = $region129
    $region128: #{tpu_custom_call.1} parent=1 // pred_region
      %255 = dma.done [#allocation27], 16
    $region129: #{tpu_custom_call.1} parent=1 // pred_fallthru
      _
    %v257 = vld [vmem:[#allocation2] sm:$0xff]
    %v258 = vld [vmem:[#allocation2 + $0x8] sm:$0xff]
    %v259 = vld [vmem:[#allocation2 + $0x10] sm:$0xff]
    %v260 = vld [vmem:[#allocation2 + $0x18] sm:$0xff]
    %v261 = vld [vmem:[#allocation5] sm:$0xff]
    %v262 = vld [vmem:[#allocation5 + $0x8] sm:$0xff]
    %v263 = vld [vmem:[#allocation5 + $0x10] sm:$0xff]
    %v264 = vld [vmem:[#allocation5 + $0x18] sm:$0xff]
    %v265 = vpack.c.bf16 %v262, %v261
    %v266 = vpack.c.bf16 %v264, %v263
    %v267 = vld [vmem:[#allocation7] sm:$0xff]
    %v268 = vld [vmem:[#allocation7 + $0x8] sm:$0xff]
    %v269 = vld [vmem:[#allocation7 + $0x10] sm:$0xff]
    %v270 = vld [vmem:[#allocation7 + $0x18] sm:$0xff]
    %v271 = vld [vmem:[#allocation7 + $0x20] sm:$0xff]
    %v272 = vld [vmem:[#allocation7 + $0x28] sm:$0xff]
    %v273 = vld [vmem:[#allocation7 + $0x30] sm:$0xff]
    %v274 = vld [vmem:[#allocation7 + $0x38] sm:$0xff]
    %v275 = vld [vmem:[#allocation8] sm:$0x3]
    %v277 = vlaneseq
    %v278 = vshrl.u32 %v277, 7
    %v279 = vsub.s32 0, %v278
    %v280 = vrot.slane %v275, %v279
    %v281 = vlaneseq
    %v282 = vshrl.u32 %v281, 7
    %v283 = vsub.s32 1, %v282
    %v284 = vrot.slane %v275, %v283
    %v295 = vunpack.c.l.b16 %v267
    %v296 = vunpack.c.h.b16 %v267
    %v297 = vunpack.c.l.b16 %v268
    %v298 = vunpack.c.h.b16 %v268
    %v299 = vunpack.c.l.b16 %v269
    %v300 = vunpack.c.h.b16 %v269
    %v301 = vunpack.c.l.b16 %v270
    %v302 = vunpack.c.h.b16 %v270
    %v303 = vunpack.c.l.b16 %v271
    %v304 = vunpack.c.h.b16 %v271
    %v305 = vunpack.c.l.b16 %v272
    %v306 = vunpack.c.h.b16 %v272
    %v307 = vunpack.c.l.b16 %v273
    %v308 = vunpack.c.h.b16 %v273
    %v309 = vunpack.c.l.b16 %v274
    %v310 = vunpack.c.h.b16 %v274
    %v311 = vpack.c.b16 %v297, %v295
    %v312 = vpack.c.b16 %v298, %v296
    %v313 = vpack.c.b16 %v301, %v299
    %v314 = vpack.c.b16 %v302, %v300
    %v315 = vpack.c.b16 %v305, %v303
    %v316 = vpack.c.b16 %v306, %v304
    %v317 = vpack.c.b16 %v309, %v307
    %v318 = vpack.c.b16 %v310, %v308
    %vm327 = vcmask 523264
    %v329 = vsel %vm327, %v265, 0
    %v332 = vsel %vm327, %v266, 0
    %334 = vmatprep.subr.bf16.mxu0 %v312
    %335 = vmatpush1.bf16.msra.mxu0 %v311
    %336 = vmatprep.subr.bf16.mxu0 %v314
    %337 = vmatpush1.bf16.msra.mxu0 %v313
    %338 = vmatprep.subr.bf16.mxu0 %v316
    %339 = vmatpush1.bf16.msra.mxu0 %v315
    %340 = vmatprep.subr.bf16.mxu0 %v318
    %341 = vmatpush1.bf16.msra.mxu0 %v317
    %342 = vmatprep.subr.bf16.mxu0 0
    %343 = vmatpush1.bf16.msra.mxu0 0
    %344 = vmatprep.subr.bf16.mxu0 0
    %345 = vmatpush1.bf16.msra.mxu0 0
    %346 = vmatprep.subr.bf16.mxu0 0
    %347 = vmatpush1.bf16.msra.mxu0 0
    %348 = vmatprep.subr.bf16.mxu0 0
    %349 = vmatpush1.bf16.msra.mxu0 0
    %350 = vmatprep.subr.bf16.mxu0 0
    %351 = vmatpush1.bf16.msra.mxu0 0
    %352 = vmatprep.subr.bf16.mxu0 0
    %353 = vmatpush1.bf16.msra.mxu0 0
    %354 = vmatprep.subr.bf16.mxu0 0
    %355 = vmatpush1.bf16.msra.mxu0 0
    %356 = vmatprep.subr.bf16.mxu0 0
    %357 = vmatpush1.bf16.msra.mxu0 0
    %358 = vmatprep.subr.bf16.mxu0 0
    %359 = vmatpush1.bf16.msra.mxu0 0
    %360 = vmatprep.subr.bf16.mxu0 0
    %361 = vmatpush1.bf16.msra.mxu0 0
    %362 = vmatprep.subr.bf16.mxu0 0
    %363 = vmatpush1.bf16.msra.mxu0 0
    %364 = vmatprep.subr.bf16.mxu0 0
    %365 = vmatpush1.bf16.msra.mxu0 0
    %366 = vmatprep.mubr.bf16.mxu0 0
    %367 = vmatmul.mubr.bf16.gmra.mrb[0].mxu0 %v329
    %v368 = vpop.f32.mrb[0].mxu0
    %v369 = vadd.f32 %v280, %v368
    %v370 = vpop.f32.mrb[0].mxu0
    %v371 = vadd.f32 %v284, %v370
    %v372 = vpop.f32.mrb[0].mxu0
    %v373 = vadd.f32 %v280, %v372
    %v374 = vpop.f32.mrb[0].mxu0
    %v375 = vadd.f32 %v284, %v374
    %376 = vmatprep.mubr.bf16.mxu0 0
    %377 = vmatmul.mubr.bf16.gmra.mrb[0].mxu0 %v332
    %v378 = vpop.f32.mrb[0].mxu0
    %v379 = vadd.f32 %v280, %v378
    %v380 = vpop.f32.mrb[0].mxu0
    %v381 = vadd.f32 %v284, %v380
    %v382 = vpop.f32.mrb[0].mxu0
    %v383 = vadd.f32 %v280, %v382
    %v384 = vpop.f32.mrb[0].mxu0
    %v385 = vadd.f32 %v284, %v384
    %386 = vdwg.mxu0
    %v387 = vpack.c.bf16 %v258, %v257
    %v388 = vpack.c.bf16 %v260, %v259
    %v389 = vld [vmem:[#allocation10] sm:$0xf]
    %v390 = vld [vmem:[#allocation10 + $0x4] sm:$0xf]
    %v391 = vld [vmem:[#allocation10 + $0x8] sm:$0xf]
    %v392 = vld [vmem:[#allocation10 + $0xc] sm:$0xf]
    %v393 = vld [vmem:[#allocation11] sm:$0x1]
    %v395 = vlaneseq
    %v396 = vshrl.u32 %v395, 7
    %v397 = vsub.s32 0, %v396
    %v398 = vrot.slane %v393, %v397
    %v404 = vunpack.c.l.b16 %v389
    %v405 = vunpack.c.l.b16 %v390
    %v406 = vunpack.c.l.b16 %v391
    %v407 = vunpack.c.l.b16 %v392
    %v408 = vpack.c.b16 %v405, %v404
    %v409 = vpack.c.b16 %v407, %v406
    %vm412 = vcmask 261120
    %v414 = vsel %vm412, %v387, 0
    %v417 = vsel %vm412, %v388, 0
    %419 = vmatprep.subr.bf16.mxu0 0
    %420 = vmatpush1.bf16.msra.mxu0 %v408
    %421 = vmatprep.subr.bf16.mxu0 0
    %422 = vmatpush1.bf16.msra.mxu0 %v409
    %423 = vmatprep.subr.bf16.mxu0 0
    %424 = vmatpush1.bf16.msra.mxu0 0
    %425 = vmatprep.subr.bf16.mxu0 0
    %426 = vmatpush1.bf16.msra.mxu0 0
    %427 = vmatprep.subr.bf16.mxu0 0
    %428 = vmatpush1.bf16.msra.mxu0 0
    %429 = vmatprep.subr.bf16.mxu0 0
    %430 = vmatpush1.bf16.msra.mxu0 0
    %431 = vmatprep.subr.bf16.mxu0 0
    %432 = vmatpush1.bf16.msra.mxu0 0
    %433 = vmatprep.subr.bf16.mxu0 0
    %434 = vmatpush1.bf16.msra.mxu0 0
    %435 = vmatprep.subr.bf16.mxu0 0
    %436 = vmatpush1.bf16.msra.mxu0 0
    %437 = vmatprep.subr.bf16.mxu0 0
    %438 = vmatpush1.bf16.msra.mxu0 0
    %439 = vmatprep.subr.bf16.mxu0 0
    %440 = vmatpush1.bf16.msra.mxu0 0
    %441 = vmatprep.subr.bf16.mxu0 0
    %442 = vmatpush1.bf16.msra.mxu0 0
    %443 = vmatprep.subr.bf16.mxu0 0
    %444 = vmatpush1.bf16.msra.mxu0 0
    %445 = vmatprep.subr.bf16.mxu0 0
    %446 = vmatpush1.bf16.msra.mxu0 0
    %447 = vmatprep.subr.bf16.mxu0 0
    %448 = vmatpush1.bf16.msra.mxu0 0
    %449 = vmatprep.subr.bf16.mxu0 0
    %450 = vmatpush1.bf16.msra.mxu0 0
    %451 = vmatprep.mubr.bf16.mxu0 0
    %452 = vmatmul.mubr.bf16.gmra.mrb[0].mxu0 %v414
    %v453 = vpop.f32.mrb[0].mxu0
    %v454 = vadd.f32 %v398, %v453
    %v455 = vpop.f32.mrb[0].mxu0
    %v456 = vpop.f32.mrb[0].mxu0
    %v457 = vadd.f32 %v398, %v456
    %v458 = vpop.f32.mrb[0].mxu0
    %459 = vmatprep.mubr.bf16.mxu0 0
    %460 = vmatmul.mubr.bf16.gmra.mrb[0].mxu0 %v417
    %v461 = vpop.f32.mrb[0].mxu0
    %v462 = vadd.f32 %v398, %v461
    %v463 = vpop.f32.mrb[0].mxu0
    %v464 = vpop.f32.mrb[0].mxu0
    %v465 = vadd.f32 %v398, %v464
    %v466 = vpop.f32.mrb[0].mxu0
    %467 = vdwg.mxu0
    %472 = vrot.lane.b32.xlu0 %v369, 96
    %v473 = vpop.permute.xlu0 %472
    %474 = vrot.lane.b32.xlu0 %v373, 96
    %v475 = vpop.permute.xlu0 %474
    %476 = vrot.lane.b32.xlu0 %v379, 96
    %v477 = vpop.permute.xlu0 %476
    %478 = vrot.lane.b32.xlu0 %v383, 96
    %v479 = vpop.permute.xlu0 %478
    %484 = vrot.lane.b32.xlu0 %v369, 64
    %v485 = vpop.permute.xlu0 %484
    %486 = vrot.lane.b32.xlu0 %v373, 64
    %v487 = vpop.permute.xlu0 %486
    %488 = vrot.lane.b32.xlu0 %v379, 64
    %v489 = vpop.permute.xlu0 %488
    %490 = vrot.lane.b32.xlu0 %v383, 64
    %v491 = vpop.permute.xlu0 %490
    %496 = vrot.lane.b32.xlu0 %v369, 32
    %v497 = vpop.permute.xlu0 %496
    %498 = vrot.lane.b32.xlu0 %v373, 32
    %v499 = vpop.permute.xlu0 %498
    %500 = vrot.lane.b32.xlu0 %v379, 32
    %v501 = vpop.permute.xlu0 %500
    %502 = vrot.lane.b32.xlu0 %v383, 32
    %v503 = vpop.permute.xlu0 %502
    %v508 = vpack.c.bf16 %v369, %v369
    %v509 = vpack.c.bf16 %v473, %v473
    %v510 = vpack.c.bf16 %v485, %v485
    %v511 = vpack.c.bf16 %v497, %v497
    %v512 = vpack.c.bf16 %v373, %v373
    %v513 = vpack.c.bf16 %v475, %v475
    %v514 = vpack.c.bf16 %v487, %v487
    %v515 = vpack.c.bf16 %v499, %v499
    %v516 = vpack.c.bf16 %v379, %v379
    %v517 = vpack.c.bf16 %v477, %v477
    %v518 = vpack.c.bf16 %v489, %v489
    %v519 = vpack.c.bf16 %v501, %v501
    %v520 = vpack.c.bf16 %v383, %v383
    %v521 = vpack.c.bf16 %v479, %v479
    %v522 = vpack.c.bf16 %v491, %v491
    %v523 = vpack.c.bf16 %v503, %v503
    %528 = vrot.lane.b32.xlu0 %v371, 96
    %v529 = vpop.permute.xlu0 %528
    %530 = vrot.lane.b32.xlu0 %v375, 96
    %v531 = vpop.permute.xlu0 %530
    %532 = vrot.lane.b32.xlu0 %v381, 96
    %v533 = vpop.permute.xlu0 %532
    %534 = vrot.lane.b32.xlu0 %v385, 96
    %v535 = vpop.permute.xlu0 %534
    %540 = vrot.lane.b32.xlu0 %v371, 64
    %v541 = vpop.permute.xlu0 %540
    %542 = vrot.lane.b32.xlu0 %v375, 64
    %v543 = vpop.permute.xlu0 %542
    %544 = vrot.lane.b32.xlu0 %v381, 64
    %v545 = vpop.permute.xlu0 %544
    %546 = vrot.lane.b32.xlu0 %v385, 64
    %v547 = vpop.permute.xlu0 %546
    %552 = vrot.lane.b32.xlu0 %v371, 32
    %v553 = vpop.permute.xlu0 %552
    %554 = vrot.lane.b32.xlu0 %v375, 32
    %v555 = vpop.permute.xlu0 %554
    %556 = vrot.lane.b32.xlu0 %v381, 32
    %v557 = vpop.permute.xlu0 %556
    %558 = vrot.lane.b32.xlu0 %v385, 32
    %v559 = vpop.permute.xlu0 %558
    %v564 = vpack.c.bf16 %v371, %v371
    %v565 = vpack.c.bf16 %v529, %v529
    %v566 = vpack.c.bf16 %v541, %v541
    %v567 = vpack.c.bf16 %v553, %v553
    %v568 = vpack.c.bf16 %v375, %v375
    %v569 = vpack.c.bf16 %v531, %v531
    %v570 = vpack.c.bf16 %v543, %v543
    %v571 = vpack.c.bf16 %v555, %v555
    %v572 = vpack.c.bf16 %v381, %v381
    %v573 = vpack.c.bf16 %v533, %v533
    %v574 = vpack.c.bf16 %v545, %v545
    %v575 = vpack.c.bf16 %v557, %v557
    %v576 = vpack.c.bf16 %v385, %v385
    %v577 = vpack.c.bf16 %v535, %v535
    %v578 = vpack.c.bf16 %v547, %v547
    %v579 = vpack.c.bf16 %v559, %v559
    %584 = vrot.lane.b32.xlu0 %v454, 96
    %v585 = vpop.permute.xlu0 %584
    %586 = vrot.lane.b32.xlu0 %v457, 96
    %v587 = vpop.permute.xlu0 %586
    %588 = vrot.lane.b32.xlu0 %v462, 96
    %v589 = vpop.permute.xlu0 %588
    %590 = vrot.lane.b32.xlu0 %v465, 96
    %v591 = vpop.permute.xlu0 %590
    %596 = vrot.lane.b32.xlu0 %v454, 64
    %v597 = vpop.permute.xlu0 %596
    %598 = vrot.lane.b32.xlu0 %v457, 64
    %v599 = vpop.permute.xlu0 %598
    %600 = vrot.lane.b32.xlu0 %v462, 64
    %v601 = vpop.permute.xlu0 %600
    %602 = vrot.lane.b32.xlu0 %v465, 64
    %v603 = vpop.permute.xlu0 %602
    %608 = vrot.lane.b32.xlu0 %v454, 32
    %v609 = vpop.permute.xlu0 %608
    %610 = vrot.lane.b32.xlu0 %v457, 32
    %v611 = vpop.permute.xlu0 %610
    %612 = vrot.lane.b32.xlu0 %v462, 32
    %v613 = vpop.permute.xlu0 %612
    %614 = vrot.lane.b32.xlu0 %v465, 32
    %v615 = vpop.permute.xlu0 %614
    %v620 = vpack.c.bf16 %v454, %v454
    %v621 = vpack.c.bf16 %v585, %v585
    %v622 = vpack.c.bf16 %v597, %v597
    %v623 = vpack.c.bf16 %v609, %v609
    %v624 = vpack.c.bf16 %v457, %v457
    %v625 = vpack.c.bf16 %v587, %v587
    %v626 = vpack.c.bf16 %v599, %v599
    %v627 = vpack.c.bf16 %v611, %v611
    %v628 = vpack.c.bf16 %v462, %v462
    %v629 = vpack.c.bf16 %v589, %v589
    %v630 = vpack.c.bf16 %v601, %v601
    %v631 = vpack.c.bf16 %v613, %v613
    %v632 = vpack.c.bf16 %v465, %v465
    %v633 = vpack.c.bf16 %v591, %v591
    %v634 = vpack.c.bf16 %v603, %v603
    %v635 = vpack.c.bf16 %v615, %v615
    %v636 = vlaneseq
    %v637 = vshrl.u32 %v636, 7
    %v638 = vlaneseq
    %v639 = vand.u32 %v638, 127
    %vm640 = vcmp.le.s32.totalorder %v639, %v637
    %v641 = vsel %vm640, 0.0, -1e+09
    %v643 = vsel %vm412, %v508, 0
    %v646 = vsel %vm412, %v564, 0
    %648 = vmatprep.subr.bf16.mxu0 0
    %649 = vmatpush1.bf16.xpose.msra.mxu0 %v646
    %650 = vmatprep.subr.bf16.mxu0 0
    %651 = vmatpush1.bf16.xpose.msra.mxu0 0
    %652 = vmatprep.subr.bf16.mxu0 0
    %653 = vmatpush1.bf16.xpose.msra.mxu0 0
    %654 = vmatprep.subr.bf16.mxu0 0
    %655 = vmatpush1.bf16.xpose.msra.mxu0 0
    %656 = vmatprep.subr.bf16.mxu0 0
    %657 = vmatpush1.bf16.xpose.msra.mxu0 0
    %658 = vmatprep.subr.bf16.mxu0 0
    %659 = vmatpush1.bf16.xpose.msra.mxu0 0
    %660 = vmatprep.subr.bf16.mxu0 0
    %661 = vmatpush1.bf16.xpose.msra.mxu0 0
    %662 = vmatprep.subr.bf16.mxu0 0
    %663 = vmatpush1.bf16.xpose.msra.mxu0 0
    %664 = vmatprep.subr.bf16.mxu0 0
    %665 = vmatpush1.bf16.xpose.msra.mxu0 0
    %666 = vmatprep.subr.bf16.mxu0 0
    %667 = vmatpush1.bf16.xpose.msra.mxu0 0
    %668 = vmatprep.subr.bf16.mxu0 0
    %669 = vmatpush1.bf16.xpose.msra.mxu0 0
    %670 = vmatprep.subr.bf16.mxu0 0
    %671 = vmatpush1.bf16.xpose.msra.mxu0 0
    %672 = vmatprep.subr.bf16.mxu0 0
    %673 = vmatpush1.bf16.xpose.msra.mxu0 0
    %674 = vmatprep.subr.bf16.mxu0 0
    %675 = vmatpush1.bf16.xpose.msra.mxu0 0
    %676 = vmatprep.subr.bf16.mxu0 0
    %677 = vmatpush1.bf16.xpose.msra.mxu0 0
    %678 = vmatprep.subr.bf16.mxu0 0
    %679 = vmatpush1.bf16.xpose.msra.mxu0 0
    %680 = vmatprep.mubr.bf16.mxu0 0
    %681 = vmatmul.mubr.bf16.gmra.mrb[0].mxu0 %v643
    %v682 = vpop.f32.mrb[0].mxu0
    %v683 = vadd.f32 %v641, %v682
    %v684 = vpop.f32.mrb[0].mxu0
    %v685 = vpop.f32.mrb[0].mxu0
    %v686 = vpop.f32.mrb[0].mxu0
    %687 = vdwg.mxu0
    %v689 = vsel %vm412, %v509, 0
    %v692 = vsel %vm412, %v565, 0
    %694 = vmatprep.subr.bf16.mxu0 0
    %695 = vmatpush1.bf16.xpose.msra.mxu0 %v692
    %696 = vmatprep.subr.bf16.mxu0 0
    %697 = vmatpush1.bf16.xpose.msra.mxu0 0
    %698 = vmatprep.subr.bf16.mxu0 0
    %699 = vmatpush1.bf16.xpose.msra.mxu0 0
    %700 = vmatprep.subr.bf16.mxu0 0
    %701 = vmatpush1.bf16.xpose.msra.mxu0 0
    %702 = vmatprep.subr.bf16.mxu0 0
    %703 = vmatpush1.bf16.xpose.msra.mxu0 0
    %704 = vmatprep.subr.bf16.mxu0 0
    %705 = vmatpush1.bf16.xpose.msra.mxu0 0
    %706 = vmatprep.subr.bf16.mxu0 0
    %707 = vmatpush1.bf16.xpose.msra.mxu0 0
    %708 = vmatprep.subr.bf16.mxu0 0
    %709 = vmatpush1.bf16.xpose.msra.mxu0 0
    %710 = vmatprep.subr.bf16.mxu0 0
    %711 = vmatpush1.bf16.xpose.msra.mxu0 0
    %712 = vmatprep.subr.bf16.mxu0 0
    %713 = vmatpush1.bf16.xpose.msra.mxu0 0
    %714 = vmatprep.subr.bf16.mxu0 0
    %715 = vmatpush1.bf16.xpose.msra.mxu0 0
    %716 = vmatprep.subr.bf16.mxu0 0
    %717 = vmatpush1.bf16.xpose.msra.mxu0 0
    %718 = vmatprep.subr.bf16.mxu0 0
    %719 = vmatpush1.bf16.xpose.msra.mxu0 0
    %720 = vmatprep.subr.bf16.mxu0 0
    %721 = vmatpush1.bf16.xpose.msra.mxu0 0
    %722 = vmatprep.subr.bf16.mxu0 0
    %723 = vmatpush1.bf16.xpose.msra.mxu0 0
    %724 = vmatprep.subr.bf16.mxu0 0
    %725 = vmatpush1.bf16.xpose.msra.mxu0 0
    %726 = vmatprep.mubr.bf16.mxu0 0
    %727 = vmatmul.mubr.bf16.gmra.mrb[0].mxu0 %v689
    %v728 = vpop.f32.mrb[0].mxu0
    %v729 = vadd.f32 %v641, %v728
    %v730 = vpop.f32.mrb[0].mxu0
    %v731 = vpop.f32.mrb[0].mxu0
    %v732 = vpop.f32.mrb[0].mxu0
    %733 = vdwg.mxu0
    %v735 = vsel %vm412, %v510, 0
    %v738 = vsel %vm412, %v566, 0
    %740 = vmatprep.subr.bf16.mxu0 0
    %741 = vmatpush1.bf16.xpose.msra.mxu0 %v738
    %742 = vmatprep.subr.bf16.mxu0 0
    %743 = vmatpush1.bf16.xpose.msra.mxu0 0
    %744 = vmatprep.subr.bf16.mxu0 0
    %745 = vmatpush1.bf16.xpose.msra.mxu0 0
    %746 = vmatprep.subr.bf16.mxu0 0
    %747 = vmatpush1.bf16.xpose.msra.mxu0 0
    %748 = vmatprep.subr.bf16.mxu0 0
    %749 = vmatpush1.bf16.xpose.msra.mxu0 0
    %750 = vmatprep.subr.bf16.mxu0 0
    %751 = vmatpush1.bf16.xpose.msra.mxu0 0
    %752 = vmatprep.subr.bf16.mxu0 0
    %753 = vmatpush1.bf16.xpose.msra.mxu0 0
    %754 = vmatprep.subr.bf16.mxu0 0
    %755 = vmatpush1.bf16.xpose.msra.mxu0 0
    %756 = vmatprep.subr.bf16.mxu0 0
    %757 = vmatpush1.bf16.xpose.msra.mxu0 0
    %758 = vmatprep.subr.bf16.mxu0 0
    %759 = vmatpush1.bf16.xpose.msra.mxu0 0
    %760 = vmatprep.subr.bf16.mxu0 0
    %761 = vmatpush1.bf16.xpose.msra.mxu0 0
    %762 = vmatprep.subr.bf16.mxu0 0
    %763 = vmatpush1.bf16.xpose.msra.mxu0 0
    %764 = vmatprep.subr.bf16.mxu0 0
    %765 = vmatpush1.bf16.xpose.msra.mxu0 0
    %766 = vmatprep.subr.bf16.mxu0 0
    %767 = vmatpush1.bf16.xpose.msra.mxu0 0
    %768 = vmatprep.subr.bf16.mxu0 0
    %769 = vmatpush1.bf16.xpose.msra.mxu0 0
    %770 = vmatprep.subr.bf16.mxu0 0
    %771 = vmatpush1.bf16.xpose.msra.mxu0 0
    %772 = vmatprep.mubr.bf16.mxu0 0
    %773 = vmatmul.mubr.bf16.gmra.mrb[0].mxu0 %v735
    %v774 = vpop.f32.mrb[0].mxu0
    %v775 = vadd.f32 %v641, %v774
    %v776 = vpop.f32.mrb[0].mxu0
    %v777 = vpop.f32.mrb[0].mxu0
    %v778 = vpop.f32.mrb[0].mxu0
    %779 = vdwg.mxu0
    %v781 = vsel %vm412, %v511, 0
    %v784 = vsel %vm412, %v567, 0
    %786 = vmatprep.subr.bf16.mxu0 0
    %787 = vmatpush1.bf16.xpose.msra.mxu0 %v784
    %788 = vmatprep.subr.bf16.mxu0 0
    %789 = vmatpush1.bf16.xpose.msra.mxu0 0
    %790 = vmatprep.subr.bf16.mxu0 0
    %791 = vmatpush1.bf16.xpose.msra.mxu0 0
    %792 = vmatprep.subr.bf16.mxu0 0
    %793 = vmatpush1.bf16.xpose.msra.mxu0 0
    %794 = vmatprep.subr.bf16.mxu0 0
    %795 = vmatpush1.bf16.xpose.msra.mxu0 0
    %796 = vmatprep.subr.bf16.mxu0 0
    %797 = vmatpush1.bf16.xpose.msra.mxu0 0
    %798 = vmatprep.subr.bf16.mxu0 0
    %799 = vmatpush1.bf16.xpose.msra.mxu0 0
    %800 = vmatprep.subr.bf16.mxu0 0
    %801 = vmatpush1.bf16.xpose.msra.mxu0 0
    %802 = vmatprep.subr.bf16.mxu0 0
    %803 = vmatpush1.bf16.xpose.msra.mxu0 0
    %804 = vmatprep.subr.bf16.mxu0 0
    %805 = vmatpush1.bf16.xpose.msra.mxu0 0
    %806 = vmatprep.subr.bf16.mxu0 0
    %807 = vmatpush1.bf16.xpose.msra.mxu0 0
    %808 = vmatprep.subr.bf16.mxu0 0
    %809 = vmatpush1.bf16.xpose.msra.mxu0 0
    %810 = vmatprep.subr.bf16.mxu0 0
    %811 = vmatpush1.bf16.xpose.msra.mxu0 0
    %812 = vmatprep.subr.bf16.mxu0 0
    %813 = vmatpush1.bf16.xpose.msra.mxu0 0
    %814 = vmatprep.subr.bf16.mxu0 0
    %815 = vmatpush1.bf16.xpose.msra.mxu0 0
    %816 = vmatprep.subr.bf16.mxu0 0
    %817 = vmatpush1.bf16.xpose.msra.mxu0 0
    %818 = vmatprep.mubr.bf16.mxu0 0
    %819 = vmatmul.mubr.bf16.gmra.mrb[0].mxu0 %v781
    %v820 = vpop.f32.mrb[0].mxu0
    %v821 = vadd.f32 %v641, %v820
    %v822 = vpop.f32.mrb[0].mxu0
    %v823 = vpop.f32.mrb[0].mxu0
    %v824 = vpop.f32.mrb[0].mxu0
    %825 = vdwg.mxu0
    %v827 = vsel %vm412, %v512, 0
    %v830 = vsel %vm412, %v568, 0
    %832 = vmatprep.subr.bf16.mxu0 0
    %833 = vmatpush1.bf16.xpose.msra.mxu0 %v830
    %834 = vmatprep.subr.bf16.mxu0 0
    %835 = vmatpush1.bf16.xpose.msra.mxu0 0
    %836 = vmatprep.subr.bf16.mxu0 0
    %837 = vmatpush1.bf16.xpose.msra.mxu0 0
    %838 = vmatprep.subr.bf16.mxu0 0
    %839 = vmatpush1.bf16.xpose.msra.mxu0 0
    %840 = vmatprep.subr.bf16.mxu0 0
    %841 = vmatpush1.bf16.xpose.msra.mxu0 0
    %842 = vmatprep.subr.bf16.mxu0 0
    %843 = vmatpush1.bf16.xpose.msra.mxu0 0
    %844 = vmatprep.subr.bf16.mxu0 0
    %845 = vmatpush1.bf16.xpose.msra.mxu0 0
    %846 = vmatprep.subr.bf16.mxu0 0
    %847 = vmatpush1.bf16.xpose.msra.mxu0 0
    %848 = vmatprep.subr.bf16.mxu0 0
    %849 = vmatpush1.bf16.xpose.msra.mxu0 0
    %850 = vmatprep.subr.bf16.mxu0 0
    %851 = vmatpush1.bf16.xpose.msra.mxu0 0
    %852 = vmatprep.subr.bf16.mxu0 0
    %853 = vmatpush1.bf16.xpose.msra.mxu0 0
    %854 = vmatprep.subr.bf16.mxu0 0
    %855 = vmatpush1.bf16.xpose.msra.mxu0 0
    %856 = vmatprep.subr.bf16.mxu0 0
    %857 = vmatpush1.bf16.xpose.msra.mxu0 0
    %858 = vmatprep.subr.bf16.mxu0 0
    %859 = vmatpush1.bf16.xpose.msra.mxu0 0
    %860 = vmatprep.subr.bf16.mxu0 0
    %861 = vmatpush1.bf16.xpose.msra.mxu0 0
    %862 = vmatprep.subr.bf16.mxu0 0
    %863 = vmatpush1.bf16.xpose.msra.mxu0 0
    %864 = vmatprep.mubr.bf16.mxu0 0
    %865 = vmatmul.mubr.bf16.gmra.mrb[0].mxu0 %v827
    %v866 = vpop.f32.mrb[0].mxu0
    %v867 = vadd.f32 %v641, %v866
    %v868 = vpop.f32.mrb[0].mxu0
    %v869 = vpop.f32.mrb[0].mxu0
    %v870 = vpop.f32.mrb[0].mxu0
    %871 = vdwg.mxu0
    %v873 = vsel %vm412, %v513, 0
    %v876 = vsel %vm412, %v569, 0
    %878 = vmatprep.subr.bf16.mxu0 0
    %879 = vmatpush1.bf16.xpose.msra.mxu0 %v876
    %880 = vmatprep.subr.bf16.mxu0 0
    %881 = vmatpush1.bf16.xpose.msra.mxu0 0
    %882 = vmatprep.subr.bf16.mxu0 0
    %883 = vmatpush1.bf16.xpose.msra.mxu0 0
    %884 = vmatprep.subr.bf16.mxu0 0
    %885 = vmatpush1.bf16.xpose.msra.mxu0 0
    %886 = vmatprep.subr.bf16.mxu0 0
    %887 = vmatpush1.bf16.xpose.msra.mxu0 0
    %888 = vmatprep.subr.bf16.mxu0 0
    %889 = vmatpush1.bf16.xpose.msra.mxu0 0
    %890 = vmatprep.subr.bf16.mxu0 0
    %891 = vmatpush1.bf16.xpose.msra.mxu0 0
    %892 = vmatprep.subr.bf16.mxu0 0
    %893 = vmatpush1.bf16.xpose.msra.mxu0 0
    %894 = vmatprep.subr.bf16.mxu0 0
    %895 = vmatpush1.bf16.xpose.msra.mxu0 0
    %896 = vmatprep.subr.bf16.mxu0 0
    %897 = vmatpush1.bf16.xpose.msra.mxu0 0
    %898 = vmatprep.subr.bf16.mxu0 0
    %899 = vmatpush1.bf16.xpose.msra.mxu0 0
    %900 = vmatprep.subr.bf16.mxu0 0
    %901 = vmatpush1.bf16.xpose.msra.mxu0 0
    %902 = vmatprep.subr.bf16.mxu0 0
    %903 = vmatpush1.bf16.xpose.msra.mxu0 0
    %904 = vmatprep.subr.bf16.mxu0 0
    %905 = vmatpush1.bf16.xpose.msra.mxu0 0
    %906 = vmatprep.subr.bf16.mxu0 0
    %907 = vmatpush1.bf16.xpose.msra.mxu0 0
    %908 = vmatprep.subr.bf16.mxu0 0
    %909 = vmatpush1.bf16.xpose.msra.mxu0 0
    %910 = vmatprep.mubr.bf16.mxu0 0
    %911 = vmatmul.mubr.bf16.gmra.mrb[0].mxu0 %v873
    %v912 = vpop.f32.mrb[0].mxu0
    %v913 = vadd.f32 %v641, %v912
    %v914 = vpop.f32.mrb[0].mxu0
    %v915 = vpop.f32.mrb[0].mxu0
    %v916 = vpop.f32.mrb[0].mxu0
    %917 = vdwg.mxu0
    %v919 = vsel %vm412, %v514, 0
    %v922 = vsel %vm412, %v570, 0
    %924 = vmatprep.subr.bf16.mxu0 0
    %925 = vmatpush1.bf16.xpose.msra.mxu0 %v922
    %926 = vmatprep.subr.bf16.mxu0 0
    %927 = vmatpush1.bf16.xpose.msra.mxu0 0
    %928 = vmatprep.subr.bf16.mxu0 0
    %929 = vmatpush1.bf16.xpose.msra.mxu0 0
    %930 = vmatprep.subr.bf16.mxu0 0
    %931 = vmatpush1.bf16.xpose.msra.mxu0 0
    %932 = vmatprep.subr.bf16.mxu0 0
    %933 = vmatpush1.bf16.xpose.msra.mxu0 0
    %934 = vmatprep.subr.bf16.mxu0 0
    %935 = vmatpush1.bf16.xpose.msra.mxu0 0
    %936 = vmatprep.subr.bf16.mxu0 0
    %937 = vmatpush1.bf16.xpose.msra.mxu0 0
    %938 = vmatprep.subr.bf16.mxu0 0
    %939 = vmatpush1.bf16.xpose.msra.mxu0 0
    %940 = vmatprep.subr.bf16.mxu0 0
    %941 = vmatpush1.bf16.xpose.msra.mxu0 0
    %942 = vmatprep.subr.bf16.mxu0 0
    %943 = vmatpush1.bf16.xpose.msra.mxu0 0
    %944 = vmatprep.subr.bf16.mxu0 0
    %945 = vmatpush1.bf16.xpose.msra.mxu0 0
    %946 = vmatprep.subr.bf16.mxu0 0
    %947 = vmatpush1.bf16.xpose.msra.mxu0 0
    %948 = vmatprep.subr.bf16.mxu0 0
    %949 = vmatpush1.bf16.xpose.msra.mxu0 0
    %950 = vmatprep.subr.bf16.mxu0 0
    %951 = vmatpush1.bf16.xpose.msra.mxu0 0
    %952 = vmatprep.subr.bf16.mxu0 0
    %953 = vmatpush1.bf16.xpose.msra.mxu0 0
    %954 = vmatprep.subr.bf16.mxu0 0
    %955 = vmatpush1.bf16.xpose.msra.mxu0 0
    %956 = vmatprep.mubr.bf16.mxu0 0
    %957 = vmatmul.mubr.bf16.gmra.mrb[0].mxu0 %v919
    %v958 = vpop.f32.mrb[0].mxu0
    %v959 = vadd.f32 %v641, %v958
    %v960 = vpop.f32.mrb[0].mxu0
    %v961 = vpop.f32.mrb[0].mxu0
    %v962 = vpop.f32.mrb[0].mxu0
    %963 = vdwg.mxu0
    %v965 = vsel %vm412, %v515, 0
    %v968 = vsel %vm412, %v571, 0
    %970 = vmatprep.subr.bf16.mxu0 0
    %971 = vmatpush1.bf16.xpose.msra.mxu0 %v968
    %972 = vmatprep.subr.bf16.mxu0 0
    %973 = vmatpush1.bf16.xpose.msra.mxu0 0
    %974 = vmatprep.subr.bf16.mxu0 0
    %975 = vmatpush1.bf16.xpose.msra.mxu0 0
    %976 = vmatprep.subr.bf16.mxu0 0
    %977 = vmatpush1.bf16.xpose.msra.mxu0 0
    %978 = vmatprep.subr.bf16.mxu0 0
    %979 = vmatpush1.bf16.xpose.msra.mxu0 0
    %980 = vmatprep.subr.bf16.mxu0 0
    %981 = vmatpush1.bf16.xpose.msra.mxu0 0
    %982 = vmatprep.subr.bf16.mxu0 0
    %983 = vmatpush1.bf16.xpose.msra.mxu0 0
    %984 = vmatprep.subr.bf16.mxu0 0
    %985 = vmatpush1.bf16.xpose.msra.mxu0 0
    %986 = vmatprep.subr.bf16.mxu0 0
    %987 = vmatpush1.bf16.xpose.msra.mxu0 0
    %988 = vmatprep.subr.bf16.mxu0 0
    %989 = vmatpush1.bf16.xpose.msra.mxu0 0
    %990 = vmatprep.subr.bf16.mxu0 0
    %991 = vmatpush1.bf16.xpose.msra.mxu0 0
    %992 = vmatprep.subr.bf16.mxu0 0
    %993 = vmatpush1.bf16.xpose.msra.mxu0 0
    %994 = vmatprep.subr.bf16.mxu0 0
    %995 = vmatpush1.bf16.xpose.msra.mxu0 0
    %996 = vmatprep.subr.bf16.mxu0 0
    %997 = vmatpush1.bf16.xpose.msra.mxu0 0
    %998 = vmatprep.subr.bf16.mxu0 0
    %999 = vmatpush1.bf16.xpose.msra.mxu0 0
    %1000 = vmatprep.subr.bf16.mxu0 0
    %1001 = vmatpush1.bf16.xpose.msra.mxu0 0
    %1002 = vmatprep.mubr.bf16.mxu0 0
    %1003 = vmatmul.mubr.bf16.gmra.mrb[0].mxu0 %v965
    %v1004 = vpop.f32.mrb[0].mxu0
    %v1005 = vadd.f32 %v641, %v1004
    %v1006 = vpop.f32.mrb[0].mxu0
    %v1007 = vpop.f32.mrb[0].mxu0
    %v1008 = vpop.f32.mrb[0].mxu0
    %1009 = vdwg.mxu0
    %v1011 = vsel %vm412, %v516, 0
    %v1014 = vsel %vm412, %v572, 0
    %1016 = vmatprep.subr.bf16.mxu0 0
    %1017 = vmatpush1.bf16.xpose.msra.mxu0 %v1014
    %1018 = vmatprep.subr.bf16.mxu0 0
    %1019 = vmatpush1.bf16.xpose.msra.mxu0 0
    %1020 = vmatprep.subr.bf16.mxu0 0
    %1021 = vmatpush1.bf16.xpose.msra.mxu0 0
    %1022 = vmatprep.subr.bf16.mxu0 0
    %1023 = vmatpush1.bf16.xpose.msra.mxu0 0
    %1024 = vmatprep.subr.bf16.mxu0 0
    %1025 = vmatpush1.bf16.xpose.msra.mxu0 0
    %1026 = vmatprep.subr.bf16.mxu0 0
    %1027 = vmatpush1.bf16.xpose.msra.mxu0 0
    %1028 = vmatprep.subr.bf16.mxu0 0
    %1029 = vmatpush1.bf16.xpose.msra.mxu0 0
    %1030 = vmatprep.subr.bf16.mxu0 0
    %1031 = vmatpush1.bf16.xpose.msra.mxu0 0
    %1032 = vmatprep.subr.bf16.mxu0 0
    %1033 = vmatpush1.bf16.xpose.msra.mxu0 0
    %1034 = vmatprep.subr.bf16.mxu0 0
    %1035 = vmatpush1.bf16.xpose.msra.mxu0 0
    %1036 = vmatprep.subr.bf16.mxu0 0
    %1037 = vmatpush1.bf16.xpose.msra.mxu0 0
    %1038 = vmatprep.subr.bf16.mxu0 0
    %1039 = vmatpush1.bf16.xpose.msra.mxu0 0
    %1040 = vmatprep.subr.bf16.mxu0 0
    %1041 = vmatpush1.bf16.xpose.msra.mxu0 0
    %1042 = vmatprep.subr.bf16.mxu0 0
    %1043 = vmatpush1.bf16.xpose.msra.mxu0 0
    %1044 = vmatprep.subr.bf16.mxu0 0
    %1045 = vmatpush1.bf16.xpose.msra.mxu0 0
    %1046 = vmatprep.subr.bf16.mxu0 0
    %1047 = vmatpush1.bf16.xpose.msra.mxu0 0
    %1048 = vmatprep.mubr.bf16.mxu0 0
    %1049 = vmatmul.mubr.bf16.gmra.mrb[0].mxu0 %v1011
    %v1050 = vpop.f32.mrb[0].mxu0
    %v1051 = vadd.f32 %v641, %v1050
    %v1052 = vpop.f32.mrb[0].mxu0
    %v1053 = vpop.f32.mrb[0].mxu0
    %v1054 = vpop.f32.mrb[0].mxu0
    %1055 = vdwg.mxu0
    %v1057 = vsel %vm412, %v517, 0
    %v1060 = vsel %vm412, %v573, 0
    %1062 = vmatprep.subr.bf16.mxu0 0
    %1063 = vmatpush1.bf16.xpose.msra.mxu0 %v1060
    %1064 = vmatprep.subr.bf16.mxu0 0
    %1065 = vmatpush1.bf16.xpose.msra.mxu0 0
    %1066 = vmatprep.subr.bf16.mxu0 0
    %1067 = vmatpush1.bf16.xpose.msra.mxu0 0
    %1068 = vmatprep.subr.bf16.mxu0 0
    %1069 = vmatpush1.bf16.xpose.msra.mxu0 0
    %1070 = vmatprep.subr.bf16.mxu0 0
    %1071 = vmatpush1.bf16.xpose.msra.mxu0 0
    %1072 = vmatprep.subr.bf16.mxu0 0
    %1073 = vmatpush1.bf16.xpose.msra.mxu0 0
    %1074 = vmatprep.subr.bf16.mxu0 0
    %1075 = vmatpush1.bf16.xpose.msra.mxu0 0
    %1076 = vmatprep.subr.bf16.mxu0 0
    %1077 = vmatpush1.bf16.xpose.msra.mxu0 0
    %1078 = vmatprep.subr.bf16.mxu0 0
    %1079 = vmatpush1.bf16.xpose.msra.mxu0 0
    %1080 = vmatprep.subr.bf16.mxu0 0
    %1081 = vmatpush1.bf16.xpose.msra.mxu0 0
    %1082 = vmatprep.subr.bf16.mxu0 0
    %1083 = vmatpush1.bf16.xpose.msra.mxu0 0
    %1084 = vmatprep.subr.bf16.mxu0 0
    %1085 = vmatpush1.bf16.xpose.msra.mxu0 0
    %1086 = vmatprep.subr.bf16.mxu0 0
    %1087 = vmatpush1.bf16.xpose.msra.mxu0 0
    %1088 = vmatprep.subr.bf16.mxu0 0
    %1089 = vmatpush1.bf16.xpose.msra.mxu0 0
    %1090 = vmatprep.subr.bf16.mxu0 0
    %1091 = vmatpush1.bf16.xpose.msra.mxu0 0
    %1092 = vmatprep.subr.bf16.mxu0 0
    %1093 = vmatpush1.bf16.xpose.msra.mxu0 0
    %1094 = vmatprep.mubr.bf16.mxu0 0
    %1095 = vmatmul.mubr.bf16.gmra.mrb[0].mxu0 %v1057
    %v1096 = vpop.f32.mrb[0].mxu0
    %v1097 = vadd.f32 %v641, %v1096
    %v1098 = vpop.f32.mrb[0].mxu0
    %v1099 = vpop.f32.mrb[0].mxu0
    %v1100 = vpop.f32.mrb[0].mxu0
    %1101 = vdwg.mxu0
    %v1103 = vsel %vm412, %v518, 0
    %v1106 = vsel %vm412, %v574, 0
    %1108 = vmatprep.subr.bf16.mxu0 0
    %1109 = vmatpush1.bf16.xpose.msra.mxu0 %v1106
    %1110 = vmatprep.subr.bf16.mxu0 0
    %1111 = vmatpush1.bf16.xpose.msra.mxu0 0
    %1112 = vmatprep.subr.bf16.mxu0 0
    %1113 = vmatpush1.bf16.xpose.msra.mxu0 0
    %1114 = vmatprep.subr.bf16.mxu0 0
    %1115 = vmatpush1.bf16.xpose.msra.mxu0 0
    %1116 = vmatprep.subr.bf16.mxu0 0
    %1117 = vmatpush1.bf16.xpose.msra.mxu0 0
    %1118 = vmatprep.subr.bf16.mxu0 0
    %1119 = vmatpush1.bf16.xpose.msra.mxu0 0
    %1120 = vmatprep.subr.bf16.mxu0 0
    %1121 = vmatpush1.bf16.xpose.msra.mxu0 0
    %1122 = vmatprep.subr.bf16.mxu0 0
    %1123 = vmatpush1.bf16.xpose.msra.mxu0 0
    %1124 = vmatprep.subr.bf16.mxu0 0
    %1125 = vmatpush1.bf16.xpose.msra.mxu0 0
    %1126 = vmatprep.subr.bf16.mxu0 0
    %1127 = vmatpush1.bf16.xpose.msra.mxu0 0
    %1128 = vmatprep.subr.bf16.mxu0 0
    %1129 = vmatpush1.bf16.xpose.msra.mxu0 0
    %1130 = vmatprep.subr.bf16.mxu0 0
    %1131 = vmatpush1.bf16.xpose.msra.mxu0 0
    %1132 = vmatprep.subr.bf16.mxu0 0
    %1133 = vmatpush1.bf16.xpose.msra.mxu0 0
    %1134 = vmatprep.subr.bf16.mxu0 0
    %1135 = vmatpush1.bf16.xpose.msra.mxu0 0
    %1136 = vmatprep.subr.bf16.mxu0 0
    %1137 = vmatpush1.bf16.xpose.msra.mxu0 0
    %1138 = vmatprep.subr.bf16.mxu0 0
    %1139 = vmatpush1.bf16.xpose.msra.mxu0 0
    %1140 = vmatprep.mubr.bf16.mxu0 0
    %1141 = vmatmul.mubr.bf16.gmra.mrb[0].mxu0 %v1103
    %v1142 = vpop.f32.mrb[0].mxu0
    %v1143 = vadd.f32 %v641, %v1142
    %v1144 = vpop.f32.mrb[0].mxu0
    %v1145 = vpop.f32.mrb[0].mxu0
    %v1146 = vpop.f32.mrb[0].mxu0
    %1147 = vdwg.mxu0
    %v1149 = vsel %vm412, %v519, 0
    %v1152 = vsel %vm412, %v575, 0
    %1154 = vmatprep.subr.bf16.mxu0 0
    %1155 = vmatpush1.bf16.xpose.msra.mxu0 %v1152
    %1156 = vmatprep.subr.bf16.mxu0 0
    %1157 = vmatpush1.bf16.xpose.msra.mxu0 0
    %1158 = vmatprep.subr.bf16.mxu0 0
    %1159 = vmatpush1.bf16.xpose.msra.mxu0 0
    %1160 = vmatprep.subr.bf16.mxu0 0
    %1161 = vmatpush1.bf16.xpose.msra.mxu0 0
    %1162 = vmatprep.subr.bf16.mxu0 0
    %1163 = vmatpush1.bf16.xpose.msra.mxu0 0
    %1164 = vmatprep.subr.bf16.mxu0 0
    %1165 = vmatpush1.bf16.xpose.msra.mxu0 0
    %1166 = vmatprep.subr.bf16.mxu0 0
    %1167 = vmatpush1.bf16.xpose.msra.mxu0 0
    %1168 = vmatprep.subr.bf16.mxu0 0
    %1169 = vmatpush1.bf16.xpose.msra.mxu0 0
    %1170 = vmatprep.subr.bf16.mxu0 0
    %1171 = vmatpush1.bf16.xpose.msra.mxu0 0
    %1172 = vmatprep.subr.bf16.mxu0 0
    %1173 = vmatpush1.bf16.xpose.msra.mxu0 0
    %1174 = vmatprep.subr.bf16.mxu0 0
    %1175 = vmatpush1.bf16.xpose.msra.mxu0 0
    %1176 = vmatprep.subr.bf16.mxu0 0
    %1177 = vmatpush1.bf16.xpose.msra.mxu0 0
    %1178 = vmatprep.subr.bf16.mxu0 0
    %1179 = vmatpush1.bf16.xpose.msra.mxu0 0
    %1180 = vmatprep.subr.bf16.mxu0 0
    %1181 = vmatpush1.bf16.xpose.msra.mxu0 0
    %1182 = vmatprep.subr.bf16.mxu0 0
    %1183 = vmatpush1.bf16.xpose.msra.mxu0 0
    %1184 = vmatprep.subr.bf16.mxu0 0
    %1185 = vmatpush1.bf16.xpose.msra.mxu0 0
    %1186 = vmatprep.mubr.bf16.mxu0 0
    %1187 = vmatmul.mubr.bf16.gmra.mrb[0].mxu0 %v1149
    %v1188 = vpop.f32.mrb[0].mxu0
    %v1189 = vadd.f32 %v641, %v1188
    %v1190 = vpop.f32.mrb[0].mxu0
    %v1191 = vpop.f32.mrb[0].mxu0
    %v1192 = vpop.f32.mrb[0].mxu0
    %1193 = vdwg.mxu0
    %v1195 = vsel %vm412, %v520, 0
    %v1198 = vsel %vm412, %v576, 0
    %1200 = vmatprep.subr.bf16.mxu0 0
    %1201 = vmatpush1.bf16.xpose.msra.mxu0 %v1198
    %1202 = vmatprep.subr.bf16.mxu0 0
    %1203 = vmatpush1.bf16.xpose.msra.mxu0 0
    %1204 = vmatprep.subr.bf16.mxu0 0
    %1205 = vmatpush1.bf16.xpose.msra.mxu0 0
    %1206 = vmatprep.subr.bf16.mxu0 0
    %1207 = vmatpush1.bf16.xpose.msra.mxu0 0
    %1208 = vmatprep.subr.bf16.mxu0 0
    %1209 = vmatpush1.bf16.xpose.msra.mxu0 0
    %1210 = vmatprep.subr.bf16.mxu0 0
    %1211 = vmatpush1.bf16.xpose.msra.mxu0 0
    %1212 = vmatprep.subr.bf16.mxu0 0
    %1213 = vmatpush1.bf16.xpose.msra.mxu0 0
    %1214 = vmatprep.subr.bf16.mxu0 0
    %1215 = vmatpush1.bf16.xpose.msra.mxu0 0
    %1216 = vmatprep.subr.bf16.mxu0 0
    %1217 = vmatpush1.bf16.xpose.msra.mxu0 0
    %1218 = vmatprep.subr.bf16.mxu0 0
    %1219 = vmatpush1.bf16.xpose.msra.mxu0 0
    %1220 = vmatprep.subr.bf16.mxu0 0
    %1221 = vmatpush1.bf16.xpose.msra.mxu0 0
    %1222 = vmatprep.subr.bf16.mxu0 0
    %1223 = vmatpush1.bf16.xpose.msra.mxu0 0
    %1224 = vmatprep.subr.bf16.mxu0 0
    %1225 = vmatpush1.bf16.xpose.msra.mxu0 0
    %1226 = vmatprep.subr.bf16.mxu0 0
    %1227 = vmatpush1.bf16.xpose.msra.mxu0 0
    %1228 = vmatprep.subr.bf16.mxu0 0
    %1229 = vmatpush1.bf16.xpose.msra.mxu0 0
    %1230 = vmatprep.subr.bf16.mxu0 0
    %1231 = vmatpush1.bf16.xpose.msra.mxu0 0
    %1232 = vmatprep.mubr.bf16.mxu0 0
    %1233 = vmatmul.mubr.bf16.gmra.mrb[0].mxu0 %v1195
    %v1234 = vpop.f32.mrb[0].mxu0
    %v1235 = vadd.f32 %v641, %v1234
    %v1236 = vpop.f32.mrb[0].mxu0
    %v1237 = vpop.f32.mrb[0].mxu0
    %v1238 = vpop.f32.mrb[0].mxu0
    %1239 = vdwg.mxu0
    %v1241 = vsel %vm412, %v521, 0
    %v1244 = vsel %vm412, %v577, 0
    %1246 = vmatprep.subr.bf16.mxu0 0
    %1247 = vmatpush1.bf16.xpose.msra.mxu0 %v1244
    %1248 = vmatprep.subr.bf16.mxu0 0
    %1249 = vmatpush1.bf16.xpose.msra.mxu0 0
    %1250 = vmatprep.subr.bf16.mxu0 0
    %1251 = vmatpush1.bf16.xpose.msra.mxu0 0
    %1252 = vmatprep.subr.bf16.mxu0 0
    %1253 = vmatpush1.bf16.xpose.msra.mxu0 0
    %1254 = vmatprep.subr.bf16.mxu0 0
    %1255 = vmatpush1.bf16.xpose.msra.mxu0 0
    %1256 = vmatprep.subr.bf16.mxu0 0
    %1257 = vmatpush1.bf16.xpose.msra.mxu0 0
    %1258 = vmatprep.subr.bf16.mxu0 0
    %1259 = vmatpush1.bf16.xpose.msra.mxu0 0
    %1260 = vmatprep.subr.bf16.mxu0 0
    %1261 = vmatpush1.bf16.xpose.msra.mxu0 0
    %1262 = vmatprep.subr.bf16.mxu0 0
    %1263 = vmatpush1.bf16.xpose.msra.mxu0 0
    %1264 = vmatprep.subr.bf16.mxu0 0
    %1265 = vmatpush1.bf16.xpose.msra.mxu0 0
    %1266 = vmatprep.subr.bf16.mxu0 0
    %1267 = vmatpush1.bf16.xpose.msra.mxu0 0
    %1268 = vmatprep.subr.bf16.mxu0 0
    %1269 = vmatpush1.bf16.xpose.msra.mxu0 0
    %1270 = vmatprep.subr.bf16.mxu0 0
    %1271 = vmatpush1.bf16.xpose.msra.mxu0 0
    %1272 = vmatprep.subr.bf16.mxu0 0
    %1273 = vmatpush1.bf16.xpose.msra.mxu0 0
    %1274 = vmatprep.subr.bf16.mxu0 0
    %1275 = vmatpush1.bf16.xpose.msra.mxu0 0
    %1276 = vmatprep.subr.bf16.mxu0 0
    %1277 = vmatpush1.bf16.xpose.msra.mxu0 0
    %1278 = vmatprep.mubr.bf16.mxu0 0
    %1279 = vmatmul.mubr.bf16.gmra.mrb[0].mxu0 %v1241
    %v1280 = vpop.f32.mrb[0].mxu0
    %v1281 = vadd.f32 %v641, %v1280
    %v1282 = vpop.f32.mrb[0].mxu0
    %v1283 = vpop.f32.mrb[0].mxu0
    %v1284 = vpop.f32.mrb[0].mxu0
    %1285 = vdwg.mxu0
    %v1287 = vsel %vm412, %v522, 0
    %v1290 = vsel %vm412, %v578, 0
    %1292 = vmatprep.subr.bf16.mxu0 0
    %1293 = vmatpush1.bf16.xpose.msra.mxu0 %v1290
    %1294 = vmatprep.subr.bf16.mxu0 0
    %1295 = vmatpush1.bf16.xpose.msra.mxu0 0
    %1296 = vmatprep.subr.bf16.mxu0 0
    %1297 = vmatpush1.bf16.xpose.msra.mxu0 0
    %1298 = vmatprep.subr.bf16.mxu0 0
    %1299 = vmatpush1.bf16.xpose.msra.mxu0 0
    %1300 = vmatprep.subr.bf16.mxu0 0
    %1301 = vmatpush1.bf16.xpose.msra.mxu0 0
    %1302 = vmatprep.subr.bf16.mxu0 0
    %1303 = vmatpush1.bf16.xpose.msra.mxu0 0
    %1304 = vmatprep.subr.bf16.mxu0 0
    %1305 = vmatpush1.bf16.xpose.msra.mxu0 0
    %1306 = vmatprep.subr.bf16.mxu0 0
    %1307 = vmatpush1.bf16.xpose.msra.mxu0 0
    %1308 = vmatprep.subr.bf16.mxu0 0
    %1309 = vmatpush1.bf16.xpose.msra.mxu0 0
    %1310 = vmatprep.subr.bf16.mxu0 0
    %1311 = vmatpush1.bf16.xpose.msra.mxu0 0
    %1312 = vmatprep.subr.bf16.mxu0 0
    %1313 = vmatpush1.bf16.xpose.msra.mxu0 0
    %1314 = vmatprep.subr.bf16.mxu0 0
    %1315 = vmatpush1.bf16.xpose.msra.mxu0 0
    %1316 = vmatprep.subr.bf16.mxu0 0
    %1317 = vmatpush1.bf16.xpose.msra.mxu0 0
    %1318 = vmatprep.subr.bf16.mxu0 0
    %1319 = vmatpush1.bf16.xpose.msra.mxu0 0
    %1320 = vmatprep.subr.bf16.mxu0 0
    %1321 = vmatpush1.bf16.xpose.msra.mxu0 0
    %1322 = vmatprep.subr.bf16.mxu0 0
    %1323 = vmatpush1.bf16.xpose.msra.mxu0 0
    %1324 = vmatprep.mubr.bf16.mxu0 0
    %1325 = vmatmul.mubr.bf16.gmra.mrb[0].mxu0 %v1287
    %v1326 = vpop.f32.mrb[0].mxu0
    %v1327 = vadd.f32 %v641, %v1326
    %v1328 = vpop.f32.mrb[0].mxu0
    %v1329 = vpop.f32.mrb[0].mxu0
    %v1330 = vpop.f32.mrb[0].mxu0
    %1331 = vdwg.mxu0
    %v1333 = vsel %vm412, %v523, 0
    %v1336 = vsel %vm412, %v579, 0
    %1338 = vmatprep.subr.bf16.mxu0 0
    %1339 = vmatpush1.bf16.xpose.msra.mxu0 %v1336
    %1340 = vmatprep.subr.bf16.mxu0 0
    %1341 = vmatpush1.bf16.xpose.msra.mxu0 0
    %1342 = vmatprep.subr.bf16.mxu0 0
    %1343 = vmatpush1.bf16.xpose.msra.mxu0 0
    %1344 = vmatprep.subr.bf16.mxu0 0
    %1345 = vmatpush1.bf16.xpose.msra.mxu0 0
    %1346 = vmatprep.subr.bf16.mxu0 0
    %1347 = vmatpush1.bf16.xpose.msra.mxu0 0
    %1348 = vmatprep.subr.bf16.mxu0 0
    %1349 = vmatpush1.bf16.xpose.msra.mxu0 0
    %1350 = vmatprep.subr.bf16.mxu0 0
    %1351 = vmatpush1.bf16.xpose.msra.mxu0 0
    %1352 = vmatprep.subr.bf16.mxu0 0
    %1353 = vmatpush1.bf16.xpose.msra.mxu0 0
    %1354 = vmatprep.subr.bf16.mxu0 0
    %1355 = vmatpush1.bf16.xpose.msra.mxu0 0
    %1356 = vmatprep.subr.bf16.mxu0 0
    %1357 = vmatpush1.bf16.xpose.msra.mxu0 0
    %1358 = vmatprep.subr.bf16.mxu0 0
    %1359 = vmatpush1.bf16.xpose.msra.mxu0 0
    %1360 = vmatprep.subr.bf16.mxu0 0
    %1361 = vmatpush1.bf16.xpose.msra.mxu0 0
    %1362 = vmatprep.subr.bf16.mxu0 0
    %1363 = vmatpush1.bf16.xpose.msra.mxu0 0
    %1364 = vmatprep.subr.bf16.mxu0 0
    %1365 = vmatpush1.bf16.xpose.msra.mxu0 0
    %1366 = vmatprep.subr.bf16.mxu0 0
    %1367 = vmatpush1.bf16.xpose.msra.mxu0 0
    %1368 = vmatprep.subr.bf16.mxu0 0
    %1369 = vmatpush1.bf16.xpose.msra.mxu0 0
    %1370 = vmatprep.mubr.bf16.mxu0 0
    %1371 = vmatmul.mubr.bf16.gmra.mrb[0].mxu0 %v1333
    %v1372 = vpop.f32.mrb[0].mxu0
    %v1373 = vadd.f32 %v641, %v1372
    %v1374 = vpop.f32.mrb[0].mxu0
    %v1375 = vpop.f32.mrb[0].mxu0
    %v1376 = vpop.f32.mrb[0].mxu0
    %1377 = vdwg.mxu0
    %vm1378 = vcmask 64512
    %v1379 = vsel %vm1378, %v683, -inf
    %1380 = vmax.xlane.f32.xlu0 %v1379
    %v1381 = vpop.xlane.xlu0 %1380
    %v1382 = vsel %vm1378, %v729, -inf
    %1383 = vmax.xlane.f32.xlu0 %v1382
    %v1384 = vpop.xlane.xlu0 %1383
    %v1385 = vsel %vm1378, %v775, -inf
    %1386 = vmax.xlane.f32.xlu0 %v1385
    %v1387 = vpop.xlane.xlu0 %1386
    %v1388 = vsel %vm1378, %v821, -inf
    %1389 = vmax.xlane.f32.xlu0 %v1388
    %v1390 = vpop.xlane.xlu0 %1389
    %v1391 = vsel %vm1378, %v867, -inf
    %1392 = vmax.xlane.f32.xlu0 %v1391
    %v1393 = vpop.xlane.xlu0 %1392
    %v1394 = vsel %vm1378, %v913, -inf
    %1395 = vmax.xlane.f32.xlu0 %v1394
    %v1396 = vpop.xlane.xlu0 %1395
    %v1397 = vsel %vm1378, %v959, -inf
    %1398 = vmax.xlane.f32.xlu0 %v1397
    %v1399 = vpop.xlane.xlu0 %1398
    %v1400 = vsel %vm1378, %v1005, -inf
    %1401 = vmax.xlane.f32.xlu0 %v1400
    %v1402 = vpop.xlane.xlu0 %1401
    %v1403 = vsel %vm1378, %v1051, -inf
    %1404 = vmax.xlane.f32.xlu0 %v1403
    %v1405 = vpop.xlane.xlu0 %1404
    %v1406 = vsel %vm1378, %v1097, -inf
    %1407 = vmax.xlane.f32.xlu0 %v1406
    %v1408 = vpop.xlane.xlu0 %1407
    %v1409 = vsel %vm1378, %v1143, -inf
    %1410 = vmax.xlane.f32.xlu0 %v1409
    %v1411 = vpop.xlane.xlu0 %1410
    %v1412 = vsel %vm1378, %v1189, -inf
    %1413 = vmax.xlane.f32.xlu0 %v1412
    %v1414 = vpop.xlane.xlu0 %1413
    %v1415 = vsel %vm1378, %v1235, -inf
    %1416 = vmax.xlane.f32.xlu0 %v1415
    %v1417 = vpop.xlane.xlu0 %1416
    %v1418 = vsel %vm1378, %v1281, -inf
    %1419 = vmax.xlane.f32.xlu0 %v1418
    %v1420 = vpop.xlane.xlu0 %1419
    %v1421 = vsel %vm1378, %v1327, -inf
    %1422 = vmax.xlane.f32.xlu0 %v1421
    %v1423 = vpop.xlane.xlu0 %1422
    %v1424 = vsel %vm1378, %v1373, -inf
    %1425 = vmax.xlane.f32.xlu0 %v1424
    %v1426 = vpop.xlane.xlu0 %1425
    %v1427 = vsub.f32 %v683, %v1381
    %v1428 = vsub.f32 %v729, %v1384
    %v1429 = vsub.f32 %v775, %v1387
    %v1430 = vsub.f32 %v821, %v1390
    %v1431 = vsub.f32 %v867, %v1393
    %v1432 = vsub.f32 %v913, %v1396
    %v1433 = vsub.f32 %v959, %v1399
    %v1434 = vsub.f32 %v1005, %v1402
    %v1435 = vsub.f32 %v1051, %v1405
    %v1436 = vsub.f32 %v1097, %v1408
    %v1437 = vsub.f32 %v1143, %v1411
    %v1438 = vsub.f32 %v1189, %v1414
    %v1439 = vsub.f32 %v1235, %v1417
    %v1440 = vsub.f32 %v1281, %v1420
    %v1441 = vsub.f32 %v1327, %v1423
    %v1442 = vsub.f32 %v1373, %v1426
    %v1443 = vmul.f32 %v1427, 1.442695
    %v1444 = vpow.pop %v1443
    %v1445 = vmul.f32 %v1428, 1.442695
    %v1446 = vpow.pop %v1445
    %v1447 = vmul.f32 %v1429, 1.442695
    %v1448 = vpow.pop %v1447
    %v1449 = vmul.f32 %v1430, 1.442695
    %v1450 = vpow.pop %v1449
    %v1451 = vmul.f32 %v1431, 1.442695
    %v1452 = vpow.pop %v1451
    %v1453 = vmul.f32 %v1432, 1.442695
    %v1454 = vpow.pop %v1453
    %v1455 = vmul.f32 %v1433, 1.442695
    %v1456 = vpow.pop %v1455
    %v1457 = vmul.f32 %v1434, 1.442695
    %v1458 = vpow.pop %v1457
    %v1459 = vmul.f32 %v1435, 1.442695
    %v1460 = vpow.pop %v1459
    %v1461 = vmul.f32 %v1436, 1.442695
    %v1462 = vpow.pop %v1461
    %v1463 = vmul.f32 %v1437, 1.442695
    %v1464 = vpow.pop %v1463
    %v1465 = vmul.f32 %v1438, 1.442695
    %v1466 = vpow.pop %v1465
    %v1467 = vmul.f32 %v1439, 1.442695
    %v1468 = vpow.pop %v1467
    %v1469 = vmul.f32 %v1440, 1.442695
    %v1470 = vpow.pop %v1469
    %v1471 = vmul.f32 %v1441, 1.442695
    %v1472 = vpow.pop %v1471
    %v1473 = vmul.f32 %v1442, 1.442695
    %v1474 = vpow.pop %v1473
    %v1475 = vsel %vm1378, %v1444, 0.0
    %1476 = vadd.xlane.f32.xlu0 %v1475
    %v1477 = vpop.xlane.xlu0 %1476
    %v1478 = vsel %vm1378, %v1446, 0.0
    %1479 = vadd.xlane.f32.xlu0 %v1478
    %v1480 = vpop.xlane.xlu0 %1479
    %v1481 = vsel %vm1378, %v1448, 0.0
    %1482 = vadd.xlane.f32.xlu0 %v1481
    %v1483 = vpop.xlane.xlu0 %1482
    %v1484 = vsel %vm1378, %v1450, 0.0
    %1485 = vadd.xlane.f32.xlu0 %v1484
    %v1486 = vpop.xlane.xlu0 %1485
    %v1487 = vsel %vm1378, %v1452, 0.0
    %1488 = vadd.xlane.f32.xlu0 %v1487
    %v1489 = vpop.xlane.xlu0 %1488
    %v1490 = vsel %vm1378, %v1454, 0.0
    %1491 = vadd.xlane.f32.xlu0 %v1490
    %v1492 = vpop.xlane.xlu0 %1491
    %v1493 = vsel %vm1378, %v1456, 0.0
    %1494 = vadd.xlane.f32.xlu0 %v1493
    %v1495 = vpop.xlane.xlu0 %1494
    %v1496 = vsel %vm1378, %v1458, 0.0
    %1497 = vadd.xlane.f32.xlu0 %v1496
    %v1498 = vpop.xlane.xlu0 %1497
    %v1499 = vsel %vm1378, %v1460, 0.0
    %1500 = vadd.xlane.f32.xlu0 %v1499
    %v1501 = vpop.xlane.xlu0 %1500
    %v1502 = vsel %vm1378, %v1462, 0.0
    %1503 = vadd.xlane.f32.xlu0 %v1502
    %v1504 = vpop.xlane.xlu0 %1503
    %v1505 = vsel %vm1378, %v1464, 0.0
    %1506 = vadd.xlane.f32.xlu0 %v1505
    %v1507 = vpop.xlane.xlu0 %1506
    %v1508 = vsel %vm1378, %v1466, 0.0
    %1509 = vadd.xlane.f32.xlu0 %v1508
    %v1510 = vpop.xlane.xlu0 %1509
    %v1511 = vsel %vm1378, %v1468, 0.0
    %1512 = vadd.xlane.f32.xlu0 %v1511
    %v1513 = vpop.xlane.xlu0 %1512
    %v1514 = vsel %vm1378, %v1470, 0.0
    %1515 = vadd.xlane.f32.xlu0 %v1514
    %v1516 = vpop.xlane.xlu0 %1515
    %v1517 = vsel %vm1378, %v1472, 0.0
    %1518 = vadd.xlane.f32.xlu0 %v1517
    %v1519 = vpop.xlane.xlu0 %1518
    %v1520 = vsel %vm1378, %v1474, 0.0
    %1521 = vadd.xlane.f32.xlu0 %v1520
    %v1522 = vpop.xlane.xlu0 %1521
    %v1523 = vrcp.pop %v1477
    %v1524 = vmul.f32 %v1444, %v1523
    %v1525 = vrcp.pop %v1480
    %v1526 = vmul.f32 %v1446, %v1525
    %v1527 = vrcp.pop %v1483
    %v1528 = vmul.f32 %v1448, %v1527
    %v1529 = vrcp.pop %v1486
    %v1530 = vmul.f32 %v1450, %v1529
    %v1531 = vrcp.pop %v1489
    %v1532 = vmul.f32 %v1452, %v1531
    %v1533 = vrcp.pop %v1492
    %v1534 = vmul.f32 %v1454, %v1533
    %v1535 = vrcp.pop %v1495
    %v1536 = vmul.f32 %v1456, %v1535
    %v1537 = vrcp.pop %v1498
    %v1538 = vmul.f32 %v1458, %v1537
    %v1539 = vrcp.pop %v1501
    %v1540 = vmul.f32 %v1460, %v1539
    %v1541 = vrcp.pop %v1504
    %v1542 = vmul.f32 %v1462, %v1541
    %v1543 = vrcp.pop %v1507
    %v1544 = vmul.f32 %v1464, %v1543
    %v1545 = vrcp.pop %v1510
    %v1546 = vmul.f32 %v1466, %v1545
    %v1547 = vrcp.pop %v1513
    %v1548 = vmul.f32 %v1468, %v1547
    %v1549 = vrcp.pop %v1516
    %v1550 = vmul.f32 %v1470, %v1549
    %v1551 = vrcp.pop %v1519
    %v1552 = vmul.f32 %v1472, %v1551
    %v1553 = vrcp.pop %v1522
    %v1554 = vmul.f32 %v1474, %v1553
    %1555 = vst.msk [vmem:[#allocation29] sm:$0xff] %vm1378, %v1524
    %1556 = vst.msk [vmem:[#allocation29 + $0x8] sm:$0xff] %vm1378, %v1526
    %1557 = vst.msk [vmem:[#allocation29 + $0x10] sm:$0xff] %vm1378, %v1528
    %1558 = vst.msk [vmem:[#allocation29 + $0x18] sm:$0xff] %vm1378, %v1530
    %1559 = vst.msk [vmem:[#allocation29 + $0x20] sm:$0xff] %vm1378, %v1532
    %1560 = vst.msk [vmem:[#allocation29 + $0x28] sm:$0xff] %vm1378, %v1534
    %1561 = vst.msk [vmem:[#allocation29 + $0x30] sm:$0xff] %vm1378, %v1536
    %1562 = vst.msk [vmem:[#allocation29 + $0x38] sm:$0xff] %vm1378, %v1538
    %1563 = vst.msk [vmem:[#allocation29 + $0x40] sm:$0xff] %vm1378, %v1540
    %1564 = vst.msk [vmem:[#allocation29 + $0x48] sm:$0xff] %vm1378, %v1542
    %1565 = vst.msk [vmem:[#allocation29 + $0x50] sm:$0xff] %vm1378, %v1544
    %1566 = vst.msk [vmem:[#allocation29 + $0x58] sm:$0xff] %vm1378, %v1546
    %1567 = vst.msk [vmem:[#allocation29 + $0x60] sm:$0xff] %vm1378, %v1548
    %1568 = vst.msk [vmem:[#allocation29 + $0x68] sm:$0xff] %vm1378, %v1550
    %1569 = vst.msk [vmem:[#allocation29 + $0x70] sm:$0xff] %vm1378, %v1552
    %1570 = vst.msk [vmem:[#allocation29 + $0x78] sm:$0xff] %vm1378, %v1554
    %v1571 = vpack.c.bf16 %v1524, %v1524
    %v1572 = vpack.c.bf16 %v1526, %v1526
    %v1573 = vpack.c.bf16 %v1528, %v1528
    %v1574 = vpack.c.bf16 %v1530, %v1530
    %v1575 = vpack.c.bf16 %v1532, %v1532
    %v1576 = vpack.c.bf16 %v1534, %v1534
    %v1577 = vpack.c.bf16 %v1536, %v1536
    %v1578 = vpack.c.bf16 %v1538, %v1538
    %v1579 = vpack.c.bf16 %v1540, %v1540
    %v1580 = vpack.c.bf16 %v1542, %v1542
    %v1581 = vpack.c.bf16 %v1544, %v1544
    %v1582 = vpack.c.bf16 %v1546, %v1546
    %v1583 = vpack.c.bf16 %v1548, %v1548
    %v1584 = vpack.c.bf16 %v1550, %v1550
    %v1585 = vpack.c.bf16 %v1552, %v1552
    %v1586 = vpack.c.bf16 %v1554, %v1554
    %v1588 = vsel %vm1378, %v1571, 0
    %vm1590 = vcmask 1043456
    %v1592 = vsel %vm1590, %v620, 0
    %1594 = vmatprep.subr.bf16.mxu0 0
    %1595 = vmatpush1.bf16.msra.mxu0 %v1592
    %1596 = vmatprep.subr.bf16.mxu0 0
    %1597 = vmatpush1.bf16.msra.mxu0 0
    %1598 = vmatprep.subr.bf16.mxu0 0
    %1599 = vmatpush1.bf16.msra.mxu0 0
    %1600 = vmatprep.subr.bf16.mxu0 0
    %1601 = vmatpush1.bf16.msra.mxu0 0
    %1602 = vmatprep.subr.bf16.mxu0 0
    %1603 = vmatpush1.bf16.msra.mxu0 0
    %1604 = vmatprep.subr.bf16.mxu0 0
    %1605 = vmatpush1.bf16.msra.mxu0 0
    %1606 = vmatprep.subr.bf16.mxu0 0
    %1607 = vmatpush1.bf16.msra.mxu0 0
    %1608 = vmatprep.subr.bf16.mxu0 0
    %1609 = vmatpush1.bf16.msra.mxu0 0
    %1610 = vmatprep.subr.bf16.mxu0 0
    %1611 = vmatpush1.bf16.msra.mxu0 0
    %1612 = vmatprep.subr.bf16.mxu0 0
    %1613 = vmatpush1.bf16.msra.mxu0 0
    %1614 = vmatprep.subr.bf16.mxu0 0
    %1615 = vmatpush1.bf16.msra.mxu0 0
    %1616 = vmatprep.subr.bf16.mxu0 0
    %1617 = vmatpush1.bf16.msra.mxu0 0
    %1618 = vmatprep.subr.bf16.mxu0 0
    %1619 = vmatpush1.bf16.msra.mxu0 0
    %1620 = vmatprep.subr.bf16.mxu0 0
    %1621 = vmatpush1.bf16.msra.mxu0 0
    %1622 = vmatprep.subr.bf16.mxu0 0
    %1623 = vmatpush1.bf16.msra.mxu0 0
    %1624 = vmatprep.subr.bf16.mxu0 0
    %1625 = vmatpush1.bf16.msra.mxu0 0
    %1626 = vmatprep.mubr.bf16.mxu0 0
    %1627 = vmatmul.mubr.bf16.gmra.mrb[0].mxu0 %v1588
    %v1628 = vpop.f32.mrb[0].mxu0
    %v1629 = vadd.f32 0.0, %v1628
    %v1630 = vpop.f32.mrb[0].mxu0
    %v1631 = vpop.f32.mrb[0].mxu0
    %v1632 = vpop.f32.mrb[0].mxu0
    %1633 = vdwg.mxu0
    %v1635 = vsel %vm1378, %v1572, 0
    %v1638 = vsel %vm1590, %v621, 0
    %1640 = vmatprep.subr.bf16.mxu0 0
    %1641 = vmatpush1.bf16.msra.mxu0 %v1638
    %1642 = vmatprep.subr.bf16.mxu0 0
    %1643 = vmatpush1.bf16.msra.mxu0 0
    %1644 = vmatprep.subr.bf16.mxu0 0
    %1645 = vmatpush1.bf16.msra.mxu0 0
    %1646 = vmatprep.subr.bf16.mxu0 0
    %1647 = vmatpush1.bf16.msra.mxu0 0
    %1648 = vmatprep.subr.bf16.mxu0 0
    %1649 = vmatpush1.bf16.msra.mxu0 0
    %1650 = vmatprep.subr.bf16.mxu0 0
    %1651 = vmatpush1.bf16.msra.mxu0 0
    %1652 = vmatprep.subr.bf16.mxu0 0
    %1653 = vmatpush1.bf16.msra.mxu0 0
    %1654 = vmatprep.subr.bf16.mxu0 0
    %1655 = vmatpush1.bf16.msra.mxu0 0
    %1656 = vmatprep.subr.bf16.mxu0 0
    %1657 = vmatpush1.bf16.msra.mxu0 0
    %1658 = vmatprep.subr.bf16.mxu0 0
    %1659 = vmatpush1.bf16.msra.mxu0 0
    %1660 = vmatprep.subr.bf16.mxu0 0
    %1661 = vmatpush1.bf16.msra.mxu0 0
    %1662 = vmatprep.subr.bf16.mxu0 0
    %1663 = vmatpush1.bf16.msra.mxu0 0
    %1664 = vmatprep.subr.bf16.mxu0 0
    %1665 = vmatpush1.bf16.msra.mxu0 0
    %1666 = vmatprep.subr.bf16.mxu0 0
    %1667 = vmatpush1.bf16.msra.mxu0 0
    %1668 = vmatprep.subr.bf16.mxu0 0
    %1669 = vmatpush1.bf16.msra.mxu0 0
    %1670 = vmatprep.subr.bf16.mxu0 0
    %1671 = vmatpush1.bf16.msra.mxu0 0
    %1672 = vmatprep.mubr.bf16.mxu0 0
    %1673 = vmatmul.mubr.bf16.gmra.mrb[0].mxu0 %v1635
    %v1674 = vpop.f32.mrb[0].mxu0
    %v1675 = vadd.f32 0.0, %v1674
    %v1676 = vpop.f32.mrb[0].mxu0
    %v1677 = vpop.f32.mrb[0].mxu0
    %v1678 = vpop.f32.mrb[0].mxu0
    %1679 = vdwg.mxu0
    %v1681 = vsel %vm1378, %v1573, 0
    %v1684 = vsel %vm1590, %v622, 0
    %1686 = vmatprep.subr.bf16.mxu0 0
    %1687 = vmatpush1.bf16.msra.mxu0 %v1684
    %1688 = vmatprep.subr.bf16.mxu0 0
    %1689 = vmatpush1.bf16.msra.mxu0 0
    %1690 = vmatprep.subr.bf16.mxu0 0
    %1691 = vmatpush1.bf16.msra.mxu0 0
    %1692 = vmatprep.subr.bf16.mxu0 0
    %1693 = vmatpush1.bf16.msra.mxu0 0
    %1694 = vmatprep.subr.bf16.mxu0 0
    %1695 = vmatpush1.bf16.msra.mxu0 0
    %1696 = vmatprep.subr.bf16.mxu0 0
    %1697 = vmatpush1.bf16.msra.mxu0 0
    %1698 = vmatprep.subr.bf16.mxu0 0
    %1699 = vmatpush1.bf16.msra.mxu0 0
    %1700 = vmatprep.subr.bf16.mxu0 0
    %1701 = vmatpush1.bf16.msra.mxu0 0
    %1702 = vmatprep.subr.bf16.mxu0 0
    %1703 = vmatpush1.bf16.msra.mxu0 0
    %1704 = vmatprep.subr.bf16.mxu0 0
    %1705 = vmatpush1.bf16.msra.mxu0 0
    %1706 = vmatprep.subr.bf16.mxu0 0
    %1707 = vmatpush1.bf16.msra.mxu0 0
    %1708 = vmatprep.subr.bf16.mxu0 0
    %1709 = vmatpush1.bf16.msra.mxu0 0
    %1710 = vmatprep.subr.bf16.mxu0 0
    %1711 = vmatpush1.bf16.msra.mxu0 0
    %1712 = vmatprep.subr.bf16.mxu0 0
    %1713 = vmatpush1.bf16.msra.mxu0 0
    %1714 = vmatprep.subr.bf16.mxu0 0
    %1715 = vmatpush1.bf16.msra.mxu0 0
    %1716 = vmatprep.subr.bf16.mxu0 0
    %1717 = vmatpush1.bf16.msra.mxu0 0
    %1718 = vmatprep.mubr.bf16.mxu0 0
    %1719 = vmatmul.mubr.bf16.gmra.mrb[0].mxu0 %v1681
    %v1720 = vpop.f32.mrb[0].mxu0
    %v1721 = vadd.f32 0.0, %v1720
    %v1722 = vpop.f32.mrb[0].mxu0
    %v1723 = vpop.f32.mrb[0].mxu0
    %v1724 = vpop.f32.mrb[0].mxu0
    %1725 = vdwg.mxu0
    %v1727 = vsel %vm1378, %v1574, 0
    %v1730 = vsel %vm1590, %v623, 0
    %1732 = vmatprep.subr.bf16.mxu0 0
    %1733 = vmatpush1.bf16.msra.mxu0 %v1730
    %1734 = vmatprep.subr.bf16.mxu0 0
    %1735 = vmatpush1.bf16.msra.mxu0 0
    %1736 = vmatprep.subr.bf16.mxu0 0
    %1737 = vmatpush1.bf16.msra.mxu0 0
    %1738 = vmatprep.subr.bf16.mxu0 0
    %1739 = vmatpush1.bf16.msra.mxu0 0
    %1740 = vmatprep.subr.bf16.mxu0 0
    %1741 = vmatpush1.bf16.msra.mxu0 0
    %1742 = vmatprep.subr.bf16.mxu0 0
    %1743 = vmatpush1.bf16.msra.mxu0 0
    %1744 = vmatprep.subr.bf16.mxu0 0
    %1745 = vmatpush1.bf16.msra.mxu0 0
    %1746 = vmatprep.subr.bf16.mxu0 0
    %1747 = vmatpush1.bf16.msra.mxu0 0
    %1748 = vmatprep.subr.bf16.mxu0 0
    %1749 = vmatpush1.bf16.msra.mxu0 0
    %1750 = vmatprep.subr.bf16.mxu0 0
    %1751 = vmatpush1.bf16.msra.mxu0 0
    %1752 = vmatprep.subr.bf16.mxu0 0
    %1753 = vmatpush1.bf16.msra.mxu0 0
    %1754 = vmatprep.subr.bf16.mxu0 0
    %1755 = vmatpush1.bf16.msra.mxu0 0
    %1756 = vmatprep.subr.bf16.mxu0 0
    %1757 = vmatpush1.bf16.msra.mxu0 0
    %1758 = vmatprep.subr.bf16.mxu0 0
    %1759 = vmatpush1.bf16.msra.mxu0 0
    %1760 = vmatprep.subr.bf16.mxu0 0
    %1761 = vmatpush1.bf16.msra.mxu0 0
    %1762 = vmatprep.subr.bf16.mxu0 0
    %1763 = vmatpush1.bf16.msra.mxu0 0
    %1764 = vmatprep.mubr.bf16.mxu0 0
    %1765 = vmatmul.mubr.bf16.gmra.mrb[0].mxu0 %v1727
    %v1766 = vpop.f32.mrb[0].mxu0
    %v1767 = vadd.f32 0.0, %v1766
    %v1768 = vpop.f32.mrb[0].mxu0
    %v1769 = vpop.f32.mrb[0].mxu0
    %v1770 = vpop.f32.mrb[0].mxu0
    %1771 = vdwg.mxu0
    %v1773 = vsel %vm1378, %v1575, 0
    %v1776 = vsel %vm1590, %v624, 0
    %1778 = vmatprep.subr.bf16.mxu0 0
    %1779 = vmatpush1.bf16.msra.mxu0 %v1776
    %1780 = vmatprep.subr.bf16.mxu0 0
    %1781 = vmatpush1.bf16.msra.mxu0 0
    %1782 = vmatprep.subr.bf16.mxu0 0
    %1783 = vmatpush1.bf16.msra.mxu0 0
    %1784 = vmatprep.subr.bf16.mxu0 0
    %1785 = vmatpush1.bf16.msra.mxu0 0
    %1786 = vmatprep.subr.bf16.mxu0 0
    %1787 = vmatpush1.bf16.msra.mxu0 0
    %1788 = vmatprep.subr.bf16.mxu0 0
    %1789 = vmatpush1.bf16.msra.mxu0 0
    %1790 = vmatprep.subr.bf16.mxu0 0
    %1791 = vmatpush1.bf16.msra.mxu0 0
    %1792 = vmatprep.subr.bf16.mxu0 0
    %1793 = vmatpush1.bf16.msra.mxu0 0
    %1794 = vmatprep.subr.bf16.mxu0 0
    %1795 = vmatpush1.bf16.msra.mxu0 0
    %1796 = vmatprep.subr.bf16.mxu0 0
    %1797 = vmatpush1.bf16.msra.mxu0 0
    %1798 = vmatprep.subr.bf16.mxu0 0
    %1799 = vmatpush1.bf16.msra.mxu0 0
    %1800 = vmatprep.subr.bf16.mxu0 0
    %1801 = vmatpush1.bf16.msra.mxu0 0
    %1802 = vmatprep.subr.bf16.mxu0 0
    %1803 = vmatpush1.bf16.msra.mxu0 0
    %1804 = vmatprep.subr.bf16.mxu0 0
    %1805 = vmatpush1.bf16.msra.mxu0 0
    %1806 = vmatprep.subr.bf16.mxu0 0
    %1807 = vmatpush1.bf16.msra.mxu0 0
    %1808 = vmatprep.subr.bf16.mxu0 0
    %1809 = vmatpush1.bf16.msra.mxu0 0
    %1810 = vmatprep.mubr.bf16.mxu0 0
    %1811 = vmatmul.mubr.bf16.gmra.mrb[0].mxu0 %v1773
    %v1812 = vpop.f32.mrb[0].mxu0
    %v1813 = vadd.f32 0.0, %v1812
    %v1814 = vpop.f32.mrb[0].mxu0
    %v1815 = vpop.f32.mrb[0].mxu0
    %v1816 = vpop.f32.mrb[0].mxu0
    %1817 = vdwg.mxu0
    %v1819 = vsel %vm1378, %v1576, 0
    %v1822 = vsel %vm1590, %v625, 0
    %1824 = vmatprep.subr.bf16.mxu0 0
    %1825 = vmatpush1.bf16.msra.mxu0 %v1822
    %1826 = vmatprep.subr.bf16.mxu0 0
    %1827 = vmatpush1.bf16.msra.mxu0 0
    %1828 = vmatprep.subr.bf16.mxu0 0
    %1829 = vmatpush1.bf16.msra.mxu0 0
    %1830 = vmatprep.subr.bf16.mxu0 0
    %1831 = vmatpush1.bf16.msra.mxu0 0
    %1832 = vmatprep.subr.bf16.mxu0 0
    %1833 = vmatpush1.bf16.msra.mxu0 0
    %1834 = vmatprep.subr.bf16.mxu0 0
    %1835 = vmatpush1.bf16.msra.mxu0 0
    %1836 = vmatprep.subr.bf16.mxu0 0
    %1837 = vmatpush1.bf16.msra.mxu0 0
    %1838 = vmatprep.subr.bf16.mxu0 0
    %1839 = vmatpush1.bf16.msra.mxu0 0
    %1840 = vmatprep.subr.bf16.mxu0 0
    %1841 = vmatpush1.bf16.msra.mxu0 0
    %1842 = vmatprep.subr.bf16.mxu0 0
    %1843 = vmatpush1.bf16.msra.mxu0 0
    %1844 = vmatprep.subr.bf16.mxu0 0
    %1845 = vmatpush1.bf16.msra.mxu0 0
    %1846 = vmatprep.subr.bf16.mxu0 0
    %1847 = vmatpush1.bf16.msra.mxu0 0
    %1848 = vmatprep.subr.bf16.mxu0 0
    %1849 = vmatpush1.bf16.msra.mxu0 0
    %1850 = vmatprep.subr.bf16.mxu0 0
    %1851 = vmatpush1.bf16.msra.mxu0 0
    %1852 = vmatprep.subr.bf16.mxu0 0
    %1853 = vmatpush1.bf16.msra.mxu0 0
    %1854 = vmatprep.subr.bf16.mxu0 0
    %1855 = vmatpush1.bf16.msra.mxu0 0
    %1856 = vmatprep.mubr.bf16.mxu0 0
    %1857 = vmatmul.mubr.bf16.gmra.mrb[0].mxu0 %v1819
    %v1858 = vpop.f32.mrb[0].mxu0
    %v1859 = vadd.f32 0.0, %v1858
    %v1860 = vpop.f32.mrb[0].mxu0
    %v1861 = vpop.f32.mrb[0].mxu0
    %v1862 = vpop.f32.mrb[0].mxu0
    %1863 = vdwg.mxu0
    %v1865 = vsel %vm1378, %v1577, 0
    %v1868 = vsel %vm1590, %v626, 0
    %1870 = vmatprep.subr.bf16.mxu0 0
    %1871 = vmatpush1.bf16.msra.mxu0 %v1868
    %1872 = vmatprep.subr.bf16.mxu0 0
    %1873 = vmatpush1.bf16.msra.mxu0 0
    %1874 = vmatprep.subr.bf16.mxu0 0
    %1875 = vmatpush1.bf16.msra.mxu0 0
    %1876 = vmatprep.subr.bf16.mxu0 0
    %1877 = vmatpush1.bf16.msra.mxu0 0
    %1878 = vmatprep.subr.bf16.mxu0 0
    %1879 = vmatpush1.bf16.msra.mxu0 0
    %1880 = vmatprep.subr.bf16.mxu0 0
    %1881 = vmatpush1.bf16.msra.mxu0 0
    %1882 = vmatprep.subr.bf16.mxu0 0
    %1883 = vmatpush1.bf16.msra.mxu0 0
    %1884 = vmatprep.subr.bf16.mxu0 0
    %1885 = vmatpush1.bf16.msra.mxu0 0
    %1886 = vmatprep.subr.bf16.mxu0 0
    %1887 = vmatpush1.bf16.msra.mxu0 0
    %1888 = vmatprep.subr.bf16.mxu0 0
    %1889 = vmatpush1.bf16.msra.mxu0 0
    %1890 = vmatprep.subr.bf16.mxu0 0
    %1891 = vmatpush1.bf16.msra.mxu0 0
    %1892 = vmatprep.subr.bf16.mxu0 0
    %1893 = vmatpush1.bf16.msra.mxu0 0
    %1894 = vmatprep.subr.bf16.mxu0 0
    %1895 = vmatpush1.bf16.msra.mxu0 0
    %1896 = vmatprep.subr.bf16.mxu0 0
    %1897 = vmatpush1.bf16.msra.mxu0 0
    %1898 = vmatprep.subr.bf16.mxu0 0
    %1899 = vmatpush1.bf16.msra.mxu0 0
    %1900 = vmatprep.subr.bf16.mxu0 0
    %1901 = vmatpush1.bf16.msra.mxu0 0
    %1902 = vmatprep.mubr.bf16.mxu0 0
    %1903 = vmatmul.mubr.bf16.gmra.mrb[0].mxu0 %v1865
    %v1904 = vpop.f32.mrb[0].mxu0
    %v1905 = vadd.f32 0.0, %v1904
    %v1906 = vpop.f32.mrb[0].mxu0
    %v1907 = vpop.f32.mrb[0].mxu0
    %v1908 = vpop.f32.mrb[0].mxu0
    %1909 = vdwg.mxu0
    %v1911 = vsel %vm1378, %v1578, 0
    %v1914 = vsel %vm1590, %v627, 0
    %1916 = vmatprep.subr.bf16.mxu0 0
    %1917 = vmatpush1.bf16.msra.mxu0 %v1914
    %1918 = vmatprep.subr.bf16.mxu0 0
    %1919 = vmatpush1.bf16.msra.mxu0 0
    %1920 = vmatprep.subr.bf16.mxu0 0
    %1921 = vmatpush1.bf16.msra.mxu0 0
    %1922 = vmatprep.subr.bf16.mxu0 0
    %1923 = vmatpush1.bf16.msra.mxu0 0
    %1924 = vmatprep.subr.bf16.mxu0 0
    %1925 = vmatpush1.bf16.msra.mxu0 0
    %1926 = vmatprep.subr.bf16.mxu0 0
    %1927 = vmatpush1.bf16.msra.mxu0 0
    %1928 = vmatprep.subr.bf16.mxu0 0
    %1929 = vmatpush1.bf16.msra.mxu0 0
    %1930 = vmatprep.subr.bf16.mxu0 0
    %1931 = vmatpush1.bf16.msra.mxu0 0
    %1932 = vmatprep.subr.bf16.mxu0 0
    %1933 = vmatpush1.bf16.msra.mxu0 0
    %1934 = vmatprep.subr.bf16.mxu0 0
    %1935 = vmatpush1.bf16.msra.mxu0 0
    %1936 = vmatprep.subr.bf16.mxu0 0
    %1937 = vmatpush1.bf16.msra.mxu0 0
    %1938 = vmatprep.subr.bf16.mxu0 0
    %1939 = vmatpush1.bf16.msra.mxu0 0
    %1940 = vmatprep.subr.bf16.mxu0 0
    %1941 = vmatpush1.bf16.msra.mxu0 0
    %1942 = vmatprep.subr.bf16.mxu0 0
    %1943 = vmatpush1.bf16.msra.mxu0 0
    %1944 = vmatprep.subr.bf16.mxu0 0
    %1945 = vmatpush1.bf16.msra.mxu0 0
    %1946 = vmatprep.subr.bf16.mxu0 0
    %1947 = vmatpush1.bf16.msra.mxu0 0
    %1948 = vmatprep.mubr.bf16.mxu0 0
    %1949 = vmatmul.mubr.bf16.gmra.mrb[0].mxu0 %v1911
    %v1950 = vpop.f32.mrb[0].mxu0
    %v1951 = vadd.f32 0.0, %v1950
    %v1952 = vpop.f32.mrb[0].mxu0
    %v1953 = vpop.f32.mrb[0].mxu0
    %v1954 = vpop.f32.mrb[0].mxu0
    %1955 = vdwg.mxu0
    %v1957 = vsel %vm1378, %v1579, 0
    %v1960 = vsel %vm1590, %v628, 0
    %1962 = vmatprep.subr.bf16.mxu0 0
    %1963 = vmatpush1.bf16.msra.mxu0 %v1960
    %1964 = vmatprep.subr.bf16.mxu0 0
    %1965 = vmatpush1.bf16.msra.mxu0 0
    %1966 = vmatprep.subr.bf16.mxu0 0
    %1967 = vmatpush1.bf16.msra.mxu0 0
    %1968 = vmatprep.subr.bf16.mxu0 0
    %1969 = vmatpush1.bf16.msra.mxu0 0
    %1970 = vmatprep.subr.bf16.mxu0 0
    %1971 = vmatpush1.bf16.msra.mxu0 0
    %1972 = vmatprep.subr.bf16.mxu0 0
    %1973 = vmatpush1.bf16.msra.mxu0 0
    %1974 = vmatprep.subr.bf16.mxu0 0
    %1975 = vmatpush1.bf16.msra.mxu0 0
    %1976 = vmatprep.subr.bf16.mxu0 0
    %1977 = vmatpush1.bf16.msra.mxu0 0
    %1978 = vmatprep.subr.bf16.mxu0 0
    %1979 = vmatpush1.bf16.msra.mxu0 0
    %1980 = vmatprep.subr.bf16.mxu0 0
    %1981 = vmatpush1.bf16.msra.mxu0 0
    %1982 = vmatprep.subr.bf16.mxu0 0
    %1983 = vmatpush1.bf16.msra.mxu0 0
    %1984 = vmatprep.subr.bf16.mxu0 0
    %1985 = vmatpush1.bf16.msra.mxu0 0
    %1986 = vmatprep.subr.bf16.mxu0 0
    %1987 = vmatpush1.bf16.msra.mxu0 0
    %1988 = vmatprep.subr.bf16.mxu0 0
    %1989 = vmatpush1.bf16.msra.mxu0 0
    %1990 = vmatprep.subr.bf16.mxu0 0
    %1991 = vmatpush1.bf16.msra.mxu0 0
    %1992 = vmatprep.subr.bf16.mxu0 0
    %1993 = vmatpush1.bf16.msra.mxu0 0
    %1994 = vmatprep.mubr.bf16.mxu0 0
    %1995 = vmatmul.mubr.bf16.gmra.mrb[0].mxu0 %v1957
    %v1996 = vpop.f32.mrb[0].mxu0
    %v1997 = vadd.f32 0.0, %v1996
    %v1998 = vpop.f32.mrb[0].mxu0
    %v1999 = vpop.f32.mrb[0].mxu0
    %v2000 = vpop.f32.mrb[0].mxu0
    %2001 = vdwg.mxu0
    %v2003 = vsel %vm1378, %v1580, 0
    %v2006 = vsel %vm1590, %v629, 0
    %2008 = vmatprep.subr.bf16.mxu0 0
    %2009 = vmatpush1.bf16.msra.mxu0 %v2006
    %2010 = vmatprep.subr.bf16.mxu0 0
    %2011 = vmatpush1.bf16.msra.mxu0 0
    %2012 = vmatprep.subr.bf16.mxu0 0
    %2013 = vmatpush1.bf16.msra.mxu0 0
    %2014 = vmatprep.subr.bf16.mxu0 0
    %2015 = vmatpush1.bf16.msra.mxu0 0
    %2016 = vmatprep.subr.bf16.mxu0 0
    %2017 = vmatpush1.bf16.msra.mxu0 0
    %2018 = vmatprep.subr.bf16.mxu0 0
    %2019 = vmatpush1.bf16.msra.mxu0 0
    %2020 = vmatprep.subr.bf16.mxu0 0
    %2021 = vmatpush1.bf16.msra.mxu0 0
    %2022 = vmatprep.subr.bf16.mxu0 0
    %2023 = vmatpush1.bf16.msra.mxu0 0
    %2024 = vmatprep.subr.bf16.mxu0 0
    %2025 = vmatpush1.bf16.msra.mxu0 0
    %2026 = vmatprep.subr.bf16.mxu0 0
    %2027 = vmatpush1.bf16.msra.mxu0 0
    %2028 = vmatprep.subr.bf16.mxu0 0
    %2029 = vmatpush1.bf16.msra.mxu0 0
    %2030 = vmatprep.subr.bf16.mxu0 0
    %2031 = vmatpush1.bf16.msra.mxu0 0
    %2032 = vmatprep.subr.bf16.mxu0 0
    %2033 = vmatpush1.bf16.msra.mxu0 0
    %2034 = vmatprep.subr.bf16.mxu0 0
    %2035 = vmatpush1.bf16.msra.mxu0 0
    %2036 = vmatprep.subr.bf16.mxu0 0
    %2037 = vmatpush1.bf16.msra.mxu0 0
    %2038 = vmatprep.subr.bf16.mxu0 0
    %2039 = vmatpush1.bf16.msra.mxu0 0
    %2040 = vmatprep.mubr.bf16.mxu0 0
    %2041 = vmatmul.mubr.bf16.gmra.mrb[0].mxu0 %v2003
    %v2042 = vpop.f32.mrb[0].mxu0
    %v2043 = vadd.f32 0.0, %v2042
    %v2044 = vpop.f32.mrb[0].mxu0
    %v2045 = vpop.f32.mrb[0].mxu0
    %v2046 = vpop.f32.mrb[0].mxu0
    %2047 = vdwg.mxu0
    %v2049 = vsel %vm1378, %v1581, 0
    %v2052 = vsel %vm1590, %v630, 0
    %2054 = vmatprep.subr.bf16.mxu0 0
    %2055 = vmatpush1.bf16.msra.mxu0 %v2052
    %2056 = vmatprep.subr.bf16.mxu0 0
    %2057 = vmatpush1.bf16.msra.mxu0 0
    %2058 = vmatprep.subr.bf16.mxu0 0
    %2059 = vmatpush1.bf16.msra.mxu0 0
    %2060 = vmatprep.subr.bf16.mxu0 0
    %2061 = vmatpush1.bf16.msra.mxu0 0
    %2062 = vmatprep.subr.bf16.mxu0 0
    %2063 = vmatpush1.bf16.msra.mxu0 0
    %2064 = vmatprep.subr.bf16.mxu0 0
    %2065 = vmatpush1.bf16.msra.mxu0 0
    %2066 = vmatprep.subr.bf16.mxu0 0
    %2067 = vmatpush1.bf16.msra.mxu0 0
    %2068 = vmatprep.subr.bf16.mxu0 0
    %2069 = vmatpush1.bf16.msra.mxu0 0
    %2070 = vmatprep.subr.bf16.mxu0 0
    %2071 = vmatpush1.bf16.msra.mxu0 0
    %2072 = vmatprep.subr.bf16.mxu0 0
    %2073 = vmatpush1.bf16.msra.mxu0 0
    %2074 = vmatprep.subr.bf16.mxu0 0
    %2075 = vmatpush1.bf16.msra.mxu0 0
    %2076 = vmatprep.subr.bf16.mxu0 0
    %2077 = vmatpush1.bf16.msra.mxu0 0
    %2078 = vmatprep.subr.bf16.mxu0 0
    %2079 = vmatpush1.bf16.msra.mxu0 0
    %2080 = vmatprep.subr.bf16.mxu0 0
    %2081 = vmatpush1.bf16.msra.mxu0 0
    %2082 = vmatprep.subr.bf16.mxu0 0
    %2083 = vmatpush1.bf16.msra.mxu0 0
    %2084 = vmatprep.subr.bf16.mxu0 0
    %2085 = vmatpush1.bf16.msra.mxu0 0
    %2086 = vmatprep.mubr.bf16.mxu0 0
    %2087 = vmatmul.mubr.bf16.gmra.mrb[0].mxu0 %v2049
    %v2088 = vpop.f32.mrb[0].mxu0
    %v2089 = vadd.f32 0.0, %v2088
    %v2090 = vpop.f32.mrb[0].mxu0
    %v2091 = vpop.f32.mrb[0].mxu0
    %v2092 = vpop.f32.mrb[0].mxu0
    %2093 = vdwg.mxu0
    %v2095 = vsel %vm1378, %v1582, 0
    %v2098 = vsel %vm1590, %v631, 0
    %2100 = vmatprep.subr.bf16.mxu0 0
    %2101 = vmatpush1.bf16.msra.mxu0 %v2098
    %2102 = vmatprep.subr.bf16.mxu0 0
    %2103 = vmatpush1.bf16.msra.mxu0 0
    %2104 = vmatprep.subr.bf16.mxu0 0
    %2105 = vmatpush1.bf16.msra.mxu0 0
    %2106 = vmatprep.subr.bf16.mxu0 0
    %2107 = vmatpush1.bf16.msra.mxu0 0
    %2108 = vmatprep.subr.bf16.mxu0 0
    %2109 = vmatpush1.bf16.msra.mxu0 0
    %2110 = vmatprep.subr.bf16.mxu0 0
    %2111 = vmatpush1.bf16.msra.mxu0 0
    %2112 = vmatprep.subr.bf16.mxu0 0
    %2113 = vmatpush1.bf16.msra.mxu0 0
    %2114 = vmatprep.subr.bf16.mxu0 0
    %2115 = vmatpush1.bf16.msra.mxu0 0
    %2116 = vmatprep.subr.bf16.mxu0 0
    %2117 = vmatpush1.bf16.msra.mxu0 0
    %2118 = vmatprep.subr.bf16.mxu0 0
    %2119 = vmatpush1.bf16.msra.mxu0 0
    %2120 = vmatprep.subr.bf16.mxu0 0
    %2121 = vmatpush1.bf16.msra.mxu0 0
    %2122 = vmatprep.subr.bf16.mxu0 0
    %2123 = vmatpush1.bf16.msra.mxu0 0
    %2124 = vmatprep.subr.bf16.mxu0 0
    %2125 = vmatpush1.bf16.msra.mxu0 0
    %2126 = vmatprep.subr.bf16.mxu0 0
    %2127 = vmatpush1.bf16.msra.mxu0 0
    %2128 = vmatprep.subr.bf16.mxu0 0
    %2129 = vmatpush1.bf16.msra.mxu0 0
    %2130 = vmatprep.subr.bf16.mxu0 0
    %2131 = vmatpush1.bf16.msra.mxu0 0
    %2132 = vmatprep.mubr.bf16.mxu0 0
    %2133 = vmatmul.mubr.bf16.gmra.mrb[0].mxu0 %v2095
    %v2134 = vpop.f32.mrb[0].mxu0
    %v2135 = vadd.f32 0.0, %v2134
    %v2136 = vpop.f32.mrb[0].mxu0
    %v2137 = vpop.f32.mrb[0].mxu0
    %v2138 = vpop.f32.mrb[0].mxu0
    %2139 = vdwg.mxu0
    %v2141 = vsel %vm1378, %v1583, 0
    %v2144 = vsel %vm1590, %v632, 0
    %2146 = vmatprep.subr.bf16.mxu0 0
    %2147 = vmatpush1.bf16.msra.mxu0 %v2144
    %2148 = vmatprep.subr.bf16.mxu0 0
    %2149 = vmatpush1.bf16.msra.mxu0 0
    %2150 = vmatprep.subr.bf16.mxu0 0
    %2151 = vmatpush1.bf16.msra.mxu0 0
    %2152 = vmatprep.subr.bf16.mxu0 0
    %2153 = vmatpush1.bf16.msra.mxu0 0
    %2154 = vmatprep.subr.bf16.mxu0 0
    %2155 = vmatpush1.bf16.msra.mxu0 0
    %2156 = vmatprep.subr.bf16.mxu0 0
    %2157 = vmatpush1.bf16.msra.mxu0 0
    %2158 = vmatprep.subr.bf16.mxu0 0
    %2159 = vmatpush1.bf16.msra.mxu0 0
    %2160 = vmatprep.subr.bf16.mxu0 0
    %2161 = vmatpush1.bf16.msra.mxu0 0
    %2162 = vmatprep.subr.bf16.mxu0 0
    %2163 = vmatpush1.bf16.msra.mxu0 0
    %2164 = vmatprep.subr.bf16.mxu0 0
    %2165 = vmatpush1.bf16.msra.mxu0 0
    %2166 = vmatprep.subr.bf16.mxu0 0
    %2167 = vmatpush1.bf16.msra.mxu0 0
    %2168 = vmatprep.subr.bf16.mxu0 0
    %2169 = vmatpush1.bf16.msra.mxu0 0
    %2170 = vmatprep.subr.bf16.mxu0 0
    %2171 = vmatpush1.bf16.msra.mxu0 0
    %2172 = vmatprep.subr.bf16.mxu0 0
    %2173 = vmatpush1.bf16.msra.mxu0 0
    %2174 = vmatprep.subr.bf16.mxu0 0
    %2175 = vmatpush1.bf16.msra.mxu0 0
    %2176 = vmatprep.subr.bf16.mxu0 0
    %2177 = vmatpush1.bf16.msra.mxu0 0
    %2178 = vmatprep.mubr.bf16.mxu0 0
    %2179 = vmatmul.mubr.bf16.gmra.mrb[0].mxu0 %v2141
    %v2180 = vpop.f32.mrb[0].mxu0
    %v2181 = vadd.f32 0.0, %v2180
    %v2182 = vpop.f32.mrb[0].mxu0
    %v2183 = vpop.f32.mrb[0].mxu0
    %v2184 = vpop.f32.mrb[0].mxu0
    %2185 = vdwg.mxu0
    %v2187 = vsel %vm1378, %v1584, 0
    %v2190 = vsel %vm1590, %v633, 0
    %2192 = vmatprep.subr.bf16.mxu0 0
    %2193 = vmatpush1.bf16.msra.mxu0 %v2190
    %2194 = vmatprep.subr.bf16.mxu0 0
    %2195 = vmatpush1.bf16.msra.mxu0 0
    %2196 = vmatprep.subr.bf16.mxu0 0
    %2197 = vmatpush1.bf16.msra.mxu0 0
    %2198 = vmatprep.subr.bf16.mxu0 0
    %2199 = vmatpush1.bf16.msra.mxu0 0
    %2200 = vmatprep.subr.bf16.mxu0 0
    %2201 = vmatpush1.bf16.msra.mxu0 0
    %2202 = vmatprep.subr.bf16.mxu0 0
    %2203 = vmatpush1.bf16.msra.mxu0 0
    %2204 = vmatprep.subr.bf16.mxu0 0
    %2205 = vmatpush1.bf16.msra.mxu0 0
    %2206 = vmatprep.subr.bf16.mxu0 0
    %2207 = vmatpush1.bf16.msra.mxu0 0
    %2208 = vmatprep.subr.bf16.mxu0 0
    %2209 = vmatpush1.bf16.msra.mxu0 0
    %2210 = vmatprep.subr.bf16.mxu0 0
    %2211 = vmatpush1.bf16.msra.mxu0 0
    %2212 = vmatprep.subr.bf16.mxu0 0
    %2213 = vmatpush1.bf16.msra.mxu0 0
    %2214 = vmatprep.subr.bf16.mxu0 0
    %2215 = vmatpush1.bf16.msra.mxu0 0
    %2216 = vmatprep.subr.bf16.mxu0 0
    %2217 = vmatpush1.bf16.msra.mxu0 0
    %2218 = vmatprep.subr.bf16.mxu0 0
    %2219 = vmatpush1.bf16.msra.mxu0 0
    %2220 = vmatprep.subr.bf16.mxu0 0
    %2221 = vmatpush1.bf16.msra.mxu0 0
    %2222 = vmatprep.subr.bf16.mxu0 0
    %2223 = vmatpush1.bf16.msra.mxu0 0
    %2224 = vmatprep.mubr.bf16.mxu0 0
    %2225 = vmatmul.mubr.bf16.gmra.mrb[0].mxu0 %v2187
    %v2226 = vpop.f32.mrb[0].mxu0
    %v2227 = vadd.f32 0.0, %v2226
    %v2228 = vpop.f32.mrb[0].mxu0
    %v2229 = vpop.f32.mrb[0].mxu0
    %v2230 = vpop.f32.mrb[0].mxu0
    %2231 = vdwg.mxu0
    %v2233 = vsel %vm1378, %v1585, 0
    %v2236 = vsel %vm1590, %v634, 0
    %2238 = vmatprep.subr.bf16.mxu0 0
    %2239 = vmatpush1.bf16.msra.mxu0 %v2236
    %2240 = vmatprep.subr.bf16.mxu0 0
    %2241 = vmatpush1.bf16.msra.mxu0 0
    %2242 = vmatprep.subr.bf16.mxu0 0
    %2243 = vmatpush1.bf16.msra.mxu0 0
    %2244 = vmatprep.subr.bf16.mxu0 0
    %2245 = vmatpush1.bf16.msra.mxu0 0
    %2246 = vmatprep.subr.bf16.mxu0 0
    %2247 = vmatpush1.bf16.msra.mxu0 0
    %2248 = vmatprep.subr.bf16.mxu0 0
    %2249 = vmatpush1.bf16.msra.mxu0 0
    %2250 = vmatprep.subr.bf16.mxu0 0
    %2251 = vmatpush1.bf16.msra.mxu0 0
    %2252 = vmatprep.subr.bf16.mxu0 0
    %2253 = vmatpush1.bf16.msra.mxu0 0
    %2254 = vmatprep.subr.bf16.mxu0 0
    %2255 = vmatpush1.bf16.msra.mxu0 0
    %2256 = vmatprep.subr.bf16.mxu0 0
    %2257 = vmatpush1.bf16.msra.mxu0 0
    %2258 = vmatprep.subr.bf16.mxu0 0
    %2259 = vmatpush1.bf16.msra.mxu0 0
    %2260 = vmatprep.subr.bf16.mxu0 0
    %2261 = vmatpush1.bf16.msra.mxu0 0
    %2262 = vmatprep.subr.bf16.mxu0 0
    %2263 = vmatpush1.bf16.msra.mxu0 0
    %2264 = vmatprep.subr.bf16.mxu0 0
    %2265 = vmatpush1.bf16.msra.mxu0 0
    %2266 = vmatprep.subr.bf16.mxu0 0
    %2267 = vmatpush1.bf16.msra.mxu0 0
    %2268 = vmatprep.subr.bf16.mxu0 0
    %2269 = vmatpush1.bf16.msra.mxu0 0
    %2270 = vmatprep.mubr.bf16.mxu0 0
    %2271 = vmatmul.mubr.bf16.gmra.mrb[0].mxu0 %v2233
    %v2272 = vpop.f32.mrb[0].mxu0
    %v2273 = vadd.f32 0.0, %v2272
    %v2274 = vpop.f32.mrb[0].mxu0
    %v2275 = vpop.f32.mrb[0].mxu0
    %v2276 = vpop.f32.mrb[0].mxu0
    %2277 = vdwg.mxu0
    %v2279 = vsel %vm1378, %v1586, 0
    %v2282 = vsel %vm1590, %v635, 0
    %2284 = vmatprep.subr.bf16.mxu0 0
    %2285 = vmatpush1.bf16.msra.mxu0 %v2282
    %2286 = vmatprep.subr.bf16.mxu0 0
    %2287 = vmatpush1.bf16.msra.mxu0 0
    %2288 = vmatprep.subr.bf16.mxu0 0
    %2289 = vmatpush1.bf16.msra.mxu0 0
    %2290 = vmatprep.subr.bf16.mxu0 0
    %2291 = vmatpush1.bf16.msra.mxu0 0
    %2292 = vmatprep.subr.bf16.mxu0 0
    %2293 = vmatpush1.bf16.msra.mxu0 0
    %2294 = vmatprep.subr.bf16.mxu0 0
    %2295 = vmatpush1.bf16.msra.mxu0 0
    %2296 = vmatprep.subr.bf16.mxu0 0
    %2297 = vmatpush1.bf16.msra.mxu0 0
    %2298 = vmatprep.subr.bf16.mxu0 0
    %2299 = vmatpush1.bf16.msra.mxu0 0
    %2300 = vmatprep.subr.bf16.mxu0 0
    %2301 = vmatpush1.bf16.msra.mxu0 0
    %2302 = vmatprep.subr.bf16.mxu0 0
    %2303 = vmatpush1.bf16.msra.mxu0 0
    %2304 = vmatprep.subr.bf16.mxu0 0
    %2305 = vmatpush1.bf16.msra.mxu0 0
    %2306 = vmatprep.subr.bf16.mxu0 0
    %2307 = vmatpush1.bf16.msra.mxu0 0
    %2308 = vmatprep.subr.bf16.mxu0 0
    %2309 = vmatpush1.bf16.msra.mxu0 0
    %2310 = vmatprep.subr.bf16.mxu0 0
    %2311 = vmatpush1.bf16.msra.mxu0 0
    %2312 = vmatprep.subr.bf16.mxu0 0
    %2313 = vmatpush1.bf16.msra.mxu0 0
    %2314 = vmatprep.subr.bf16.mxu0 0
    %2315 = vmatpush1.bf16.msra.mxu0 0
    %2316 = vmatprep.mubr.bf16.mxu0 0
    %2317 = vmatmul.mubr.bf16.gmra.mrb[0].mxu0 %v2279
    %v2318 = vpop.f32.mrb[0].mxu0
    %v2319 = vadd.f32 0.0, %v2318
    %v2320 = vpop.f32.mrb[0].mxu0
    %v2321 = vpop.f32.mrb[0].mxu0
    %v2322 = vpop.f32.mrb[0].mxu0
    %2323 = vdwg.mxu0
    %2328 = vrot.lane.b32.xlu0 %v1675, 32
    %v2329 = vpop.permute.xlu0 %2328
    %2330 = vrot.lane.b32.xlu0 %v1859, 32
    %v2331 = vpop.permute.xlu0 %2330
    %2332 = vrot.lane.b32.xlu0 %v2043, 32
    %v2333 = vpop.permute.xlu0 %2332
    %2334 = vrot.lane.b32.xlu0 %v2227, 32
    %v2335 = vpop.permute.xlu0 %2334
    %2344 = vrot.lane.b32.xlu0 %v1721, 64
    %v2345 = vpop.permute.xlu0 %2344
    %2346 = vrot.lane.b32.xlu0 %v1905, 64
    %v2347 = vpop.permute.xlu0 %2346
    %2348 = vrot.lane.b32.xlu0 %v2089, 64
    %v2349 = vpop.permute.xlu0 %2348
    %2350 = vrot.lane.b32.xlu0 %v2273, 64
    %v2351 = vpop.permute.xlu0 %2350
    %2360 = vrot.lane.b32.xlu0 %v1767, 96
    %v2361 = vpop.permute.xlu0 %2360
    %2362 = vrot.lane.b32.xlu0 %v1951, 96
    %v2363 = vpop.permute.xlu0 %2362
    %2364 = vrot.lane.b32.xlu0 %v2135, 96
    %v2365 = vpop.permute.xlu0 %2364
    %2366 = vrot.lane.b32.xlu0 %v2319, 96
    %v2367 = vpop.permute.xlu0 %2366
    %v2372 = vsel %vm412, %v1629, %v2329
    %v2373 = vsel %vm412, %v1813, %v2331
    %v2374 = vsel %vm412, %v1997, %v2333
    %v2375 = vsel %vm412, %v2181, %v2335
    %v2376 = vsel %vm327, %v2372, %v2345
    %v2377 = vsel %vm327, %v2373, %v2347
    %v2378 = vsel %vm327, %v2374, %v2349
    %v2379 = vsel %vm327, %v2375, %v2351
    %vm2380 = vcmask 785408
    %v2381 = vsel %vm2380, %v2376, %v2361
    %v2382 = vsel %vm2380, %v2377, %v2363
    %v2383 = vsel %vm2380, %v2378, %v2365
    %v2384 = vsel %vm2380, %v2379, %v2367
    %v2385 = vpack.c.bf16 %v2382, %v2381
    %v2386 = vpack.c.bf16 %v2384, %v2383
    %v2387 = vld [vmem:[#allocation13] sm:$0xf]
    %v2388 = vld [vmem:[#allocation13 + $0x4] sm:$0xf]
    %v2389 = vld [vmem:[#allocation13 + $0x8] sm:$0xf]
    %v2390 = vld [vmem:[#allocation13 + $0xc] sm:$0xf]
    %v2391 = vld [vmem:[#allocation13 + $0x10] sm:$0xf]
    %v2392 = vld [vmem:[#allocation13 + $0x14] sm:$0xf]
    %v2393 = vld [vmem:[#allocation13 + $0x18] sm:$0xf]
    %v2394 = vld [vmem:[#allocation13 + $0x1c] sm:$0xf]
    %v2395 = vld [vmem:[#allocation13 + $0x20] sm:$0xf]
    %v2396 = vld [vmem:[#allocation13 + $0x24] sm:$0xf]
    %v2397 = vld [vmem:[#allocation13 + $0x28] sm:$0xf]
    %v2398 = vld [vmem:[#allocation13 + $0x2c] sm:$0xf]
    %v2399 = vld [vmem:[#allocation13 + $0x30] sm:$0xf]
    %v2400 = vld [vmem:[#allocation13 + $0x34] sm:$0xf]
    %v2401 = vld [vmem:[#allocation13 + $0x38] sm:$0xf]
    %v2402 = vld [vmem:[#allocation13 + $0x3c] sm:$0xf]
    %v2403 = vld [vmem:[#allocation14] sm:$0x1]
    %v2405 = vlaneseq
    %v2406 = vshrl.u32 %v2405, 7
    %v2407 = vsub.s32 0, %v2406
    %v2408 = vrot.slane %v2403, %v2407
    %v2426 = vunpack.c.l.b16 %v2387
    %v2427 = vunpack.c.l.b16 %v2388
    %v2428 = vunpack.c.l.b16 %v2389
    %v2429 = vunpack.c.l.b16 %v2390
    %v2430 = vunpack.c.l.b16 %v2391
    %v2431 = vunpack.c.l.b16 %v2392
    %v2432 = vunpack.c.l.b16 %v2393
    %v2433 = vunpack.c.l.b16 %v2394
    %v2434 = vunpack.c.l.b16 %v2395
    %v2435 = vunpack.c.l.b16 %v2396
    %v2436 = vunpack.c.l.b16 %v2397
    %v2437 = vunpack.c.l.b16 %v2398
    %v2438 = vunpack.c.l.b16 %v2399
    %v2439 = vunpack.c.l.b16 %v2400
    %v2440 = vunpack.c.l.b16 %v2401
    %v2441 = vunpack.c.l.b16 %v2402
    %v2442 = vpack.c.b16 %v2427, %v2426
    %v2443 = vpack.c.b16 %v2429, %v2428
    %v2444 = vpack.c.b16 %v2431, %v2430
    %v2445 = vpack.c.b16 %v2433, %v2432
    %v2446 = vpack.c.b16 %v2435, %v2434
    %v2447 = vpack.c.b16 %v2437, %v2436
    %v2448 = vpack.c.b16 %v2439, %v2438
    %v2449 = vpack.c.b16 %v2441, %v2440
    %2458 = vmatprep.subr.bf16.mxu0 0
    %2459 = vmatpush1.bf16.msra.mxu0 %v2442
    %2460 = vmatprep.subr.bf16.mxu0 0
    %2461 = vmatpush1.bf16.msra.mxu0 %v2443
    %2462 = vmatprep.subr.bf16.mxu0 0
    %2463 = vmatpush1.bf16.msra.mxu0 %v2444
    %2464 = vmatprep.subr.bf16.mxu0 0
    %2465 = vmatpush1.bf16.msra.mxu0 %v2445
    %2466 = vmatprep.subr.bf16.mxu0 0
    %2467 = vmatpush1.bf16.msra.mxu0 %v2446
    %2468 = vmatprep.subr.bf16.mxu0 0
    %2469 = vmatpush1.bf16.msra.mxu0 %v2447
    %2470 = vmatprep.subr.bf16.mxu0 0
    %2471 = vmatpush1.bf16.msra.mxu0 %v2448
    %2472 = vmatprep.subr.bf16.mxu0 0
    %2473 = vmatpush1.bf16.msra.mxu0 %v2449
    %2474 = vmatprep.subr.bf16.mxu0 0
    %2475 = vmatpush1.bf16.msra.mxu0 0
    %2476 = vmatprep.subr.bf16.mxu0 0
    %2477 = vmatpush1.bf16.msra.mxu0 0
    %2478 = vmatprep.subr.bf16.mxu0 0
    %2479 = vmatpush1.bf16.msra.mxu0 0
    %2480 = vmatprep.subr.bf16.mxu0 0
    %2481 = vmatpush1.bf16.msra.mxu0 0
    %2482 = vmatprep.subr.bf16.mxu0 0
    %2483 = vmatpush1.bf16.msra.mxu0 0
    %2484 = vmatprep.subr.bf16.mxu0 0
    %2485 = vmatpush1.bf16.msra.mxu0 0
    %2486 = vmatprep.subr.bf16.mxu0 0
    %2487 = vmatpush1.bf16.msra.mxu0 0
    %2488 = vmatprep.subr.bf16.mxu0 0
    %2489 = vmatpush1.bf16.msra.mxu0 0
    %2490 = vmatprep.mubr.bf16.mxu0 0
    %2491 = vmatmul.mubr.bf16.gmra.mrb[0].mxu0 %v2385
    %v2492 = vpop.f32.mrb[0].mxu0
    %v2493 = vadd.f32 %v2408, %v2492
    %v2494 = vpop.f32.mrb[0].mxu0
    %v2495 = vpop.f32.mrb[0].mxu0
    %v2496 = vadd.f32 %v2408, %v2495
    %v2497 = vpop.f32.mrb[0].mxu0
    %2498 = vmatprep.mubr.bf16.mxu0 0
    %2499 = vmatmul.mubr.bf16.gmra.mrb[0].mxu0 %v2386
    %v2500 = vpop.f32.mrb[0].mxu0
    %v2501 = vadd.f32 %v2408, %v2500
    %v2502 = vpop.f32.mrb[0].mxu0
    %v2503 = vpop.f32.mrb[0].mxu0
    %v2504 = vadd.f32 %v2408, %v2503
    %v2505 = vpop.f32.mrb[0].mxu0
    %2506 = vdwg.mxu0
    %v2507 = vadd.f32 %v257, %v2493
    %v2508 = vadd.f32 %v258, %v2496
    %v2509 = vadd.f32 %v259, %v2501
    %v2510 = vadd.f32 %v260, %v2504
    %v2511 = vld [vmem:[#allocation16] sm:$0x1]
    %v2512 = vld [vmem:[#allocation17] sm:$0x1]
    %v2513 = vsel %vm412, %v2507, 0.0
    %2514 = vadd.xlane.f32.xlu0 %v2513
    %v2515 = vpop.xlane.xlu0 %2514
    %v2516 = vsel %vm412, %v2508, 0.0
    %2517 = vadd.xlane.f32.xlu0 %v2516
    %v2518 = vpop.xlane.xlu0 %2517
    %v2519 = vsel %vm412, %v2509, 0.0
    %2520 = vadd.xlane.f32.xlu0 %v2519
    %v2521 = vpop.xlane.xlu0 %2520
    %v2522 = vsel %vm412, %v2510, 0.0
    %2523 = vadd.xlane.f32.xlu0 %v2522
    %v2524 = vpop.xlane.xlu0 %2523
    %v2525 = vrcp.pop 32.0
    %v2526 = vmul.f32 %v2515, %v2525
    %v2527 = vmul.f32 %v2518, %v2525
    %v2528 = vmul.f32 %v2521, %v2525
    %v2529 = vmul.f32 %v2524, %v2525
    %v2530 = vsub.f32 %v2507, %v2526
    %v2531 = vsub.f32 %v2508, %v2527
    %v2532 = vsub.f32 %v2509, %v2528
    %v2533 = vsub.f32 %v2510, %v2529
    %v2534 = vmul.f32 %v2530, %v2530
    %v2535 = vmul.f32 %v2531, %v2531
    %v2536 = vmul.f32 %v2532, %v2532
    %v2537 = vmul.f32 %v2533, %v2533
    %v2538 = vsel %vm412, %v2534, 0.0
    %2539 = vadd.xlane.f32.xlu0 %v2538
    %v2540 = vpop.xlane.xlu0 %2539
    %v2541 = vsel %vm412, %v2535, 0.0
    %2542 = vadd.xlane.f32.xlu0 %v2541
    %v2543 = vpop.xlane.xlu0 %2542
    %v2544 = vsel %vm412, %v2536, 0.0
    %2545 = vadd.xlane.f32.xlu0 %v2544
    %v2546 = vpop.xlane.xlu0 %2545
    %v2547 = vsel %vm412, %v2537, 0.0
    %2548 = vadd.xlane.f32.xlu0 %v2547
    %v2549 = vpop.xlane.xlu0 %2548
    %v2550 = vmul.f32 %v2540, %v2525
    %v2551 = vmul.f32 %v2543, %v2525
    %v2552 = vmul.f32 %v2546, %v2525
    %v2553 = vmul.f32 %v2549, %v2525
    %v2554 = vadd.f32 %v2550, 1e-05
    %v2555 = vadd.f32 %v2551, 1e-05
    %v2556 = vadd.f32 %v2552, 1e-05
    %v2557 = vadd.f32 %v2553, 1e-05
    %v2558 = vrsqrt.pop %v2554
    %v2559 = vrsqrt.pop %v2555
    %v2560 = vrsqrt.pop %v2556
    %v2561 = vrsqrt.pop %v2557
    %v2562 = vmul.f32 %v2530, %v2558
    %v2563 = vmul.f32 %v2531, %v2559
    %v2564 = vmul.f32 %v2532, %v2560
    %v2565 = vmul.f32 %v2533, %v2561
    %v2567 = vlaneseq
    %v2568 = vshrl.u32 %v2567, 7
    %v2569 = vsub.s32 0, %v2568
    %v2570 = vrot.slane %v2511, %v2569
    %v2572 = vmul.f32 %v2562, %v2570
    %v2573 = vmul.f32 %v2563, %v2570
    %v2574 = vmul.f32 %v2564, %v2570
    %v2575 = vmul.f32 %v2565, %v2570
    %v2577 = vlaneseq
    %v2578 = vshrl.u32 %v2577, 7
    %v2579 = vsub.s32 0, %v2578
    %v2580 = vrot.slane %v2512, %v2579
    %v2582 = vadd.f32 %v2572, %v2580
    %v2583 = vadd.f32 %v2573, %v2580
    %v2584 = vadd.f32 %v2574, %v2580
    %v2585 = vadd.f32 %v2575, %v2580
    %v2586 = vpack.c.bf16 %v2583, %v2582
    %v2587 = vpack.c.bf16 %v2585, %v2584
    %v2588 = vld [vmem:[#allocation19] sm:$0xf]
    %v2589 = vld [vmem:[#allocation19 + $0x4] sm:$0xf]
    %v2590 = vld [vmem:[#allocation19 + $0x8] sm:$0xf]
    %v2591 = vld [vmem:[#allocation19 + $0xc] sm:$0xf]
    %v2592 = vld [vmem:[#allocation20] sm:$0x1]
    %v2594 = vlaneseq
    %v2595 = vshrl.u32 %v2594, 7
    %v2596 = vsub.s32 0, %v2595
    %v2597 = vrot.slane %v2592, %v2596
    %v2603 = vunpack.c.l.b16 %v2588
    %v2604 = vunpack.c.l.b16 %v2589
    %v2605 = vunpack.c.l.b16 %v2590
    %v2606 = vunpack.c.l.b16 %v2591
    %v2607 = vpack.c.b16 %v2604, %v2603
    %v2608 = vpack.c.b16 %v2606, %v2605
    %v2612 = vsel %vm412, %v2586, 0
    %v2615 = vsel %vm412, %v2587, 0
    %2617 = vmatprep.subr.bf16.mxu0 0
    %2618 = vmatpush1.bf16.msra.mxu0 %v2607
    %2619 = vmatprep.subr.bf16.mxu0 0
    %2620 = vmatpush1.bf16.msra.mxu0 %v2608
    %2621 = vmatprep.subr.bf16.mxu0 0
    %2622 = vmatpush1.bf16.msra.mxu0 0
    %2623 = vmatprep.subr.bf16.mxu0 0
    %2624 = vmatpush1.bf16.msra.mxu0 0
    %2625 = vmatprep.subr.bf16.mxu0 0
    %2626 = vmatpush1.bf16.msra.mxu0 0
    %2627 = vmatprep.subr.bf16.mxu0 0
    %2628 = vmatpush1.bf16.msra.mxu0 0
    %2629 = vmatprep.subr.bf16.mxu0 0
    %2630 = vmatpush1.bf16.msra.mxu0 0
    %2631 = vmatprep.subr.bf16.mxu0 0
    %2632 = vmatpush1.bf16.msra.mxu0 0
    %2633 = vmatprep.subr.bf16.mxu0 0
    %2634 = vmatpush1.bf16.msra.mxu0 0
    %2635 = vmatprep.subr.bf16.mxu0 0
    %2636 = vmatpush1.bf16.msra.mxu0 0
    %2637 = vmatprep.subr.bf16.mxu0 0
    %2638 = vmatpush1.bf16.msra.mxu0 0
    %2639 = vmatprep.subr.bf16.mxu0 0
    %2640 = vmatpush1.bf16.msra.mxu0 0
    %2641 = vmatprep.subr.bf16.mxu0 0
    %2642 = vmatpush1.bf16.msra.mxu0 0
    %2643 = vmatprep.subr.bf16.mxu0 0
    %2644 = vmatpush1.bf16.msra.mxu0 0
    %2645 = vmatprep.subr.bf16.mxu0 0
    %2646 = vmatpush1.bf16.msra.mxu0 0
    %2647 = vmatprep.subr.bf16.mxu0 0
    %2648 = vmatpush1.bf16.msra.mxu0 0
    %2649 = vmatprep.mubr.bf16.mxu0 0
    %2650 = vmatmul.mubr.bf16.gmra.mrb[0].mxu0 %v2612
    %v2651 = vpop.f32.mrb[0].mxu0
    %v2652 = vadd.f32 %v2597, %v2651
    %v2653 = vpop.f32.mrb[0].mxu0
    %v2654 = vpop.f32.mrb[0].mxu0
    %v2655 = vadd.f32 %v2597, %v2654
    %v2656 = vpop.f32.mrb[0].mxu0
    %2657 = vmatprep.mubr.bf16.mxu0 0
    %2658 = vmatmul.mubr.bf16.gmra.mrb[0].mxu0 %v2615
    %v2659 = vpop.f32.mrb[0].mxu0
    %v2660 = vadd.f32 %v2597, %v2659
    %v2661 = vpop.f32.mrb[0].mxu0
    %v2662 = vpop.f32.mrb[0].mxu0
    %v2663 = vadd.f32 %v2597, %v2662
    %v2664 = vpop.f32.mrb[0].mxu0
    %2665 = vdwg.mxu0
    %v2666 = vmax.f32 %v2652, 0.0
    %v2667 = vmax.f32 %v2655, 0.0
    %v2668 = vmax.f32 %v2660, 0.0
    %v2669 = vmax.f32 %v2663, 0.0
    %v2670 = vpack.c.bf16 %v2667, %v2666
    %v2671 = vpack.c.bf16 %v2669, %v2668
    %v2672 = vld [vmem:[#allocation22] sm:$0xf]
    %v2673 = vld [vmem:[#allocation22 + $0x4] sm:$0xf]
    %v2674 = vld [vmem:[#allocation22 + $0x8] sm:$0xf]
    %v2675 = vld [vmem:[#allocation22 + $0xc] sm:$0xf]
    %v2676 = vld [vmem:[#allocation22 + $0x10] sm:$0xf]
    %v2677 = vld [vmem:[#allocation22 + $0x14] sm:$0xf]
    %v2678 = vld [vmem:[#allocation22 + $0x18] sm:$0xf]
    %v2679 = vld [vmem:[#allocation22 + $0x1c] sm:$0xf]
    %v2680 = vld [vmem:[#allocation23] sm:$0x1]
    %v2682 = vlaneseq
    %v2683 = vshrl.u32 %v2682, 7
    %v2684 = vsub.s32 0, %v2683
    %v2685 = vrot.slane %v2680, %v2684
    %v2695 = vunpack.c.l.b16 %v2672
    %v2696 = vunpack.c.l.b16 %v2673
    %v2697 = vunpack.c.l.b16 %v2674
    %v2698 = vunpack.c.l.b16 %v2675
    %v2699 = vunpack.c.l.b16 %v2676
    %v2700 = vunpack.c.l.b16 %v2677
    %v2701 = vunpack.c.l.b16 %v2678
    %v2702 = vunpack.c.l.b16 %v2679
    %v2703 = vpack.c.b16 %v2696, %v2695
    %v2704 = vpack.c.b16 %v2698, %v2697
    %v2705 = vpack.c.b16 %v2700, %v2699
    %v2706 = vpack.c.b16 %v2702, %v2701
    %v2712 = vsel %vm327, %v2670, 0
    %v2715 = vsel %vm327, %v2671, 0
    %2717 = vmatprep.subr.bf16.mxu0 0
    %2718 = vmatpush1.bf16.msra.mxu0 %v2703
    %2719 = vmatprep.subr.bf16.mxu0 0
    %2720 = vmatpush1.bf16.msra.mxu0 %v2704
    %2721 = vmatprep.subr.bf16.mxu0 0
    %2722 = vmatpush1.bf16.msra.mxu0 %v2705
    %2723 = vmatprep.subr.bf16.mxu0 0
    %2724 = vmatpush1.bf16.msra.mxu0 %v2706
    %2725 = vmatprep.subr.bf16.mxu0 0
    %2726 = vmatpush1.bf16.msra.mxu0 0
    %2727 = vmatprep.subr.bf16.mxu0 0
    %2728 = vmatpush1.bf16.msra.mxu0 0
    %2729 = vmatprep.subr.bf16.mxu0 0
    %2730 = vmatpush1.bf16.msra.mxu0 0
    %2731 = vmatprep.subr.bf16.mxu0 0
    %2732 = vmatpush1.bf16.msra.mxu0 0
    %2733 = vmatprep.subr.bf16.mxu0 0
    %2734 = vmatpush1.bf16.msra.mxu0 0
    %2735 = vmatprep.subr.bf16.mxu0 0
    %2736 = vmatpush1.bf16.msra.mxu0 0
    %2737 = vmatprep.subr.bf16.mxu0 0
    %2738 = vmatpush1.bf16.msra.mxu0 0
    %2739 = vmatprep.subr.bf16.mxu0 0
    %2740 = vmatpush1.bf16.msra.mxu0 0
    %2741 = vmatprep.subr.bf16.mxu0 0
    %2742 = vmatpush1.bf16.msra.mxu0 0
    %2743 = vmatprep.subr.bf16.mxu0 0
    %2744 = vmatpush1.bf16.msra.mxu0 0
    %2745 = vmatprep.subr.bf16.mxu0 0
    %2746 = vmatpush1.bf16.msra.mxu0 0
    %2747 = vmatprep.subr.bf16.mxu0 0
    %2748 = vmatpush1.bf16.msra.mxu0 0
    %2749 = vmatprep.mubr.bf16.mxu0 0
    %2750 = vmatmul.mubr.bf16.gmra.mrb[0].mxu0 %v2712
    %v2751 = vpop.f32.mrb[0].mxu0
    %v2752 = vadd.f32 %v2685, %v2751
    %v2753 = vpop.f32.mrb[0].mxu0
    %v2754 = vpop.f32.mrb[0].mxu0
    %v2755 = vadd.f32 %v2685, %v2754
    %v2756 = vpop.f32.mrb[0].mxu0
    %2757 = vmatprep.mubr.bf16.mxu0 0
    %2758 = vmatmul.mubr.bf16.gmra.mrb[0].mxu0 %v2715
    %v2759 = vpop.f32.mrb[0].mxu0
    %v2760 = vadd.f32 %v2685, %v2759
    %v2761 = vpop.f32.mrb[0].mxu0
    %v2762 = vpop.f32.mrb[0].mxu0
    %v2763 = vadd.f32 %v2685, %v2762
    %v2764 = vpop.f32.mrb[0].mxu0
    %2765 = vdwg.mxu0
    %v2766 = vadd.f32 %v2582, %v2752
    %v2767 = vadd.f32 %v2583, %v2755
    %v2768 = vadd.f32 %v2584, %v2760
    %v2769 = vadd.f32 %v2585, %v2763
    %v2770 = vld [vmem:[#allocation25] sm:$0x1]
    %v2771 = vld [vmem:[#allocation26] sm:$0x1]
    %v2772 = vsel %vm412, %v2766, 0.0
    %2773 = vadd.xlane.f32.xlu0 %v2772
    %v2774 = vpop.xlane.xlu0 %2773
    %v2775 = vsel %vm412, %v2767, 0.0
    %2776 = vadd.xlane.f32.xlu0 %v2775
    %v2777 = vpop.xlane.xlu0 %2776
    %v2778 = vsel %vm412, %v2768, 0.0
    %2779 = vadd.xlane.f32.xlu0 %v2778
    %v2780 = vpop.xlane.xlu0 %2779
    %v2781 = vsel %vm412, %v2769, 0.0
    %2782 = vadd.xlane.f32.xlu0 %v2781
    %v2783 = vpop.xlane.xlu0 %2782
    %v2784 = vmul.f32 %v2774, %v2525
    %v2785 = vmul.f32 %v2777, %v2525
    %v2786 = vmul.f32 %v2780, %v2525
    %v2787 = vmul.f32 %v2783, %v2525
    %v2788 = vsub.f32 %v2766, %v2784
    %v2789 = vsub.f32 %v2767, %v2785
    %v2790 = vsub.f32 %v2768, %v2786
    %v2791 = vsub.f32 %v2769, %v2787
    %v2792 = vmul.f32 %v2788, %v2788
    %v2793 = vmul.f32 %v2789, %v2789
    %v2794 = vmul.f32 %v2790, %v2790
    %v2795 = vmul.f32 %v2791, %v2791
    %v2796 = vsel %vm412, %v2792, 0.0
    %2797 = vadd.xlane.f32.xlu0 %v2796
    %v2798 = vpop.xlane.xlu0 %2797
    %v2799 = vsel %vm412, %v2793, 0.0
    %2800 = vadd.xlane.f32.xlu0 %v2799
    %v2801 = vpop.xlane.xlu0 %2800
    %v2802 = vsel %vm412, %v2794, 0.0
    %2803 = vadd.xlane.f32.xlu0 %v2802
    %v2804 = vpop.xlane.xlu0 %2803
    %v2805 = vsel %vm412, %v2795, 0.0
    %2806 = vadd.xlane.f32.xlu0 %v2805
    %v2807 = vpop.xlane.xlu0 %2806
    %v2808 = vmul.f32 %v2798, %v2525
    %v2809 = vmul.f32 %v2801, %v2525
    %v2810 = vmul.f32 %v2804, %v2525
    %v2811 = vmul.f32 %v2807, %v2525
    %v2812 = vadd.f32 %v2808, 1e-05
    %v2813 = vadd.f32 %v2809, 1e-05
    %v2814 = vadd.f32 %v2810, 1e-05
    %v2815 = vadd.f32 %v2811, 1e-05
    %v2816 = vrsqrt.pop %v2812
    %v2817 = vrsqrt.pop %v2813
    %v2818 = vrsqrt.pop %v2814
    %v2819 = vrsqrt.pop %v2815
    %v2820 = vmul.f32 %v2788, %v2816
    %v2821 = vmul.f32 %v2789, %v2817
    %v2822 = vmul.f32 %v2790, %v2818
    %v2823 = vmul.f32 %v2791, %v2819
    %v2825 = vlaneseq
    %v2826 = vshrl.u32 %v2825, 7
    %v2827 = vsub.s32 0, %v2826
    %v2828 = vrot.slane %v2770, %v2827
    %v2830 = vmul.f32 %v2820, %v2828
    %v2831 = vmul.f32 %v2821, %v2828
    %v2832 = vmul.f32 %v2822, %v2828
    %v2833 = vmul.f32 %v2823, %v2828
    %v2835 = vlaneseq
    %v2836 = vshrl.u32 %v2835, 7
    %v2837 = vsub.s32 0, %v2836
    %v2838 = vrot.slane %v2771, %v2837
    %v2840 = vadd.f32 %v2830, %v2838
    %v2841 = vadd.f32 %v2831, %v2838
    %v2842 = vadd.f32 %v2832, %v2838
    %v2843 = vadd.f32 %v2833, %v2838
    %2844 = vst.msk [vmem:[#allocation28] sm:$0xff] %vm412, %v2840
    %2845 = vst.msk [vmem:[#allocation28 + $0x8] sm:$0xff] %vm412, %v2841
    %2846 = vst.msk [vmem:[#allocation28 + $0x10] sm:$0xff] %vm412, %v2842
    %2847 = vst.msk [vmem:[#allocation28 + $0x18] sm:$0xff] %vm412, %v2843
    // Predicated region
    $region130: #{tpu_custom_call.1} parent=1 // pred_check
      _
    $region131: #{tpu_custom_call.1} parent=1 // pred_check_branch
      %2849 = sbr.rel (0) target = $region133
    $region132: #{tpu_custom_call.1} parent=1 // pred_region
      %s2851 = ssub.s32 512, 512
      %2852 = vsyncadd [#allocation4], %s2851
      %s2853 = sshll.u32 [#allocation28], 4
      %s2854 = int_to_ptr.vmem [resolvable:$true] %s2853
      %2859 = dma.vmem_to_hbm [thread:$0]  %s2854, 512, %s16, [#allocation4], 128, 128, 8
    $region133: #{tpu_custom_call.1} parent=1 // pred_fallthru
      _
    // Predicated region
    $region134: #{tpu_custom_call.1} parent=1 // pred_check
      _
    $region135: #{tpu_custom_call.1} parent=1 // pred_check_branch
      %2861 = sbr.rel (0) target = $region137
    $region136: #{tpu_custom_call.1} parent=1 // pred_region
      %s2863 = ssub.s32 2048, 2048
      %2864 = vsyncadd [#allocation30], %s2863
      %s2865 = sshll.u32 [#allocation29], 4
      %s2866 = int_to_ptr.vmem [resolvable:$true] %s2865
      %2871 = dma.vmem_to_hbm [thread:$0]  %s2866, 2048, %s17, [#allocation30], 128, 128, 8
    $region137: #{tpu_custom_call.1} parent=1 // pred_fallthru
      _
    // Predicated region
    $region138: #{tpu_custom_call.1} parent=1 // pred_check
      _
    $region139: #{tpu_custom_call.1} parent=1 // pred_check_branch
      %2873 = sbr.rel (0) target = $region141
    $region140: #{tpu_custom_call.1} parent=1 // pred_region
      %2874 = dma.done [#allocation4], 512
    $region141: #{tpu_custom_call.1} parent=1 // pred_fallthru
      _
    // Predicated region
    $region142: #{tpu_custom_call.1} parent=1 // pred_check
      _
    $region143: #{tpu_custom_call.1} parent=1 // pred_check_branch
      %2876 = sbr.rel (0) target = $region145
    $region144: #{tpu_custom_call.1} parent=1 // pred_region
      %2877 = dma.done [#allocation30], 2048
    $region145: #{tpu_custom_call.1} parent=1 // pred_fallthru
      _
    %2878 = vsyncpa [#allocation3], 1
    %2879 = vsyncpa [#allocation6], 1
    %2880 = vsyncpa [#allocation9], 1
    %2881 = vsyncpa [#allocation12], 1
    %2882 = vsyncpa [#allocation15], 1
    %2883 = vsyncpa [#allocation18], 1
    %2884 = vsyncpa [#allocation21], 1
    %2885 = vsyncpa [#allocation24], 1
    %2886 = vsyncpa [#allocation27], 1
    %2887 = vsyncpa [#allocation4], 1
    %2888 = vsyncpa [#allocation30], 1

</llo_original>
